<compile_context>
chip_gen: v7x
topology: tpu7x:2x2x1
jax: 0.10.0
libtpu: 0.0.40
codegen_flags: <defaults>
</compile_context>

<pallas_src>
import functools

import jax
import jax.numpy as jnp
from jax.experimental import pallas as pl
from jax.experimental.pallas import tpu as pltpu

LN_EPS = 1e-5  # torch.nn.LayerNorm / CLIP layer_norm_eps default


# --------------------------------------------------------------------------
# In-kernel helpers
# --------------------------------------------------------------------------
def _ln(x, g, b):
    mu = jnp.mean(x, axis=-1, keepdims=True)
    xc = x - mu
    var = jnp.mean(xc * xc, axis=-1, keepdims=True)
    return xc * jax.lax.rsqrt(var + LN_EPS) * g + b


def _erf(x):
    # Abramowitz & Stegun 7.1.26 (|err| < 1.5e-7).  Built from exp only so it
    # lowers on Mosaic without relying on a native erf.
    p = 0.3275911
    a1, a2, a3, a4, a5 = (0.254829592, -0.284496736, 1.421413741,
                          -1.453152027, 1.061405429)
    s = jnp.where(x >= 0.0, 1.0, -1.0)
    ax = jnp.abs(x)
    t = 1.0 / (1.0 + p * ax)
    poly = ((((a5 * t + a4) * t + a3) * t + a2) * t + a1) * t
    return s * (1.0 - poly * jnp.exp(-ax * ax))


def _gelu_exact(x):   # torch.nn.GELU() default (erf form)
    return 0.5 * x * (1.0 + _erf(x * 0.7071067811865476))


# --------------------------------------------------------------------------
# Fused encoder kernel: grid = (batch_blocks, num_layers)
# --------------------------------------------------------------------------
def _fused_encoder_kernel(hs_in_ref, bias_ref,
                          lnp_ref, wqkv_ref, bqkv_ref, wo_ref, bo_ref,
                          w1_ref, b1_ref, w2_ref, b2_ref,
                          plnp_ref, pw1a_ref, pw1b_ref, pb1_ref, pw2_ref, pb2_ref,
                          hs_ref,
                          *, num_heads, prompt_len, seq_len, prompt_depth):
    l = pl.program_id(1)

    # Layer 0: bring the residual stream into the revisited output block; it
    # then lives in VMEM across the entire layer axis.
    @pl.when(l == 0)
    def _():
        hs_ref[...] = hs_in_ref[...]

    Bb, Lp, D = hs_ref.shape
    H = num_heads
    Dh = D // H
    P = prompt_len
    S = seq_len
    scale = Dh ** -0.5

    lnp = lnp_ref[0]                    # (4, D): ln1_g, ln1_b, ln2_g, ln2_b
    ln1g, ln1b, ln2g, ln2b = lnp[0:1], lnp[1:2], lnp[2:3], lnp[3:4]
    wqkv = wqkv_ref[0]                  # (D, 3D) bf16
    bqkv = bqkv_ref[0]                  # (1, 3D) f32
    wo, bo = wo_ref[0], bo_ref[0]
    w1, b1 = w1_ref[0], b1_ref[0]
    w2, b2 = w2_ref[0], b2_ref[0]

    # Phase-dependent additive attention bias:
    #   slot 0 -> prompted layers (prompt rows are valid keys)
    #   slot 1 -> un-prompted layers (prompt rows masked out)
    is_p = (l < prompt_depth).astype(jnp.float32)
    bias_all = bias_ref[...]                                        # (Bb, 2, Lp)
    bias_sel = bias_all[:, 0:1, :] * is_p + bias_all[:, 1:2, :] * (1.0 - is_p)

    # ---------------- self-attention block (pre-LN) ----------------
    x = hs_ref[...]                                                 # (Bb, Lp, D) f32
    xf = x.reshape(Bb * Lp, D)
    h16 = _ln(xf, ln1g, ln1b).astype(jnp.bfloat16)
    qkv = jnp.dot(h16, wqkv, preferred_element_type=jnp.float32) + bqkv   # (Bb*Lp, 3D)
    q16 = (qkv[:, 0 * D:1 * D] * scale).astype(jnp.bfloat16)
    k16 = qkv[:, 1 * D:2 * D].astype(jnp.bfloat16)
    v16 = qkv[:, 2 * D:3 * D].astype(jnp.bfloat16)

    ctx_rows = []
    for b in range(Bb):                       # small static unroll
        rows = slice(b * Lp, (b + 1) * Lp)
        qb, kb, vb = q16[rows], k16[rows], v16[rows]
        bias_b = jnp.broadcast_to(bias_sel[b], (Lp, Lp))   # hoisted out of head loop
        ctx_heads = []
        for hh in range(H):
            cols = slice(hh * Dh, (hh + 1) * Dh)
            s = jax.lax.dot_general(qb[:, cols], kb[:, cols],
                                    (((1,), (1,)), ((), ())),
                                    preferred_element_type=jnp.float32)   # (Lp, Lp)
            s = s + bias_b
            m = jnp.max(s, axis=-1, keepdims=True)
            p = jnp.exp(s - m)
            p = p * pl.reciprocal(jnp.sum(p, axis=-1, keepdims=True), approx=True)
            ctx_heads.append(jnp.dot(p.astype(jnp.bfloat16), vb[:, cols],
                                     preferred_element_type=jnp.float32))
        ctx_rows.append(jnp.concatenate(ctx_heads, axis=-1))       # (Lp, D)
    ctx = jnp.concatenate(ctx_rows, axis=0).astype(jnp.bfloat16)   # (Bb*Lp, D)

    attn = jnp.dot(ctx, wo, preferred_element_type=jnp.float32) + bo
    xf = xf + attn

    # ---------------- MLP block (pre-LN, quick_gelu) ----------------
    h2 = _ln(xf, ln2g, ln2b).astype(jnp.bfloat16)
    ff = jnp.dot(h2, w1, preferred_element_type=jnp.float32) + b1
    ff16 = ff.astype(jnp.bfloat16)
    act = ff16 * jax.nn.sigmoid(1.702 * ff16)        # quick_gelu (bf16; feeds bf16 matmul)
    mlp = jnp.dot(act, w2, preferred_element_type=jnp.float32) + b2
    xf = xf + mlp

    x_out = xf.reshape(Bb, Lp, D)
    hs_ref[...] = x_out.astype(hs_ref.dtype)

    # -------- InterLayerPromptBlock epilogue (only for layers < prompt_depth) --------
    @pl.when(l < prompt_depth)
    def _():
        plnp = plnp_ref[0]                           # (4, D): g_a, g_b, b_a, b_b
        g_a, g_b, b_a, b_b = plnp[0:1], plnp[1:2], plnp[2:3], plnp[3:4]
        pw1a, pw1b, pb1 = pw1a_ref[0], pw1b_ref[0], pb1_ref[0]
        pw2, pb2 = pw2_ref[0], pb2_ref[0]
        two_d = 2.0 * D
        for b in range(Bb):
            xb = x_out[b]
            prev_p = xb[0:P]                          # (P, D) new prompt rows (layer out)
            feats = xb[P:P + S]                       # (S, D) hidden rows (no pad rows)
            fmean = jnp.sum(feats, axis=0, keepdims=True) * (1.0 / S)   # (1, D)
            # LayerNorm over concat([prompt, feat_token], -1), in split form.
            mu = (jnp.sum(prev_p, axis=-1, keepdims=True)
                  + jnp.sum(fmean, axis=-1, keepdims=True)) / two_d     # (P, 1)
            pa = prev_p - mu
            pb = fmean - mu                           # (P, D) via broadcast
            var = (jnp.sum(pa * pa, axis=-1, keepdims=True)
                   + jnp.sum(pb * pb, axis=-1, keepdims=True)) / two_d
            inv = jax.lax.rsqrt(var + LN_EPS)
            na = pa * inv * g_a + b_a
            nb = pb * inv * g_b + b_b
            h1 = (jnp.dot(na.astype(jnp.bfloat16), pw1a, preferred_element_type=jnp.float32)
                  + jnp.dot(nb.astype(jnp.bfloat16), pw1b, preferred_element_type=jnp.float32)
                  + pb1)
            h1 = _gelu_exact(h1)
            newp = jnp.dot(h1.astype(jnp.bfloat16), pw2,
                           preferred_element_type=jnp.float32) + pb2
            hs_ref[b, 0:P, :] = newp.astype(hs_ref.dtype)   # write prompt back in place


def _pick_batch_block(B, cap=8):
    for d in range(min(B, cap), 0, -1):
        if B % d == 0:
            return d
    return 1


def _fused_encoder(params, hs0, bias, *, num_heads, num_layers, prompt_depth,
                   prompt_len, seq_len):
    B, Lp, D = hs0.shape
    Bb = _pick_batch_block(B)
    nb = B // Bb
    lw = params['layer_stack']
    pw = params['prompt_stack']
    PD = pw['plnp'].shape[0]

    def lspec(arr):        # per-layer weight block, indexed by the layer grid axis
        return pl.BlockSpec((1,) + arr.shape[1:], lambda bb, l: (l, 0, 0))

    def pspec(arr):        # prompt-block weights; constant index past prompt_depth
        return pl.BlockSpec((1,) + arr.shape[1:],
                            lambda bb, l: (jnp.minimum(l, PD - 1), 0, 0))

    kernel = functools.partial(_fused_encoder_kernel, num_heads=num_heads,
                               prompt_len=prompt_len, seq_len=seq_len,
                               prompt_depth=prompt_depth)

    return pl.pallas_call(
        kernel,
        out_shape=jax.ShapeDtypeStruct((B, Lp, D), jnp.float32),
        grid=(nb, num_layers),
        in_specs=[
            pl.BlockSpec((Bb, Lp, D), lambda bb, l: (bb, 0, 0)),   # residual stream (read @ l==0)
            pl.BlockSpec((Bb, 2, Lp), lambda bb, l: (bb, 0, 0)),   # additive bias (both phases)
            lspec(lw['lnp']), lspec(lw['wqkv']), lspec(lw['bqkv']),
            lspec(lw['wo']), lspec(lw['bo']),
            lspec(lw['w1']), lspec(lw['b1']),
            lspec(lw['w2']), lspec(lw['b2']),
            pspec(pw['plnp']), pspec(pw['pw1a']), pspec(pw['pw1b']),
            pspec(pw['pb1']), pspec(pw['pw2']), pspec(pw['pb2']),
        ],
        out_specs=pl.BlockSpec((Bb, Lp, D), lambda bb, l: (bb, 0, 0)),
        compiler_params=pltpu.CompilerParams(
            dimension_semantics=("parallel", "arbitrary"),
            # 2-deep layer-weight pipeline must fit v7x's 64 MiB VMEM too.
            vmem_limit_bytes=48 * 1024 * 1024),
    )(hs0, bias,
      lw['lnp'], lw['wqkv'], lw['bqkv'], lw['wo'], lw['bo'],
      lw['w1'], lw['b1'], lw['w2'], lw['b2'],
      pw['plnp'], pw['pw1a'], pw['pw1b'], pw['pb1'], pw['pw2'], pw['pb2'])


# --------------------------------------------------------------------------
# Forward pass (glue in plain JAX, all transformer compute in the fused kernel)
# --------------------------------------------------------------------------
def clip_text_prompt_encoder_forward(params, input_ids, attention_mask, *,
                                     num_heads, num_layers, prompt_depth):
    B, S = input_ids.shape
    D = params['token_emb'].shape[1]
    P = params['init_prompt'].shape[1]
    Lp = ((P + S + 15) // 16) * 16          # pad once to the bf16 sublane tile (16)

    # CLIPTextEmbeddings: token gather + learned position embedding (plain JAX).
    hidden = (jnp.take(params['token_emb'], input_ids, axis=0)
              + params['pos_emb'][None, :S]).astype(jnp.float32)          # (B, S, D)
    hs0 = jnp.zeros((B, Lp, D), jnp.float32)
    hs0 = hs0.at[:, :P].set(
        jnp.broadcast_to(params['init_prompt'], (B, P, D)).astype(jnp.float32))
    hs0 = hs0.at[:, P:P + S].set(hidden)

    mask = attention_mask.astype(jnp.float32)
    pad = jnp.zeros((B, Lp - P - S), jnp.float32)
    mask_p = jnp.concatenate([jnp.ones((B, P), jnp.float32), mask, pad], axis=1)
    mask_u = jnp.concatenate([jnp.zeros((B, P), jnp.float32), mask, pad], axis=1)
    bias = jnp.stack([(1.0 - mask_p) * -10000.0,
                      (1.0 - mask_u) * -10000.0], axis=1)                 # (B, 2, Lp)

    hs = _fused_encoder(params, hs0, bias, num_heads=num_heads,
                        num_layers=num_layers, prompt_depth=prompt_depth,
                        prompt_len=P, seq_len=S)                          # (B, Lp, D)

    # final_layer_norm is per-position, so LN(h)[:, 0] == LN(h[:, 0]); the pooled
    # token is a few KB -> plain JAX (no extra pallas_call / HBM round trip).
    pooled = hs[:, P]                                                     # (B, D)
    mu = jnp.mean(pooled, axis=-1, keepdims=True)
    xc = pooled - mu
    var = jnp.mean(xc * xc, axis=-1, keepdims=True)
    return xc * jax.lax.rsqrt(var + LN_EPS) * params['ln_f_g'] + params['ln_f_b']


# --------------------------------------------------------------------------
# Deterministic synthetic parameters (shapes follow the module's __init__)
# --------------------------------------------------------------------------
def init_params(key, *, vocab, max_pos, D, FF, num_layers, prompt_depth, P):
    keys = iter(jax.random.split(key, 256))

    def nrm(shape, scale=0.02):
        return (scale * jax.random.normal(next(keys), shape)).astype(jnp.float32)

    def ones(shape):
        return jnp.ones(shape, jnp.float32)

    def zeros(shape):
        return jnp.zeros(shape, jnp.float32)

    params = dict(
        token_emb=nrm((vocab, D)),
        pos_emb=nrm((max_pos, D)),
        init_prompt=nrm((1, P, D), 0.1),     # nn.Parameter(torch.randn(1, P, D))
        ln_f_g=ones((D,)), ln_f_b=zeros((D,)),
        layers=[], prompt_blocks=[],
    )
    for _ in range(num_layers):
        params['layers'].append(dict(
            ln1_g=ones((D,)), ln1_b=zeros((D,)),
            wq=nrm((D, D)), bq=zeros((D,)),
            wk=nrm((D, D)), bk=zeros((D,)),
            wv=nrm((D, D)), bv=zeros((D,)),
            wo=nrm((D, D)), bo=zeros((D,)),
            ln2_g=ones((D,)), ln2_b=zeros((D,)),
            w1=nrm((D, FF)), b1=zeros((FF,)),
            w2=nrm((FF, D)), b2=zeros((D,)),
        ))
    for _ in range(prompt_depth):
        params['prompt_blocks'].append(dict(
            ln_g=ones((2 * D,)), ln_b=zeros((2 * D,)),
            w1=nrm((2 * D, D)), b1=zeros((D,)),
            w2=nrm((D, D)), b2=zeros((D,)),
        ))
    return params


def prepare_params(params):
    """One-time host-side re-layout: stacked per-layer weights (leading layer dim),
    bf16 matmul operands, fused (D, 3D) QKV matrix, 2-D biases."""
    D = params['token_emb'].shape[1]
    layers = params['layers']

    def stack(fn):
        return jnp.stack([fn(lp) for lp in layers])

    layer_stack = dict(
        lnp=stack(lambda lp: jnp.stack([lp['ln1_g'], lp['ln1_b'],
                                        lp['ln2_g'], lp['ln2_b']])),           # (NL, 4, D)
        wqkv=stack(lambda lp: jnp.concatenate([lp['wq'], lp['wk'], lp['wv']],
                                              axis=1)).astype(jnp.bfloat16),   # (NL, D, 3D)
        bqkv=stack(lambda lp: jnp.concatenate([lp['bq'], lp['bk'], lp['bv']]).reshape(1, -1)),
        wo=stack(lambda lp: lp['wo']).astype(jnp.bfloat16),
        bo=stack(lambda lp: lp['bo'].reshape(1, -1)),
        w1=stack(lambda lp: lp['w1']).astype(jnp.bfloat16),
        b1=stack(lambda lp: lp['b1'].reshape(1, -1)),
        w2=stack(lambda lp: lp['w2']).astype(jnp.bfloat16),
        b2=stack(lambda lp: lp['b2'].reshape(1, -1)),
    )

    pblocks = params['prompt_blocks']
    if len(pblocks) == 0:      # dummy (never applied) keeps the kernel arg list uniform
        pblocks = [dict(ln_g=jnp.ones((2 * D,)), ln_b=jnp.zeros((2 * D,)),
                        w1=jnp.zeros((2 * D, D)), b1=jnp.zeros((D,)),
                        w2=jnp.zeros((D, D)), b2=jnp.zeros((D,)))]

    def pstack(fn):
        return jnp.stack([fn(pp) for pp in pblocks])

    prompt_stack = dict(
        plnp=pstack(lambda pp: jnp.stack([pp['ln_g'][:D], pp['ln_g'][D:],
                                          pp['ln_b'][:D], pp['ln_b'][D:]])),   # (PD, 4, D)
        pw1a=pstack(lambda pp: pp['w1'][:D]).astype(jnp.bfloat16),
        pw1b=pstack(lambda pp: pp['w1'][D:]).astype(jnp.bfloat16),
        pb1=pstack(lambda pp: pp['b1'].reshape(1, -1)),
        pw2=pstack(lambda pp: pp['w2']).astype(jnp.bfloat16),
        pb2=pstack(lambda pp: pp['b2'].reshape(1, -1)),
    )

    return dict(
        token_emb=params['token_emb'],
        pos_emb=params['pos_emb'],
        init_prompt=params['init_prompt'],
        ln_f_g=params['ln_f_g'], ln_f_b=params['ln_f_b'],
        layer_stack=layer_stack,
        prompt_stack=prompt_stack,
    )


# --------------------------------------------------------------------------
if __name__ == "__main__":
    # Small, CLIP-shaped config: B=2, seq=8, hidden=32, heads=4,
    # 4 transformer layers, prompt_len=5, prompt_depth=2.
    B, S = 2, 8
    D, H, FF = 32, 4, 128
    NUM_LAYERS, PROMPT_DEPTH, P = 4, 2, 5
    VOCAB, MAX_POS = 64, 16

    key = jax.random.PRNGKey(0)
    kp, kids = jax.random.split(key)
    raw_params = init_params(kp, vocab=VOCAB, max_pos=MAX_POS, D=D, FF=FF,
                             num_layers=NUM_LAYERS, prompt_depth=PROMPT_DEPTH, P=P)
    params = prepare_params(raw_params)

    input_ids = jax.random.randint(kids, (B, S), 0, VOCAB, dtype=jnp.int32)
    attention_mask = jnp.ones((B, S), jnp.float32).at[1, 6:].set(0.0)   # some padding

    fwd = jax.jit(functools.partial(
        clip_text_prompt_encoder_forward,
        num_heads=H, num_layers=NUM_LAYERS, prompt_depth=PROMPT_DEPTH))
    out = jax.block_until_ready(fwd(params, input_ids, attention_mask))

    assert out.shape == (B, D), out.shape
    assert bool(jnp.all(jnp.isfinite(out)))
    print("KERNEL_OK")
</pallas_src>

<mosaic_0001>
module attributes {stable_mosaic.version = 11 : i64} {
  func.func @_fused_encoder_kernel(%arg0: i32, %arg1: i32, %arg2: memref<2x16x32xf32, #tpu.memory_space<vmem>>, %arg3: memref<2x2x16xf32, #tpu.memory_space<vmem>>, %arg4: memref<1x4x32xf32, #tpu.memory_space<vmem>>, %arg5: memref<1x32x96xbf16, #tpu.memory_space<vmem>>, %arg6: memref<1x1x96xf32, #tpu.memory_space<vmem>>, %arg7: memref<1x32x32xbf16, #tpu.memory_space<vmem>>, %arg8: memref<1x1x32xf32, #tpu.memory_space<vmem>>, %arg9: memref<1x32x128xbf16, #tpu.memory_space<vmem>>, %arg10: memref<1x1x128xf32, #tpu.memory_space<vmem>>, %arg11: memref<1x128x32xbf16, #tpu.memory_space<vmem>>, %arg12: memref<1x1x32xf32, #tpu.memory_space<vmem>>, %arg13: memref<1x4x32xf32, #tpu.memory_space<vmem>>, %arg14: memref<1x32x32xbf16, #tpu.memory_space<vmem>>, %arg15: memref<1x32x32xbf16, #tpu.memory_space<vmem>>, %arg16: memref<1x1x32xf32, #tpu.memory_space<vmem>>, %arg17: memref<1x32x32xbf16, #tpu.memory_space<vmem>>, %arg18: memref<1x1x32xf32, #tpu.memory_space<vmem>>, %arg19: memref<2x16x32xf32, #tpu.memory_space<vmem>>) attributes {dimension_semantics = [#tpu.dimension_semantics<parallel>, #tpu.dimension_semantics<arbitrary>], iteration_bounds = array<i64: 1, 4>, scalar_prefetch = 0 : i64, scratch_operands = 0 : i64, tpu.core_type = #tpu.core_type<tc>, window_params = [{transform_indices = @transform_0, window_bounds = array<i64: 2, 16, 32>}, {transform_indices = @transform_1, window_bounds = array<i64: 2, 2, 16>}, {transform_indices = @transform_2, window_bounds = array<i64: 1, 4, 32>}, {transform_indices = @transform_3, window_bounds = array<i64: 1, 32, 96>}, {transform_indices = @transform_4, window_bounds = array<i64: 1, 1, 96>}, {transform_indices = @transform_5, window_bounds = array<i64: 1, 32, 32>}, {transform_indices = @transform_6, window_bounds = array<i64: 1, 1, 32>}, {transform_indices = @transform_7, window_bounds = array<i64: 1, 32, 128>}, {transform_indices = @transform_8, window_bounds = array<i64: 1, 1, 128>}, {transform_indices = @transform_9, window_bounds = array<i64: 1, 128, 32>}, {transform_indices = @transform_10, window_bounds = array<i64: 1, 1, 32>}, {transform_indices = @transform_11, window_bounds = array<i64: 1, 4, 32>}, {transform_indices = @transform_12, window_bounds = array<i64: 1, 32, 32>}, {transform_indices = @transform_13, window_bounds = array<i64: 1, 32, 32>}, {transform_indices = @transform_14, window_bounds = array<i64: 1, 1, 32>}, {transform_indices = @transform_15, window_bounds = array<i64: 1, 32, 32>}, {transform_indices = @transform_16, window_bounds = array<i64: 1, 1, 32>}, {transform_indices = @transform_17, window_bounds = array<i64: 2, 16, 32>}]} {
    %c0_i32 = arith.constant 0 : i32
    %0 = arith.cmpi eq, %arg1, %c0_i32 : i32
    %1 = arith.extui %0 : i1 to i32
    %c0_i32_0 = arith.constant 0 : i32
    %2 = arith.cmpi ne, %1, %c0_i32_0 : i32
    scf.if %2 {
      %c0_87 = arith.constant 0 : index
      %c0_88 = arith.constant 0 : index
      %c0_89 = arith.constant 0 : index
      %271 = vector.load %arg2[%c0_87, %c0_88, %c0_89] : memref<2x16x32xf32, #tpu.memory_space<vmem>>, vector<2x16x32xf32>
      %c0_90 = arith.constant 0 : index
      %c0_91 = arith.constant 0 : index
      %c0_92 = arith.constant 0 : index
      %272 = vector.load %arg19[%c0_90, %c0_91, %c0_92] : memref<2x16x32xf32, #tpu.memory_space<vmem>>, vector<2x16x32xf32>
      tpu.vector_store %arg19[%c0_90, %c0_91, %c0_92], %271 {strides = array<i32>} : memref<2x16x32xf32, #tpu.memory_space<vmem>>, vector<2x16x32xf32>,
    } else {
    }
    %c0 = arith.constant 0 : index
    %c0_1 = arith.constant 0 : index
    %c0_2 = arith.constant 0 : index
    %3 = vector.load %arg4[%c0, %c0_1, %c0_2] : memref<1x4x32xf32, #tpu.memory_space<vmem>>, vector<1x4x32xf32>
    %4 = vector.shape_cast %3 : vector<1x4x32xf32> to vector<4x32xf32>
    %5 = vector.extract_strided_slice %4 {offsets = [0, 0], sizes = [1, 32], strides = [1, 1]} : vector<4x32xf32> to vector<1x32xf32>
    %6 = vector.extract_strided_slice %4 {offsets = [1, 0], sizes = [1, 32], strides = [1, 1]} : vector<4x32xf32> to vector<1x32xf32>
    %7 = vector.extract_strided_slice %4 {offsets = [2, 0], sizes = [1, 32], strides = [1, 1]} : vector<4x32xf32> to vector<1x32xf32>
    %8 = vector.extract_strided_slice %4 {offsets = [3, 0], sizes = [1, 32], strides = [1, 1]} : vector<4x32xf32> to vector<1x32xf32>
    %c0_3 = arith.constant 0 : index
    %c0_4 = arith.constant 0 : index
    %c0_5 = arith.constant 0 : index
    %9 = vector.load %arg5[%c0_3, %c0_4, %c0_5] : memref<1x32x96xbf16, #tpu.memory_space<vmem>>, vector<1x32x96xbf16>
    %10 = vector.shape_cast %9 : vector<1x32x96xbf16> to vector<32x96xbf16>
    %c0_6 = arith.constant 0 : index
    %c0_7 = arith.constant 0 : index
    %c0_8 = arith.constant 0 : index
    %11 = vector.load %arg6[%c0_6, %c0_7, %c0_8] : memref<1x1x96xf32, #tpu.memory_space<vmem>>, vector<1x1x96xf32>
    %12 = vector.shape_cast %11 : vector<1x1x96xf32> to vector<1x96xf32>
    %c0_9 = arith.constant 0 : index
    %c0_10 = arith.constant 0 : index
    %c0_11 = arith.constant 0 : index
    %13 = vector.load %arg7[%c0_9, %c0_10, %c0_11] : memref<1x32x32xbf16, #tpu.memory_space<vmem>>, vector<1x32x32xbf16>
    %14 = vector.shape_cast %13 : vector<1x32x32xbf16> to vector<32x32xbf16>
    %c0_12 = arith.constant 0 : index
    %c0_13 = arith.constant 0 : index
    %c0_14 = arith.constant 0 : index
    %15 = vector.load %arg8[%c0_12, %c0_13, %c0_14] : memref<1x1x32xf32, #tpu.memory_space<vmem>>, vector<1x1x32xf32>
    %16 = vector.shape_cast %15 : vector<1x1x32xf32> to vector<1x32xf32>
    %c0_15 = arith.constant 0 : index
    %c0_16 = arith.constant 0 : index
    %c0_17 = arith.constant 0 : index
    %17 = vector.load %arg9[%c0_15, %c0_16, %c0_17] : memref<1x32x128xbf16, #tpu.memory_space<vmem>>, vector<1x32x128xbf16>
    %18 = vector.shape_cast %17 : vector<1x32x128xbf16> to vector<32x128xbf16>
    %c0_18 = arith.constant 0 : index
    %c0_19 = arith.constant 0 : index
    %c0_20 = arith.constant 0 : index
    %19 = vector.load %arg10[%c0_18, %c0_19, %c0_20] : memref<1x1x128xf32, #tpu.memory_space<vmem>>, vector<1x1x128xf32>
    %20 = vector.shape_cast %19 : vector<1x1x128xf32> to vector<1x128xf32>
    %c0_21 = arith.constant 0 : index
    %c0_22 = arith.constant 0 : index
    %c0_23 = arith.constant 0 : index
    %21 = vector.load %arg11[%c0_21, %c0_22, %c0_23] : memref<1x128x32xbf16, #tpu.memory_space<vmem>>, vector<1x128x32xbf16>
    %22 = vector.shape_cast %21 : vector<1x128x32xbf16> to vector<128x32xbf16>
    %c0_24 = arith.constant 0 : index
    %c0_25 = arith.constant 0 : index
    %c0_26 = arith.constant 0 : index
    %23 = vector.load %arg12[%c0_24, %c0_25, %c0_26] : memref<1x1x32xf32, #tpu.memory_space<vmem>>, vector<1x1x32xf32>
    %24 = vector.shape_cast %23 : vector<1x1x32xf32> to vector<1x32xf32>
    %c2_i32 = arith.constant 2 : i32
    %25 = arith.cmpi slt, %arg1, %c2_i32 : i32
    %26 = arith.extui %25 : i1 to i32
    %27 = arith.sitofp %26 : i32 to f32
    %c0_27 = arith.constant 0 : index
    %c0_28 = arith.constant 0 : index
    %c0_29 = arith.constant 0 : index
    %28 = vector.load %arg3[%c0_27, %c0_28, %c0_29] : memref<2x2x16xf32, #tpu.memory_space<vmem>>, vector<2x2x16xf32>
    %29 = vector.extract_strided_slice %28 {offsets = [0, 0, 0], sizes = [2, 1, 16], strides = [1, 1, 1]} : vector<2x2x16xf32> to vector<2x1x16xf32>
    %30 = vector.broadcast %27 : f32 to vector<2x1x16xf32>
    %31 = arith.mulf %29, %30 : vector<2x1x16xf32>
    %32 = vector.extract_strided_slice %28 {offsets = [0, 1, 0], sizes = [2, 1, 16], strides = [1, 1, 1]} : vector<2x2x16xf32> to vector<2x1x16xf32>
    %cst = arith.constant 1.000000e+00 : f32
    %33 = arith.subf %cst, %27 : f32
    %34 = vector.broadcast %33 : f32 to vector<2x1x16xf32>
    %35 = arith.mulf %32, %34 : vector<2x1x16xf32>
    %36 = arith.addf %31, %35 : vector<2x1x16xf32>
    %c0_30 = arith.constant 0 : index
    %c0_31 = arith.constant 0 : index
    %c0_32 = arith.constant 0 : index
    %37 = vector.load %arg19[%c0_30, %c0_31, %c0_32] : memref<2x16x32xf32, #tpu.memory_space<vmem>>, vector<2x16x32xf32>
    %38 = vector.shape_cast %37 : vector<2x16x32xf32> to vector<32x32xf32>
    %cst_33 = arith.constant dense<0.000000e+00> : vector<32xf32>
    %39 = vector.multi_reduction <add>, %38, %cst_33 [1] : vector<32x32xf32> to vector<32xf32>
    %40 = vector.shape_cast %39 : vector<32xf32> to vector<32x1xf32>
    %cst_34 = arith.constant 3.200000e+01 : f32
    %41 = vector.broadcast %cst_34 : f32 to vector<32x1xf32>
    %42 = arith.divf %40, %41 : vector<32x1xf32>
    %43 = vector.broadcast %42 : vector<32x1xf32> to vector<32x32xf32>
    %44 = arith.subf %38, %43 : vector<32x32xf32>
    %45 = arith.mulf %44, %44 : vector<32x32xf32>
    %cst_35 = arith.constant dense<0.000000e+00> : vector<32xf32>
    %46 = vector.multi_reduction <add>, %45, %cst_35 [1] : vector<32x32xf32> to vector<32xf32>
    %47 = vector.shape_cast %46 : vector<32xf32> to vector<32x1xf32>
    %cst_36 = arith.constant 3.200000e+01 : f32
    %48 = vector.broadcast %cst_36 : f32 to vector<32x1xf32>
    %49 = arith.divf %47, %48 : vector<32x1xf32>
    %cst_37 = arith.constant 9.99999974E-6 : f32
    %50 = vector.broadcast %cst_37 : f32 to vector<32x1xf32>
    %51 = arith.addf %49, %50 : vector<32x1xf32>
    %52 = math.rsqrt %51 : vector<32x1xf32>
    %53 = vector.broadcast %52 : vector<32x1xf32> to vector<32x32xf32>
    %54 = arith.mulf %44, %53 : vector<32x32xf32>
    %55 = vector.broadcast %5 : vector<1x32xf32> to vector<32x32xf32>
    %56 = arith.mulf %54, %55 : vector<32x32xf32>
    %57 = vector.broadcast %6 : vector<1x32xf32> to vector<32x32xf32>
    %58 = arith.addf %56, %57 : vector<32x32xf32>
    %59 = arith.truncf %58 : vector<32x32xf32> to vector<32x32xbf16>
    %cst_38 = arith.constant dense<0.000000e+00> : vector<32x96xf32>
    %60 = tpu.matmul %59, %10, %cst_38 {dimension_numbers = #tpu.dot_dimension_numbers<[1], [0], [0], [1], [0, 0, 1, 1], [], []>} : vector<32x32xbf16>, vector<32x96xbf16>, vector<32x96xf32> -> vector<32x96xf32>
    %61 = vector.broadcast %12 : vector<1x96xf32> to vector<32x96xf32>
    %62 = arith.addf %60, %61 : vector<32x96xf32>
    %63 = vector.extract_strided_slice %62 {offsets = [0, 0], sizes = [32, 32], strides = [1, 1]} : vector<32x96xf32> to vector<32x32xf32>
    %cst_39 = arith.constant 0.353553385 : f32
    %64 = vector.broadcast %cst_39 : f32 to vector<32x32xf32>
    %65 = arith.mulf %63, %64 : vector<32x32xf32>
    %66 = arith.truncf %65 : vector<32x32xf32> to vector<32x32xbf16>
    %67 = vector.extract_strided_slice %62 {offsets = [0, 32], sizes = [32, 32], strides = [1, 1]} : vector<32x96xf32> to vector<32x32xf32>
    %68 = arith.truncf %67 : vector<32x32xf32> to vector<32x32xbf16>
    %69 = vector.extract_strided_slice %62 {offsets = [0, 64], sizes = [32, 32], strides = [1, 1]} : vector<32x96xf32> to vector<32x32xf32>
    %70 = arith.truncf %69 : vector<32x32xf32> to vector<32x32xbf16>
    %71 = vector.extract_strided_slice %66 {offsets = [0, 0], sizes = [16, 32], strides = [1, 1]} : vector<32x32xbf16> to vector<16x32xbf16>
    %72 = vector.extract_strided_slice %68 {offsets = [0, 0], sizes = [16, 32], strides = [1, 1]} : vector<32x32xbf16> to vector<16x32xbf16>
    %73 = vector.extract_strided_slice %70 {offsets = [0, 0], sizes = [16, 32], strides = [1, 1]} : vector<32x32xbf16> to vector<16x32xbf16>
    %74 = vector.extract_strided_slice %36 {offsets = [0, 0, 0], sizes = [1, 1, 16], strides = [1, 1, 1]} : vector<2x1x16xf32> to vector<1x1x16xf32>
    %75 = vector.shape_cast %74 : vector<1x1x16xf32> to vector<1x16xf32>
    %76 = vector.shape_cast %75 : vector<1x16xf32> to vector<1x16xf32>
    %77 = vector.broadcast %76 : vector<1x16xf32> to vector<16x16xf32>
    %78 = vector.extract_strided_slice %71 {offsets = [0, 0], sizes = [16, 8], strides = [1, 1]} : vector<16x32xbf16> to vector<16x8xbf16>
    %79 = vector.extract_strided_slice %72 {offsets = [0, 0], sizes = [16, 8], strides = [1, 1]} : vector<16x32xbf16> to vector<16x8xbf16>
    %cst_40 = arith.constant dense<0.000000e+00> : vector<16x16xf32>
    %80 = tpu.matmul %78, %79, %cst_40 {dimension_numbers = #tpu.dot_dimension_numbers<[1], [1], [0], [0], [0, 0, 1, 0], [], []>} : vector<16x8xbf16>, vector<16x8xbf16>, vector<16x16xf32> -> vector<16x16xf32>
    %81 = arith.addf %80, %77 : vector<16x16xf32>
    %cst_41 = arith.constant dense<0xFF800000> : vector<16xf32>
    %82 = vector.multi_reduction <maximumf>, %81, %cst_41 [1] : vector<16x16xf32> to vector<16xf32>
    %83 = vector.shape_cast %82 : vector<16xf32> to vector<16x1xf32>
    %84 = vector.broadcast %83 : vector<16x1xf32> to vector<16x16xf32>
    %85 = arith.subf %81, %84 : vector<16x16xf32>
    %86 = math.exp %85 : vector<16x16xf32>
    %cst_42 = arith.constant dense<0.000000e+00> : vector<16xf32>
    %87 = vector.multi_reduction <add>, %86, %cst_42 [1] : vector<16x16xf32> to vector<16xf32>
    %88 = vector.shape_cast %87 : vector<16xf32> to vector<16x1xf32>
    %89 = tpu.reciprocal %88 {approx = true} : vector<16x1xf32> -> vector<16x1xf32>
    %90 = vector.broadcast %89 : vector<16x1xf32> to vector<16x16xf32>
    %91 = arith.mulf %86, %90 : vector<16x16xf32>
    %92 = arith.truncf %91 : vector<16x16xf32> to vector<16x16xbf16>
    %93 = vector.extract_strided_slice %73 {offsets = [0, 0], sizes = [16, 8], strides = [1, 1]} : vector<16x32xbf16> to vector<16x8xbf16>
    %cst_43 = arith.constant dense<0.000000e+00> : vector<16x8xf32>
    %94 = tpu.matmul %92, %93, %cst_43 {dimension_numbers = #tpu.dot_dimension_numbers<[1], [0], [0], [1], [0, 0, 1, 1], [], []>} : vector<16x16xbf16>, vector<16x8xbf16>, vector<16x8xf32> -> vector<16x8xf32>
    %95 = vector.extract_strided_slice %71 {offsets = [0, 8], sizes = [16, 8], strides = [1, 1]} : vector<16x32xbf16> to vector<16x8xbf16>
    %96 = vector.extract_strided_slice %72 {offsets = [0, 8], sizes = [16, 8], strides = [1, 1]} : vector<16x32xbf16> to vector<16x8xbf16>
    %cst_44 = arith.constant dense<0.000000e+00> : vector<16x16xf32>
    %97 = tpu.matmul %95, %96, %cst_44 {dimension_numbers = #tpu.dot_dimension_numbers<[1], [1], [0], [0], [0, 0, 1, 0], [], []>} : vector<16x8xbf16>, vector<16x8xbf16>, vector<16x16xf32> -> vector<16x16xf32>
    %98 = arith.addf %97, %77 : vector<16x16xf32>
    %cst_45 = arith.constant dense<0xFF800000> : vector<16xf32>
    %99 = vector.multi_reduction <maximumf>, %98, %cst_45 [1] : vector<16x16xf32> to vector<16xf32>
    %100 = vector.shape_cast %99 : vector<16xf32> to vector<16x1xf32>
    %101 = vector.broadcast %100 : vector<16x1xf32> to vector<16x16xf32>
    %102 = arith.subf %98, %101 : vector<16x16xf32>
    %103 = math.exp %102 : vector<16x16xf32>
    %cst_46 = arith.constant dense<0.000000e+00> : vector<16xf32>
    %104 = vector.multi_reduction <add>, %103, %cst_46 [1] : vector<16x16xf32> to vector<16xf32>
    %105 = vector.shape_cast %104 : vector<16xf32> to vector<16x1xf32>
    %106 = tpu.reciprocal %105 {approx = true} : vector<16x1xf32> -> vector<16x1xf32>
    %107 = vector.broadcast %106 : vector<16x1xf32> to vector<16x16xf32>
    %108 = arith.mulf %103, %107 : vector<16x16xf32>
    %109 = arith.truncf %108 : vector<16x16xf32> to vector<16x16xbf16>
    %110 = vector.extract_strided_slice %73 {offsets = [0, 8], sizes = [16, 8], strides = [1, 1]} : vector<16x32xbf16> to vector<16x8xbf16>
    %cst_47 = arith.constant dense<0.000000e+00> : vector<16x8xf32>
    %111 = tpu.matmul %109, %110, %cst_47 {dimension_numbers = #tpu.dot_dimension_numbers<[1], [0], [0], [1], [0, 0, 1, 1], [], []>} : vector<16x16xbf16>, vector<16x8xbf16>, vector<16x8xf32> -> vector<16x8xf32>
    %112 = vector.extract_strided_slice %71 {offsets = [0, 16], sizes = [16, 8], strides = [1, 1]} : vector<16x32xbf16> to vector<16x8xbf16>
    %113 = vector.extract_strided_slice %72 {offsets = [0, 16], sizes = [16, 8], strides = [1, 1]} : vector<16x32xbf16> to vector<16x8xbf16>
    %cst_48 = arith.constant dense<0.000000e+00> : vector<16x16xf32>
    %114 = tpu.matmul %112, %113, %cst_48 {dimension_numbers = #tpu.dot_dimension_numbers<[1], [1], [0], [0], [0, 0, 1, 0], [], []>} : vector<16x8xbf16>, vector<16x8xbf16>, vector<16x16xf32> -> vector<16x16xf32>
    %115 = arith.addf %114, %77 : vector<16x16xf32>
    %cst_49 = arith.constant dense<0xFF800000> : vector<16xf32>
    %116 = vector.multi_reduction <maximumf>, %115, %cst_49 [1] : vector<16x16xf32> to vector<16xf32>
    %117 = vector.shape_cast %116 : vector<16xf32> to vector<16x1xf32>
    %118 = vector.broadcast %117 : vector<16x1xf32> to vector<16x16xf32>
    %119 = arith.subf %115, %118 : vector<16x16xf32>
    %120 = math.exp %119 : vector<16x16xf32>
    %cst_50 = arith.constant dense<0.000000e+00> : vector<16xf32>
    %121 = vector.multi_reduction <add>, %120, %cst_50 [1] : vector<16x16xf32> to vector<16xf32>
    %122 = vector.shape_cast %121 : vector<16xf32> to vector<16x1xf32>
    %123 = tpu.reciprocal %122 {approx = true} : vector<16x1xf32> -> vector<16x1xf32>
    %124 = vector.broadcast %123 : vector<16x1xf32> to vector<16x16xf32>
    %125 = arith.mulf %120, %124 : vector<16x16xf32>
    %126 = arith.truncf %125 : vector<16x16xf32> to vector<16x16xbf16>
    %127 = vector.extract_strided_slice %73 {offsets = [0, 16], sizes = [16, 8], strides = [1, 1]} : vector<16x32xbf16> to vector<16x8xbf16>
    %cst_51 = arith.constant dense<0.000000e+00> : vector<16x8xf32>
    %128 = tpu.matmul %126, %127, %cst_51 {dimension_numbers = #tpu.dot_dimension_numbers<[1], [0], [0], [1], [0, 0, 1, 1], [], []>} : vector<16x16xbf16>, vector<16x8xbf16>, vector<16x8xf32> -> vector<16x8xf32>
    %129 = vector.extract_strided_slice %71 {offsets = [0, 24], sizes = [16, 8], strides = [1, 1]} : vector<16x32xbf16> to vector<16x8xbf16>
    %130 = vector.extract_strided_slice %72 {offsets = [0, 24], sizes = [16, 8], strides = [1, 1]} : vector<16x32xbf16> to vector<16x8xbf16>
    %cst_52 = arith.constant dense<0.000000e+00> : vector<16x16xf32>
    %131 = tpu.matmul %129, %130, %cst_52 {dimension_numbers = #tpu.dot_dimension_numbers<[1], [1], [0], [0], [0, 0, 1, 0], [], []>} : vector<16x8xbf16>, vector<16x8xbf16>, vector<16x16xf32> -> vector<16x16xf32>
    %132 = arith.addf %131, %77 : vector<16x16xf32>
    %cst_53 = arith.constant dense<0xFF800000> : vector<16xf32>
    %133 = vector.multi_reduction <maximumf>, %132, %cst_53 [1] : vector<16x16xf32> to vector<16xf32>
    %134 = vector.shape_cast %133 : vector<16xf32> to vector<16x1xf32>
    %135 = vector.broadcast %134 : vector<16x1xf32> to vector<16x16xf32>
    %136 = arith.subf %132, %135 : vector<16x16xf32>
    %137 = math.exp %136 : vector<16x16xf32>
    %cst_54 = arith.constant dense<0.000000e+00> : vector<16xf32>
    %138 = vector.multi_reduction <add>, %137, %cst_54 [1] : vector<16x16xf32> to vector<16xf32>
    %139 = vector.shape_cast %138 : vector<16xf32> to vector<16x1xf32>
    %140 = tpu.reciprocal %139 {approx = true} : vector<16x1xf32> -> vector<16x1xf32>
    %141 = vector.broadcast %140 : vector<16x1xf32> to vector<16x16xf32>
    %142 = arith.mulf %137, %141 : vector<16x16xf32>
    %143 = arith.truncf %142 : vector<16x16xf32> to vector<16x16xbf16>
    %144 = vector.extract_strided_slice %73 {offsets = [0, 24], sizes = [16, 8], strides = [1, 1]} : vector<16x32xbf16> to vector<16x8xbf16>
    %cst_55 = arith.constant dense<0.000000e+00> : vector<16x8xf32>
    %145 = tpu.matmul %143, %144, %cst_55 {dimension_numbers = #tpu.dot_dimension_numbers<[1], [0], [0], [1], [0, 0, 1, 1], [], []>} : vector<16x16xbf16>, vector<16x8xbf16>, vector<16x8xf32> -> vector<16x8xf32>
    %146 = tpu.concatenate %94, %111, %128, %145 in 1 : vector<16x8xf32>, vector<16x8xf32>, vector<16x8xf32>, vector<16x8xf32> -> vector<16x32xf32>
    %147 = vector.extract_strided_slice %66 {offsets = [16, 0], sizes = [16, 32], strides = [1, 1]} : vector<32x32xbf16> to vector<16x32xbf16>
    %148 = vector.extract_strided_slice %68 {offsets = [16, 0], sizes = [16, 32], strides = [1, 1]} : vector<32x32xbf16> to vector<16x32xbf16>
    %149 = vector.extract_strided_slice %70 {offsets = [16, 0], sizes = [16, 32], strides = [1, 1]} : vector<32x32xbf16> to vector<16x32xbf16>
    %150 = vector.extract_strided_slice %36 {offsets = [1, 0, 0], sizes = [1, 1, 16], strides = [1, 1, 1]} : vector<2x1x16xf32> to vector<1x1x16xf32>
    %151 = vector.shape_cast %150 : vector<1x1x16xf32> to vector<1x16xf32>
    %152 = vector.shape_cast %151 : vector<1x16xf32> to vector<1x16xf32>
    %153 = vector.broadcast %152 : vector<1x16xf32> to vector<16x16xf32>
    %154 = vector.extract_strided_slice %147 {offsets = [0, 0], sizes = [16, 8], strides = [1, 1]} : vector<16x32xbf16> to vector<16x8xbf16>
    %155 = vector.extract_strided_slice %148 {offsets = [0, 0], sizes = [16, 8], strides = [1, 1]} : vector<16x32xbf16> to vector<16x8xbf16>
    %cst_56 = arith.constant dense<0.000000e+00> : vector<16x16xf32>
    %156 = tpu.matmul %154, %155, %cst_56 {dimension_numbers = #tpu.dot_dimension_numbers<[1], [1], [0], [0], [0, 0, 1, 0], [], []>} : vector<16x8xbf16>, vector<16x8xbf16>, vector<16x16xf32> -> vector<16x16xf32>
    %157 = arith.addf %156, %153 : vector<16x16xf32>
    %cst_57 = arith.constant dense<0xFF800000> : vector<16xf32>
    %158 = vector.multi_reduction <maximumf>, %157, %cst_57 [1] : vector<16x16xf32> to vector<16xf32>
    %159 = vector.shape_cast %158 : vector<16xf32> to vector<16x1xf32>
    %160 = vector.broadcast %159 : vector<16x1xf32> to vector<16x16xf32>
    %161 = arith.subf %157, %160 : vector<16x16xf32>
    %162 = math.exp %161 : vector<16x16xf32>
    %cst_58 = arith.constant dense<0.000000e+00> : vector<16xf32>
    %163 = vector.multi_reduction <add>, %162, %cst_58 [1] : vector<16x16xf32> to vector<16xf32>
    %164 = vector.shape_cast %163 : vector<16xf32> to vector<16x1xf32>
    %165 = tpu.reciprocal %164 {approx = true} : vector<16x1xf32> -> vector<16x1xf32>
    %166 = vector.broadcast %165 : vector<16x1xf32> to vector<16x16xf32>
    %167 = arith.mulf %162, %166 : vector<16x16xf32>
    %168 = arith.truncf %167 : vector<16x16xf32> to vector<16x16xbf16>
    %169 = vector.extract_strided_slice %149 {offsets = [0, 0], sizes = [16, 8], strides = [1, 1]} : vector<16x32xbf16> to vector<16x8xbf16>
    %cst_59 = arith.constant dense<0.000000e+00> : vector<16x8xf32>
    %170 = tpu.matmul %168, %169, %cst_59 {dimension_numbers = #tpu.dot_dimension_numbers<[1], [0], [0], [1], [0, 0, 1, 1], [], []>} : vector<16x16xbf16>, vector<16x8xbf16>, vector<16x8xf32> -> vector<16x8xf32>
    %171 = vector.extract_strided_slice %147 {offsets = [0, 8], sizes = [16, 8], strides = [1, 1]} : vector<16x32xbf16> to vector<16x8xbf16>
    %172 = vector.extract_strided_slice %148 {offsets = [0, 8], sizes = [16, 8], strides = [1, 1]} : vector<16x32xbf16> to vector<16x8xbf16>
    %cst_60 = arith.constant dense<0.000000e+00> : vector<16x16xf32>
    %173 = tpu.matmul %171, %172, %cst_60 {dimension_numbers = #tpu.dot_dimension_numbers<[1], [1], [0], [0], [0, 0, 1, 0], [], []>} : vector<16x8xbf16>, vector<16x8xbf16>, vector<16x16xf32> -> vector<16x16xf32>
    %174 = arith.addf %173, %153 : vector<16x16xf32>
    %cst_61 = arith.constant dense<0xFF800000> : vector<16xf32>
    %175 = vector.multi_reduction <maximumf>, %174, %cst_61 [1] : vector<16x16xf32> to vector<16xf32>
    %176 = vector.shape_cast %175 : vector<16xf32> to vector<16x1xf32>
    %177 = vector.broadcast %176 : vector<16x1xf32> to vector<16x16xf32>
    %178 = arith.subf %174, %177 : vector<16x16xf32>
    %179 = math.exp %178 : vector<16x16xf32>
    %cst_62 = arith.constant dense<0.000000e+00> : vector<16xf32>
    %180 = vector.multi_reduction <add>, %179, %cst_62 [1] : vector<16x16xf32> to vector<16xf32>
    %181 = vector.shape_cast %180 : vector<16xf32> to vector<16x1xf32>
    %182 = tpu.reciprocal %181 {approx = true} : vector<16x1xf32> -> vector<16x1xf32>
    %183 = vector.broadcast %182 : vector<16x1xf32> to vector<16x16xf32>
    %184 = arith.mulf %179, %183 : vector<16x16xf32>
    %185 = arith.truncf %184 : vector<16x16xf32> to vector<16x16xbf16>
    %186 = vector.extract_strided_slice %149 {offsets = [0, 8], sizes = [16, 8], strides = [1, 1]} : vector<16x32xbf16> to vector<16x8xbf16>
    %cst_63 = arith.constant dense<0.000000e+00> : vector<16x8xf32>
    %187 = tpu.matmul %185, %186, %cst_63 {dimension_numbers = #tpu.dot_dimension_numbers<[1], [0], [0], [1], [0, 0, 1, 1], [], []>} : vector<16x16xbf16>, vector<16x8xbf16>, vector<16x8xf32> -> vector<16x8xf32>
    %188 = vector.extract_strided_slice %147 {offsets = [0, 16], sizes = [16, 8], strides = [1, 1]} : vector<16x32xbf16> to vector<16x8xbf16>
    %189 = vector.extract_strided_slice %148 {offsets = [0, 16], sizes = [16, 8], strides = [1, 1]} : vector<16x32xbf16> to vector<16x8xbf16>
    %cst_64 = arith.constant dense<0.000000e+00> : vector<16x16xf32>
    %190 = tpu.matmul %188, %189, %cst_64 {dimension_numbers = #tpu.dot_dimension_numbers<[1], [1], [0], [0], [0, 0, 1, 0], [], []>} : vector<16x8xbf16>, vector<16x8xbf16>, vector<16x16xf32> -> vector<16x16xf32>
    %191 = arith.addf %190, %153 : vector<16x16xf32>
    %cst_65 = arith.constant dense<0xFF800000> : vector<16xf32>
    %192 = vector.multi_reduction <maximumf>, %191, %cst_65 [1] : vector<16x16xf32> to vector<16xf32>
    %193 = vector.shape_cast %192 : vector<16xf32> to vector<16x1xf32>
    %194 = vector.broadcast %193 : vector<16x1xf32> to vector<16x16xf32>
    %195 = arith.subf %191, %194 : vector<16x16xf32>
    %196 = math.exp %195 : vector<16x16xf32>
    %cst_66 = arith.constant dense<0.000000e+00> : vector<16xf32>
    %197 = vector.multi_reduction <add>, %196, %cst_66 [1] : vector<16x16xf32> to vector<16xf32>
    %198 = vector.shape_cast %197 : vector<16xf32> to vector<16x1xf32>
    %199 = tpu.reciprocal %198 {approx = true} : vector<16x1xf32> -> vector<16x1xf32>
    %200 = vector.broadcast %199 : vector<16x1xf32> to vector<16x16xf32>
    %201 = arith.mulf %196, %200 : vector<16x16xf32>
    %202 = arith.truncf %201 : vector<16x16xf32> to vector<16x16xbf16>
    %203 = vector.extract_strided_slice %149 {offsets = [0, 16], sizes = [16, 8], strides = [1, 1]} : vector<16x32xbf16> to vector<16x8xbf16>
    %cst_67 = arith.constant dense<0.000000e+00> : vector<16x8xf32>
    %204 = tpu.matmul %202, %203, %cst_67 {dimension_numbers = #tpu.dot_dimension_numbers<[1], [0], [0], [1], [0, 0, 1, 1], [], []>} : vector<16x16xbf16>, vector<16x8xbf16>, vector<16x8xf32> -> vector<16x8xf32>
    %205 = vector.extract_strided_slice %147 {offsets = [0, 24], sizes = [16, 8], strides = [1, 1]} : vector<16x32xbf16> to vector<16x8xbf16>
    %206 = vector.extract_strided_slice %148 {offsets = [0, 24], sizes = [16, 8], strides = [1, 1]} : vector<16x32xbf16> to vector<16x8xbf16>
    %cst_68 = arith.constant dense<0.000000e+00> : vector<16x16xf32>
    %207 = tpu.matmul %205, %206, %cst_68 {dimension_numbers = #tpu.dot_dimension_numbers<[1], [1], [0], [0], [0, 0, 1, 0], [], []>} : vector<16x8xbf16>, vector<16x8xbf16>, vector<16x16xf32> -> vector<16x16xf32>
    %208 = arith.addf %207, %153 : vector<16x16xf32>
    %cst_69 = arith.constant dense<0xFF800000> : vector<16xf32>
    %209 = vector.multi_reduction <maximumf>, %208, %cst_69 [1] : vector<16x16xf32> to vector<16xf32>
    %210 = vector.shape_cast %209 : vector<16xf32> to vector<16x1xf32>
    %211 = vector.broadcast %210 : vector<16x1xf32> to vector<16x16xf32>
    %212 = arith.subf %208, %211 : vector<16x16xf32>
    %213 = math.exp %212 : vector<16x16xf32>
    %cst_70 = arith.constant dense<0.000000e+00> : vector<16xf32>
    %214 = vector.multi_reduction <add>, %213, %cst_70 [1] : vector<16x16xf32> to vector<16xf32>
    %215 = vector.shape_cast %214 : vector<16xf32> to vector<16x1xf32>
    %216 = tpu.reciprocal %215 {approx = true} : vector<16x1xf32> -> vector<16x1xf32>
    %217 = vector.broadcast %216 : vector<16x1xf32> to vector<16x16xf32>
    %218 = arith.mulf %213, %217 : vector<16x16xf32>
    %219 = arith.truncf %218 : vector<16x16xf32> to vector<16x16xbf16>
    %220 = vector.extract_strided_slice %149 {offsets = [0, 24], sizes = [16, 8], strides = [1, 1]} : vector<16x32xbf16> to vector<16x8xbf16>
    %cst_71 = arith.constant dense<0.000000e+00> : vector<16x8xf32>
    %221 = tpu.matmul %219, %220, %cst_71 {dimension_numbers = #tpu.dot_dimension_numbers<[1], [0], [0], [1], [0, 0, 1, 1], [], []>} : vector<16x16xbf16>, vector<16x8xbf16>, vector<16x8xf32> -> vector<16x8xf32>
    %222 = tpu.concatenate %170, %187, %204, %221 in 1 : vector<16x8xf32>, vector<16x8xf32>, vector<16x8xf32>, vector<16x8xf32> -> vector<16x32xf32>
    %223 = tpu.concatenate %146, %222 in 0 : vector<16x32xf32>, vector<16x32xf32> -> vector<32x32xf32>
    %224 = arith.truncf %223 : vector<32x32xf32> to vector<32x32xbf16>
    %cst_72 = arith.constant dense<0.000000e+00> : vector<32x32xf32>
    %225 = tpu.matmul %224, %14, %cst_72 {dimension_numbers = #tpu.dot_dimension_numbers<[1], [0], [0], [1], [0, 0, 1, 1], [], []>} : vector<32x32xbf16>, vector<32x32xbf16>, vector<32x32xf32> -> vector<32x32xf32>
    %226 = vector.broadcast %16 : vector<1x32xf32> to vector<32x32xf32>
    %227 = arith.addf %225, %226 : vector<32x32xf32>
    %228 = arith.addf %38, %227 : vector<32x32xf32>
    %cst_73 = arith.constant dense<0.000000e+00> : vector<32xf32>
    %229 = vector.multi_reduction <add>, %228, %cst_73 [1] : vector<32x32xf32> to vector<32xf32>
    %230 = vector.shape_cast %229 : vector<32xf32> to vector<32x1xf32>
    %cst_74 = arith.constant 3.200000e+01 : f32
    %231 = vector.broadcast %cst_74 : f32 to vector<32x1xf32>
    %232 = arith.divf %230, %231 : vector<32x1xf32>
    %233 = vector.broadcast %232 : vector<32x1xf32> to vector<32x32xf32>
    %234 = arith.subf %228, %233 : vector<32x32xf32>
    %235 = arith.mulf %234, %234 : vector<32x32xf32>
    %cst_75 = arith.constant dense<0.000000e+00> : vector<32xf32>
    %236 = vector.multi_reduction <add>, %235, %cst_75 [1] : vector<32x32xf32> to vector<32xf32>
    %237 = vector.shape_cast %236 : vector<32xf32> to vector<32x1xf32>
    %cst_76 = arith.constant 3.200000e+01 : f32
    %238 = vector.broadcast %cst_76 : f32 to vector<32x1xf32>
    %239 = arith.divf %237, %238 : vector<32x1xf32>
    %cst_77 = arith.constant 9.99999974E-6 : f32
    %240 = vector.broadcast %cst_77 : f32 to vector<32x1xf32>
    %241 = arith.addf %239, %240 : vector<32x1xf32>
    %242 = math.rsqrt %241 : vector<32x1xf32>
    %243 = vector.broadcast %242 : vector<32x1xf32> to vector<32x32xf32>
    %244 = arith.mulf %234, %243 : vector<32x32xf32>
    %245 = vector.broadcast %7 : vector<1x32xf32> to vector<32x32xf32>
    %246 = arith.mulf %244, %245 : vector<32x32xf32>
    %247 = vector.broadcast %8 : vector<1x32xf32> to vector<32x32xf32>
    %248 = arith.addf %246, %247 : vector<32x32xf32>
    %249 = arith.truncf %248 : vector<32x32xf32> to vector<32x32xbf16>
    %cst_78 = arith.constant dense<0.000000e+00> : vector<32x128xf32>
    %250 = tpu.matmul %249, %18, %cst_78 {dimension_numbers = #tpu.dot_dimension_numbers<[1], [0], [0], [1], [0, 0, 1, 1], [], []>} : vector<32x32xbf16>, vector<32x128xbf16>, vector<32x128xf32> -> vector<32x128xf32>
    %251 = vector.broadcast %20 : vector<1x128xf32> to vector<32x128xf32>
    %252 = arith.addf %250, %251 : vector<32x128xf32>
    %253 = arith.truncf %252 : vector<32x128xf32> to vector<32x128xbf16>
    %cst_79 = arith.constant 1.703130e+00 : bf16
    %254 = vector.broadcast %cst_79 : bf16 to vector<32x128xbf16>
    %255 = arith.mulf %254, %253 : vector<32x128xbf16>
    %256 = arith.negf %255 : vector<32x128xbf16>
    %257 = math.exp %256 : vector<32x128xbf16>
    %cst_80 = arith.constant 1.000000e+00 : bf16
    %258 = vector.broadcast %cst_80 : bf16 to vector<32x128xbf16>
    %259 = arith.addf %258, %257 : vector<32x128xbf16>
    %260 = arith.divf %258, %259 : vector<32x128xbf16>
    %261 = arith.mulf %253, %260 : vector<32x128xbf16>
    %cst_81 = arith.constant dense<0.000000e+00> : vector<32x32xf32>
    %262 = tpu.matmul %261, %22, %cst_81 {dimension_numbers = #tpu.dot_dimension_numbers<[1], [0], [0], [1], [0, 0, 1, 1], [], []>} : vector<32x128xbf16>, vector<128x32xbf16>, vector<32x32xf32> -> vector<32x32xf32>
    %263 = vector.broadcast %24 : vector<1x32xf32> to vector<32x32xf32>
    %264 = arith.addf %262, %263 : vector<32x32xf32>
    %265 = arith.addf %228, %264 : vector<32x32xf32>
    %266 = vector.shape_cast %265 : vector<32x32xf32> to vector<2x16x32xf32>
    %c0_82 = arith.constant 0 : index
    %c0_83 = arith.constant 0 : index
    %c0_84 = arith.constant 0 : index
    %267 = vector.load %arg19[%c0_82, %c0_83, %c0_84] : memref<2x16x32xf32, #tpu.memory_space<vmem>>, vector<2x16x32xf32>
    tpu.vector_store %arg19[%c0_82, %c0_83, %c0_84], %266 {strides = array<i32>} : memref<2x16x32xf32, #tpu.memory_space<vmem>>, vector<2x16x32xf32>,
    %c2_i32_85 = arith.constant 2 : i32
    %268 = arith.cmpi slt, %arg1, %c2_i32_85 : i32
    %269 = arith.extui %268 : i1 to i32
    %c0_i32_86 = arith.constant 0 : i32
    %270 = arith.cmpi ne, %269, %c0_i32_86 : i32
    scf.if %270 {
      %c0_87 = arith.constant 0 : index
      %c0_88 = arith.constant 0 : index
      %c0_89 = arith.constant 0 : index
      %271 = vector.load %arg13[%c0_87, %c0_88, %c0_89] : memref<1x4x32xf32, #tpu.memory_space<vmem>>, vector<1x4x32xf32>
      %272 = vector.shape_cast %271 : vector<1x4x32xf32> to vector<4x32xf32>
      %273 = vector.extract_strided_slice %272 {offsets = [0, 0], sizes = [1, 32], strides = [1, 1]} : vector<4x32xf32> to vector<1x32xf32>
      %274 = vector.extract_strided_slice %272 {offsets = [1, 0], sizes = [1, 32], strides = [1, 1]} : vector<4x32xf32> to vector<1x32xf32>
      %275 = vector.extract_strided_slice %272 {offsets = [2, 0], sizes = [1, 32], strides = [1, 1]} : vector<4x32xf32> to vector<1x32xf32>
      %276 = vector.extract_strided_slice %272 {offsets = [3, 0], sizes = [1, 32], strides = [1, 1]} : vector<4x32xf32> to vector<1x32xf32>
      %c0_90 = arith.constant 0 : index
      %c0_91 = arith.constant 0 : index
      %c0_92 = arith.constant 0 : index
      %277 = vector.load %arg14[%c0_90, %c0_91, %c0_92] : memref<1x32x32xbf16, #tpu.memory_space<vmem>>, vector<1x32x32xbf16>
      %278 = vector.shape_cast %277 : vector<1x32x32xbf16> to vector<32x32xbf16>
      %c0_93 = arith.constant 0 : index
      %c0_94 = arith.constant 0 : index
      %c0_95 = arith.constant 0 : index
      %279 = vector.load %arg15[%c0_93, %c0_94, %c0_95] : memref<1x32x32xbf16, #tpu.memory_space<vmem>>, vector<1x32x32xbf16>
      %280 = vector.shape_cast %279 : vector<1x32x32xbf16> to vector<32x32xbf16>
      %c0_96 = arith.constant 0 : index
      %c0_97 = arith.constant 0 : index
      %c0_98 = arith.constant 0 : index
      %281 = vector.load %arg16[%c0_96, %c0_97, %c0_98] : memref<1x1x32xf32, #tpu.memory_space<vmem>>, vector<1x1x32xf32>
      %282 = vector.shape_cast %281 : vector<1x1x32xf32> to vector<1x32xf32>
      %c0_99 = arith.constant 0 : index
      %c0_100 = arith.constant 0 : index
      %c0_101 = arith.constant 0 : index
      %283 = vector.load %arg17[%c0_99, %c0_100, %c0_101] : memref<1x32x32xbf16, #tpu.memory_space<vmem>>, vector<1x32x32xbf16>
      %284 = vector.shape_cast %283 : vector<1x32x32xbf16> to vector<32x32xbf16>
      %c0_102 = arith.constant 0 : index
      %c0_103 = arith.constant 0 : index
      %c0_104 = arith.constant 0 : index
      %285 = vector.load %arg18[%c0_102, %c0_103, %c0_104] : memref<1x1x32xf32, #tpu.memory_space<vmem>>, vector<1x1x32xf32>
      %286 = vector.shape_cast %285 : vector<1x1x32xf32> to vector<1x32xf32>
      %287 = vector.extract_strided_slice %266 {offsets = [0, 0, 0], sizes = [1, 16, 32], strides = [1, 1, 1]} : vector<2x16x32xf32> to vector<1x16x32xf32>
      %288 = vector.shape_cast %287 : vector<1x16x32xf32> to vector<16x32xf32>
      %289 = vector.extract_strided_slice %288 {offsets = [0, 0], sizes = [5, 32], strides = [1, 1]} : vector<16x32xf32> to vector<5x32xf32>
      %290 = vector.extract_strided_slice %288 {offsets = [5, 0], sizes = [8, 32], strides = [1, 1]} : vector<16x32xf32> to vector<8x32xf32>
      %cst_105 = arith.constant dense<0.000000e+00> : vector<32xf32>
      %291 = vector.multi_reduction <add>, %290, %cst_105 [0] : vector<8x32xf32> to vector<32xf32>
      %292 = vector.shape_cast %291 : vector<32xf32> to vector<1x32xf32>
      %cst_106 = arith.constant 1.250000e-01 : f32
      %293 = vector.broadcast %cst_106 : f32 to vector<1x32xf32>
      %294 = arith.mulf %292, %293 : vector<1x32xf32>
      %cst_107 = arith.constant dense<0.000000e+00> : vector<5xf32>
      %295 = vector.multi_reduction <add>, %289, %cst_107 [1] : vector<5x32xf32> to vector<5xf32>
      %296 = vector.shape_cast %295 : vector<5xf32> to vector<5x1xf32>
      %cst_108 = arith.constant dense<0.000000e+00> : vector<1xf32>
      %297 = vector.multi_reduction <add>, %294, %cst_108 [1] : vector<1x32xf32> to vector<1xf32>
      %298 = vector.shape_cast %297 : vector<1xf32> to vector<1x1xf32>
      %299 = vector.broadcast %298 : vector<1x1xf32> to vector<5x1xf32>
      %300 = arith.addf %296, %299 : vector<5x1xf32>
      %cst_109 = arith.constant 6.400000e+01 : f32
      %301 = vector.broadcast %cst_109 : f32 to vector<5x1xf32>
      %302 = arith.divf %300, %301 : vector<5x1xf32>
      %303 = vector.broadcast %302 : vector<5x1xf32> to vector<5x32xf32>
      %304 = arith.subf %289, %303 : vector<5x32xf32>
      %305 = vector.broadcast %294 : vector<1x32xf32> to vector<5x32xf32>
      %306 = vector.broadcast %302 : vector<5x1xf32> to vector<5x32xf32>
      %307 = arith.subf %305, %306 : vector<5x32xf32>
      %308 = arith.mulf %304, %304 : vector<5x32xf32>
      %cst_110 = arith.constant dense<0.000000e+00> : vector<5xf32>
      %309 = vector.multi_reduction <add>, %308, %cst_110 [1] : vector<5x32xf32> to vector<5xf32>
      %310 = vector.shape_cast %309 : vector<5xf32> to vector<5x1xf32>
      %311 = arith.mulf %307, %307 : vector<5x32xf32>
      %cst_111 = arith.constant dense<0.000000e+00> : vector<5xf32>
      %312 = vector.multi_reduction <add>, %311, %cst_111 [1] : vector<5x32xf32> to vector<5xf32>
      %313 = vector.shape_cast %312 : vector<5xf32> to vector<5x1xf32>
      %314 = arith.addf %310, %313 : vector<5x1xf32>
      %cst_112 = arith.constant 6.400000e+01 : f32
      %315 = vector.broadcast %cst_112 : f32 to vector<5x1xf32>
      %316 = arith.divf %314, %315 : vector<5x1xf32>
      %cst_113 = arith.constant 9.99999974E-6 : f32
      %317 = vector.broadcast %cst_113 : f32 to vector<5x1xf32>
      %318 = arith.addf %316, %317 : vector<5x1xf32>
      %319 = math.rsqrt %318 : vector<5x1xf32>
      %320 = vector.broadcast %319 : vector<5x1xf32> to vector<5x32xf32>
      %321 = arith.mulf %304, %320 : vector<5x32xf32>
      %322 = vector.broadcast %273 : vector<1x32xf32> to vector<5x32xf32>
      %323 = arith.mulf %321, %322 : vector<5x32xf32>
      %324 = vector.broadcast %275 : vector<1x32xf32> to vector<5x32xf32>
      %325 = arith.addf %323, %324 : vector<5x32xf32>
      %326 = vector.broadcast %319 : vector<5x1xf32> to vector<5x32xf32>
      %327 = arith.mulf %307, %326 : vector<5x32xf32>
      %328 = vector.broadcast %274 : vector<1x32xf32> to vector<5x32xf32>
      %329 = arith.mulf %327, %328 : vector<5x32xf32>
      %330 = vector.broadcast %276 : vector<1x32xf32> to vector<5x32xf32>
      %331 = arith.addf %329, %330 : vector<5x32xf32>
      %332 = arith.truncf %325 : vector<5x32xf32> to vector<5x32xbf16>
      %cst_114 = arith.constant dense<0.000000e+00> : vector<5x32xf32>
      %333 = tpu.matmul %332, %278, %cst_114 {dimension_numbers = #tpu.dot_dimension_numbers<[1], [0], [0], [1], [0, 0, 1, 1], [], []>} : vector<5x32xbf16>, vector<32x32xbf16>, vector<5x32xf32> -> vector<5x32xf32>
      %334 = arith.truncf %331 : vector<5x32xf32> to vector<5x32xbf16>
      %cst_115 = arith.constant dense<0.000000e+00> : vector<5x32xf32>
      %335 = tpu.matmul %334, %280, %cst_115 {dimension_numbers = #tpu.dot_dimension_numbers<[1], [0], [0], [1], [0, 0, 1, 1], [], []>} : vector<5x32xbf16>, vector<32x32xbf16>, vector<5x32xf32> -> vector<5x32xf32>
      %336 = arith.addf %333, %335 : vector<5x32xf32>
      %337 = vector.broadcast %282 : vector<1x32xf32> to vector<5x32xf32>
      %338 = arith.addf %336, %337 : vector<5x32xf32>
      %cst_116 = arith.constant 5.000000e-01 : f32
      %339 = vector.broadcast %cst_116 : f32 to vector<5x32xf32>
      %340 = arith.mulf %339, %338 : vector<5x32xf32>
      %cst_117 = arith.constant 0.707106769 : f32
      %341 = vector.broadcast %cst_117 : f32 to vector<5x32xf32>
      %342 = arith.mulf %338, %341 : vector<5x32xf32>
      %cst_118 = arith.constant 0.000000e+00 : f32
      %343 = vector.broadcast %cst_118 : f32 to vector<5x32xf32>
      %344 = arith.cmpf oge, %342, %343 : vector<5x32xf32>
      %cst_119 = arith.constant 1.000000e+00 : f32
      %cst_120 = arith.constant -1.000000e+00 : f32
      %345 = vector.broadcast %cst_119 : f32 to vector<5x32xf32>
      %346 = vector.broadcast %cst_120 : f32 to vector<5x32xf32>
      %347 = arith.select %344, %345, %346 : vector<5x32xi1>, vector<5x32xf32>
      %348 = math.absf %342 : vector<5x32xf32>
      %cst_121 = arith.constant 0.327591091 : f32
      %349 = vector.broadcast %cst_121 : f32 to vector<5x32xf32>
      %350 = arith.mulf %349, %348 : vector<5x32xf32>
      %cst_122 = arith.constant 1.000000e+00 : f32
      %351 = vector.broadcast %cst_122 : f32 to vector<5x32xf32>
      %352 = arith.addf %351, %350 : vector<5x32xf32>
      %cst_123 = arith.constant 1.000000e+00 : f32
      %353 = vector.broadcast %cst_123 : f32 to vector<5x32xf32>
      %354 = arith.divf %353, %352 : vector<5x32xf32>
      %cst_124 = arith.constant 1.06140542 : f32
      %355 = vector.broadcast %cst_124 : f32 to vector<5x32xf32>
      %356 = arith.mulf %355, %354 : vector<5x32xf32>
      %cst_125 = arith.constant -1.45315206 : f32
      %357 = vector.broadcast %cst_125 : f32 to vector<5x32xf32>
      %358 = arith.addf %356, %357 : vector<5x32xf32>
      %359 = arith.mulf %358, %354 : vector<5x32xf32>
      %cst_126 = arith.constant 1.42141378 : f32
      %360 = vector.broadcast %cst_126 : f32 to vector<5x32xf32>
      %361 = arith.addf %359, %360 : vector<5x32xf32>
      %362 = arith.mulf %361, %354 : vector<5x32xf32>
      %cst_127 = arith.constant -0.284496725 : f32
      %363 = vector.broadcast %cst_127 : f32 to vector<5x32xf32>
      %364 = arith.addf %362, %363 : vector<5x32xf32>
      %365 = arith.mulf %364, %354 : vector<5x32xf32>
      %cst_128 = arith.constant 0.254829586 : f32
      %366 = vector.broadcast %cst_128 : f32 to vector<5x32xf32>
      %367 = arith.addf %365, %366 : vector<5x32xf32>
      %368 = arith.mulf %367, %354 : vector<5x32xf32>
      %cst_129 = arith.constant 0.000000e+00 : f32
      %369 = vector.broadcast %cst_129 : f32 to vector<5x32xf32>
      %370 = arith.subf %369, %348 : vector<5x32xf32>
      %371 = arith.mulf %370, %348 : vector<5x32xf32>
      %372 = math.exp %371 : vector<5x32xf32>
      %373 = arith.mulf %368, %372 : vector<5x32xf32>
      %cst_130 = arith.constant 1.000000e+00 : f32
      %374 = vector.broadcast %cst_130 : f32 to vector<5x32xf32>
      %375 = arith.subf %374, %373 : vector<5x32xf32>
      %376 = arith.mulf %347, %375 : vector<5x32xf32>
      %cst_131 = arith.constant 1.000000e+00 : f32
      %377 = vector.broadcast %cst_131 : f32 to vector<5x32xf32>
      %378 = arith.addf %377, %376 : vector<5x32xf32>
      %379 = arith.mulf %340, %378 : vector<5x32xf32>
      %380 = arith.truncf %379 : vector<5x32xf32> to vector<5x32xbf16>
      %cst_132 = arith.constant dense<0.000000e+00> : vector<5x32xf32>
      %381 = tpu.matmul %380, %284, %cst_132 {dimension_numbers = #tpu.dot_dimension_numbers<[1], [0], [0], [1], [0, 0, 1, 1], [], []>} : vector<5x32xbf16>, vector<32x32xbf16>, vector<5x32xf32> -> vector<5x32xf32>
      %382 = vector.broadcast %286 : vector<1x32xf32> to vector<5x32xf32>
      %383 = arith.addf %381, %382 : vector<5x32xf32>
      %c0_133 = arith.constant 0 : index
      %c0_134 = arith.constant 0 : index
      %c0_135 = arith.constant 0 : index
      %384 = vector.load %arg19[%c0_133, %c0_134, %c0_135] : memref<2x16x32xf32, #tpu.memory_space<vmem>>, vector<1x5x32xf32>
      %385 = vector.shape_cast %384 : vector<1x5x32xf32> to vector<5x32xf32>
      %386 = vector.shape_cast %383 : vector<5x32xf32> to vector<1x5x32xf32>
      tpu.vector_store %arg19[%c0_133, %c0_134, %c0_135], %386 {strides = array<i32>} : memref<2x16x32xf32, #tpu.memory_space<vmem>>, vector<1x5x32xf32>,
      %387 = vector.extract_strided_slice %266 {offsets = [1, 0, 0], sizes = [1, 16, 32], strides = [1, 1, 1]} : vector<2x16x32xf32> to vector<1x16x32xf32>
      %388 = vector.shape_cast %387 : vector<1x16x32xf32> to vector<16x32xf32>
      %389 = vector.extract_strided_slice %388 {offsets = [0, 0], sizes = [5, 32], strides = [1, 1]} : vector<16x32xf32> to vector<5x32xf32>
      %390 = vector.extract_strided_slice %388 {offsets = [5, 0], sizes = [8, 32], strides = [1, 1]} : vector<16x32xf32> to vector<8x32xf32>
      %cst_136 = arith.constant dense<0.000000e+00> : vector<32xf32>
      %391 = vector.multi_reduction <add>, %390, %cst_136 [0] : vector<8x32xf32> to vector<32xf32>
      %392 = vector.shape_cast %391 : vector<32xf32> to vector<1x32xf32>
      %cst_137 = arith.constant 1.250000e-01 : f32
      %393 = vector.broadcast %cst_137 : f32 to vector<1x32xf32>
      %394 = arith.mulf %392, %393 : vector<1x32xf32>
      %cst_138 = arith.constant dense<0.000000e+00> : vector<5xf32>
      %395 = vector.multi_reduction <add>, %389, %cst_138 [1] : vector<5x32xf32> to vector<5xf32>
      %396 = vector.shape_cast %395 : vector<5xf32> to vector<5x1xf32>
      %cst_139 = arith.constant dense<0.000000e+00> : vector<1xf32>
      %397 = vector.multi_reduction <add>, %394, %cst_139 [1] : vector<1x32xf32> to vector<1xf32>
      %398 = vector.shape_cast %397 : vector<1xf32> to vector<1x1xf32>
      %399 = vector.broadcast %398 : vector<1x1xf32> to vector<5x1xf32>
      %400 = arith.addf %396, %399 : vector<5x1xf32>
      %cst_140 = arith.constant 6.400000e+01 : f32
      %401 = vector.broadcast %cst_140 : f32 to vector<5x1xf32>
      %402 = arith.divf %400, %401 : vector<5x1xf32>
      %403 = vector.broadcast %402 : vector<5x1xf32> to vector<5x32xf32>
      %404 = arith.subf %389, %403 : vector<5x32xf32>
      %405 = vector.broadcast %394 : vector<1x32xf32> to vector<5x32xf32>
      %406 = vector.broadcast %402 : vector<5x1xf32> to vector<5x32xf32>
      %407 = arith.subf %405, %406 : vector<5x32xf32>
      %408 = arith.mulf %404, %404 : vector<5x32xf32>
      %cst_141 = arith.constant dense<0.000000e+00> : vector<5xf32>
      %409 = vector.multi_reduction <add>, %408, %cst_141 [1] : vector<5x32xf32> to vector<5xf32>
      %410 = vector.shape_cast %409 : vector<5xf32> to vector<5x1xf32>
      %411 = arith.mulf %407, %407 : vector<5x32xf32>
      %cst_142 = arith.constant dense<0.000000e+00> : vector<5xf32>
      %412 = vector.multi_reduction <add>, %411, %cst_142 [1] : vector<5x32xf32> to vector<5xf32>
      %413 = vector.shape_cast %412 : vector<5xf32> to vector<5x1xf32>
      %414 = arith.addf %410, %413 : vector<5x1xf32>
      %cst_143 = arith.constant 6.400000e+01 : f32
      %415 = vector.broadcast %cst_143 : f32 to vector<5x1xf32>
      %416 = arith.divf %414, %415 : vector<5x1xf32>
      %cst_144 = arith.constant 9.99999974E-6 : f32
      %417 = vector.broadcast %cst_144 : f32 to vector<5x1xf32>
      %418 = arith.addf %416, %417 : vector<5x1xf32>
      %419 = math.rsqrt %418 : vector<5x1xf32>
      %420 = vector.broadcast %419 : vector<5x1xf32> to vector<5x32xf32>
      %421 = arith.mulf %404, %420 : vector<5x32xf32>
      %422 = vector.broadcast %273 : vector<1x32xf32> to vector<5x32xf32>
      %423 = arith.mulf %421, %422 : vector<5x32xf32>
      %424 = vector.broadcast %275 : vector<1x32xf32> to vector<5x32xf32>
      %425 = arith.addf %423, %424 : vector<5x32xf32>
      %426 = vector.broadcast %419 : vector<5x1xf32> to vector<5x32xf32>
      %427 = arith.mulf %407, %426 : vector<5x32xf32>
      %428 = vector.broadcast %274 : vector<1x32xf32> to vector<5x32xf32>
      %429 = arith.mulf %427, %428 : vector<5x32xf32>
      %430 = vector.broadcast %276 : vector<1x32xf32> to vector<5x32xf32>
      %431 = arith.addf %429, %430 : vector<5x32xf32>
      %432 = arith.truncf %425 : vector<5x32xf32> to vector<5x32xbf16>
      %cst_145 = arith.constant dense<0.000000e+00> : vector<5x32xf32>
      %433 = tpu.matmul %432, %278, %cst_145 {dimension_numbers = #tpu.dot_dimension_numbers<[1], [0], [0], [1], [0, 0, 1, 1], [], []>} : vector<5x32xbf16>, vector<32x32xbf16>, vector<5x32xf32> -> vector<5x32xf32>
      %434 = arith.truncf %431 : vector<5x32xf32> to vector<5x32xbf16>
      %cst_146 = arith.constant dense<0.000000e+00> : vector<5x32xf32>
      %435 = tpu.matmul %434, %280, %cst_146 {dimension_numbers = #tpu.dot_dimension_numbers<[1], [0], [0], [1], [0, 0, 1, 1], [], []>} : vector<5x32xbf16>, vector<32x32xbf16>, vector<5x32xf32> -> vector<5x32xf32>
      %436 = arith.addf %433, %435 : vector<5x32xf32>
      %437 = vector.broadcast %282 : vector<1x32xf32> to vector<5x32xf32>
      %438 = arith.addf %436, %437 : vector<5x32xf32>
      %cst_147 = arith.constant 5.000000e-01 : f32
      %439 = vector.broadcast %cst_147 : f32 to vector<5x32xf32>
      %440 = arith.mulf %439, %438 : vector<5x32xf32>
      %cst_148 = arith.constant 0.707106769 : f32
      %441 = vector.broadcast %cst_148 : f32 to vector<5x32xf32>
      %442 = arith.mulf %438, %441 : vector<5x32xf32>
      %cst_149 = arith.constant 0.000000e+00 : f32
      %443 = vector.broadcast %cst_149 : f32 to vector<5x32xf32>
      %444 = arith.cmpf oge, %442, %443 : vector<5x32xf32>
      %cst_150 = arith.constant 1.000000e+00 : f32
      %cst_151 = arith.constant -1.000000e+00 : f32
      %445 = vector.broadcast %cst_150 : f32 to vector<5x32xf32>
      %446 = vector.broadcast %cst_151 : f32 to vector<5x32xf32>
      %447 = arith.select %444, %445, %446 : vector<5x32xi1>, vector<5x32xf32>
      %448 = math.absf %442 : vector<5x32xf32>
      %cst_152 = arith.constant 0.327591091 : f32
      %449 = vector.broadcast %cst_152 : f32 to vector<5x32xf32>
      %450 = arith.mulf %449, %448 : vector<5x32xf32>
      %cst_153 = arith.constant 1.000000e+00 : f32
      %451 = vector.broadcast %cst_153 : f32 to vector<5x32xf32>
      %452 = arith.addf %451, %450 : vector<5x32xf32>
      %cst_154 = arith.constant 1.000000e+00 : f32
      %453 = vector.broadcast %cst_154 : f32 to vector<5x32xf32>
      %454 = arith.divf %453, %452 : vector<5x32xf32>
      %cst_155 = arith.constant 1.06140542 : f32
      %455 = vector.broadcast %cst_155 : f32 to vector<5x32xf32>
      %456 = arith.mulf %455, %454 : vector<5x32xf32>
      %cst_156 = arith.constant -1.45315206 : f32
      %457 = vector.broadcast %cst_156 : f32 to vector<5x32xf32>
      %458 = arith.addf %456, %457 : vector<5x32xf32>
      %459 = arith.mulf %458, %454 : vector<5x32xf32>
      %cst_157 = arith.constant 1.42141378 : f32
      %460 = vector.broadcast %cst_157 : f32 to vector<5x32xf32>
      %461 = arith.addf %459, %460 : vector<5x32xf32>
      %462 = arith.mulf %461, %454 : vector<5x32xf32>
      %cst_158 = arith.constant -0.284496725 : f32
      %463 = vector.broadcast %cst_158 : f32 to vector<5x32xf32>
      %464 = arith.addf %462, %463 : vector<5x32xf32>
      %465 = arith.mulf %464, %454 : vector<5x32xf32>
      %cst_159 = arith.constant 0.254829586 : f32
      %466 = vector.broadcast %cst_159 : f32 to vector<5x32xf32>
      %467 = arith.addf %465, %466 : vector<5x32xf32>
      %468 = arith.mulf %467, %454 : vector<5x32xf32>
      %cst_160 = arith.constant 0.000000e+00 : f32
      %469 = vector.broadcast %cst_160 : f32 to vector<5x32xf32>
      %470 = arith.subf %469, %448 : vector<5x32xf32>
      %471 = arith.mulf %470, %448 : vector<5x32xf32>
      %472 = math.exp %471 : vector<5x32xf32>
      %473 = arith.mulf %468, %472 : vector<5x32xf32>
      %cst_161 = arith.constant 1.000000e+00 : f32
      %474 = vector.broadcast %cst_161 : f32 to vector<5x32xf32>
      %475 = arith.subf %474, %473 : vector<5x32xf32>
      %476 = arith.mulf %447, %475 : vector<5x32xf32>
      %cst_162 = arith.constant 1.000000e+00 : f32
      %477 = vector.broadcast %cst_162 : f32 to vector<5x32xf32>
      %478 = arith.addf %477, %476 : vector<5x32xf32>
      %479 = arith.mulf %440, %478 : vector<5x32xf32>
      %480 = arith.truncf %479 : vector<5x32xf32> to vector<5x32xbf16>
      %cst_163 = arith.constant dense<0.000000e+00> : vector<5x32xf32>
      %481 = tpu.matmul %480, %284, %cst_163 {dimension_numbers = #tpu.dot_dimension_numbers<[1], [0], [0], [1], [0, 0, 1, 1], [], []>} : vector<5x32xbf16>, vector<32x32xbf16>, vector<5x32xf32> -> vector<5x32xf32>
      %482 = vector.broadcast %286 : vector<1x32xf32> to vector<5x32xf32>
      %483 = arith.addf %481, %482 : vector<5x32xf32>
      %c1 = arith.constant 1 : index
      %c0_164 = arith.constant 0 : index
      %c0_165 = arith.constant 0 : index
      %484 = vector.load %arg19[%c1, %c0_164, %c0_165] : memref<2x16x32xf32, #tpu.memory_space<vmem>>, vector<1x5x32xf32>
      %485 = vector.shape_cast %484 : vector<1x5x32xf32> to vector<5x32xf32>
      %486 = vector.shape_cast %483 : vector<5x32xf32> to vector<1x5x32xf32>
      tpu.vector_store %arg19[%c1, %c0_164, %c0_165], %486 {strides = array<i32>} : memref<2x16x32xf32, #tpu.memory_space<vmem>>, vector<1x5x32xf32>,
    } else {
    }
    return
  }
  func.func @transform_0(%arg0: i32, %arg1: i32) -> (i32, i32, i32) {
    %c0_i32 = arith.constant 0 : i32
    %c0_i32_0 = arith.constant 0 : i32
    %c0_i32_1 = arith.constant 0 : i32
    return %arg0, %c0_i32, %c0_i32_0 : i32, i32, i32
  }
  func.func @transform_1(%arg0: i32, %arg1: i32) -> (i32, i32, i32) {
    %c0_i32 = arith.constant 0 : i32
    %c0_i32_0 = arith.constant 0 : i32
    %c0_i32_1 = arith.constant 0 : i32
    return %arg0, %c0_i32, %c0_i32_0 : i32, i32, i32
  }
  func.func @transform_2(%arg0: i32, %arg1: i32) -> (i32, i32, i32) {
    %c0_i32 = arith.constant 0 : i32
    %c0_i32_0 = arith.constant 0 : i32
    %c0_i32_1 = arith.constant 0 : i32
    return %arg1, %c0_i32, %c0_i32_0 : i32, i32, i32
  }
  func.func @transform_3(%arg0: i32, %arg1: i32) -> (i32, i32, i32) {
    %c0_i32 = arith.constant 0 : i32
    %c0_i32_0 = arith.constant 0 : i32
    %c0_i32_1 = arith.constant 0 : i32
    return %arg1, %c0_i32, %c0_i32_0 : i32, i32, i32
  }
  func.func @transform_4(%arg0: i32, %arg1: i32) -> (i32, i32, i32) {
    %c0_i32 = arith.constant 0 : i32
    %c0_i32_0 = arith.constant 0 : i32
    %c0_i32_1 = arith.constant 0 : i32
    return %arg1, %c0_i32, %c0_i32_0 : i32, i32, i32
  }
  func.func @transform_5(%arg0: i32, %arg1: i32) -> (i32, i32, i32) {
    %c0_i32 = arith.constant 0 : i32
    %c0_i32_0 = arith.constant 0 : i32
    %c0_i32_1 = arith.constant 0 : i32
    return %arg1, %c0_i32, %c0_i32_0 : i32, i32, i32
  }
  func.func @transform_6(%arg0: i32, %arg1: i32) -> (i32, i32, i32) {
    %c0_i32 = arith.constant 0 : i32
    %c0_i32_0 = arith.constant 0 : i32
    %c0_i32_1 = arith.constant 0 : i32
    return %arg1, %c0_i32, %c0_i32_0 : i32, i32, i32
  }
  func.func @transform_7(%arg0: i32, %arg1: i32) -> (i32, i32, i32) {
    %c0_i32 = arith.constant 0 : i32
    %c0_i32_0 = arith.constant 0 : i32
    %c0_i32_1 = arith.constant 0 : i32
    return %arg1, %c0_i32, %c0_i32_0 : i32, i32, i32
  }
  func.func @transform_8(%arg0: i32, %arg1: i32) -> (i32, i32, i32) {
    %c0_i32 = arith.constant 0 : i32
    %c0_i32_0 = arith.constant 0 : i32
    %c0_i32_1 = arith.constant 0 : i32
    return %arg1, %c0_i32, %c0_i32_0 : i32, i32, i32
  }
  func.func @transform_9(%arg0: i32, %arg1: i32) -> (i32, i32, i32) {
    %c0_i32 = arith.constant 0 : i32
    %c0_i32_0 = arith.constant 0 : i32
    %c0_i32_1 = arith.constant 0 : i32
    return %arg1, %c0_i32, %c0_i32_0 : i32, i32, i32
  }
  func.func @transform_10(%arg0: i32, %arg1: i32) -> (i32, i32, i32) {
    %c0_i32 = arith.constant 0 : i32
    %c0_i32_0 = arith.constant 0 : i32
    %c0_i32_1 = arith.constant 0 : i32
    return %arg1, %c0_i32, %c0_i32_0 : i32, i32, i32
  }
  func.func @transform_11(%arg0: i32, %arg1: i32) -> (i32, i32, i32) {
    %c1_i32 = arith.constant 1 : i32
    %0 = arith.minsi %arg1, %c1_i32 : i32
    %c0_i32 = arith.constant 0 : i32
    %c0_i32_0 = arith.constant 0 : i32
    %c0_i32_1 = arith.constant 0 : i32
    return %0, %c0_i32, %c0_i32_0 : i32, i32, i32
  }
  func.func @transform_12(%arg0: i32, %arg1: i32) -> (i32, i32, i32) {
    %c1_i32 = arith.constant 1 : i32
    %0 = arith.minsi %arg1, %c1_i32 : i32
    %c0_i32 = arith.constant 0 : i32
    %c0_i32_0 = arith.constant 0 : i32
    %c0_i32_1 = arith.constant 0 : i32
    return %0, %c0_i32, %c0_i32_0 : i32, i32, i32
  }
  func.func @transform_13(%arg0: i32, %arg1: i32) -> (i32, i32, i32) {
    %c1_i32 = arith.constant 1 : i32
    %0 = arith.minsi %arg1, %c1_i32 : i32
    %c0_i32 = arith.constant 0 : i32
    %c0_i32_0 = arith.constant 0 : i32
    %c0_i32_1 = arith.constant 0 : i32
    return %0, %c0_i32, %c0_i32_0 : i32, i32, i32
  }
  func.func @transform_14(%arg0: i32, %arg1: i32) -> (i32, i32, i32) {
    %c1_i32 = arith.constant 1 : i32
    %0 = arith.minsi %arg1, %c1_i32 : i32
    %c0_i32 = arith.constant 0 : i32
    %c0_i32_0 = arith.constant 0 : i32
    %c0_i32_1 = arith.constant 0 : i32
    return %0, %c0_i32, %c0_i32_0 : i32, i32, i32
  }
  func.func @transform_15(%arg0: i32, %arg1: i32) -> (i32, i32, i32) {
    %c1_i32 = arith.constant 1 : i32
    %0 = arith.minsi %arg1, %c1_i32 : i32
    %c0_i32 = arith.constant 0 : i32
    %c0_i32_0 = arith.constant 0 : i32
    %c0_i32_1 = arith.constant 0 : i32
    return %0, %c0_i32, %c0_i32_0 : i32, i32, i32
  }
  func.func @transform_16(%arg0: i32, %arg1: i32) -> (i32, i32, i32) {
    %c1_i32 = arith.constant 1 : i32
    %0 = arith.minsi %arg1, %c1_i32 : i32
    %c0_i32 = arith.constant 0 : i32
    %c0_i32_0 = arith.constant 0 : i32
    %c0_i32_1 = arith.constant 0 : i32
    return %0, %c0_i32, %c0_i32_0 : i32, i32, i32
  }
  func.func @transform_17(%arg0: i32, %arg1: i32) -> (i32, i32, i32) {
    %c0_i32 = arith.constant 0 : i32
    %c0_i32_0 = arith.constant 0 : i32
    %c0_i32_1 = arith.constant 0 : i32
    return %arg0, %c0_i32, %c0_i32_0 : i32, i32, i32
  }
}

</mosaic_0001>

<llo_original>
// kernel: clip_text_prompt_encoder_forward.1
$region0: #{clip_text_prompt_encoder_forward.1}
  #allocation0 [shape = 'u32[]', space=smem, size = 0x4, offset = 0x4, fixed_abs, tag = 'smem constant byte address 0x4 - core index']
  #allocation1 [shape = 'u32[144,128]{1,0:T(1,128)}', space=vmem, size = 0x12000, scoped, tag = 'internal scratch']
  %s0 = inlined_call_operand.vmem [shape: f32[2,16,32], index: 0, kind: input, shape index: {}]
  %s1 = inlined_call_operand.vmem [shape: f32[2,2,16], index: 1, kind: input, shape index: {}]
  %s2 = inlined_call_operand.vmem [shape: f32[4,4,32], index: 2, kind: input, shape index: {}]
  %s3 = inlined_call_operand.vmem [shape: bf16[4,32,96], index: 3, kind: input, shape index: {}]
  %s4 = inlined_call_operand.vmem [shape: f32[4,1,96], index: 4, kind: input, shape index: {}]
  %s5 = inlined_call_operand.vmem [shape: bf16[4,32,32], index: 5, kind: input, shape index: {}]
  %s6 = inlined_call_operand.vmem [shape: f32[4,1,32], index: 6, kind: input, shape index: {}]
  %s7 = inlined_call_operand.vmem [shape: bf16[4,32,128], index: 7, kind: input, shape index: {}]
  %s8 = inlined_call_operand.vmem [shape: f32[4,1,128], index: 8, kind: input, shape index: {}]
  %s9 = inlined_call_operand.vmem [shape: bf16[4,128,32], index: 9, kind: input, shape index: {}]
  %s10 = inlined_call_operand.vmem [shape: f32[4,1,32], index: 10, kind: input, shape index: {}]
  %s11 = inlined_call_operand.vmem [shape: f32[2,4,32], index: 11, kind: input, shape index: {}]
  %s12 = inlined_call_operand.vmem [shape: bf16[2,32,32], index: 12, kind: input, shape index: {}]
  %s13 = inlined_call_operand.vmem [shape: bf16[2,32,32], index: 13, kind: input, shape index: {}]
  %s14 = inlined_call_operand.vmem [shape: f32[2,1,32], index: 14, kind: input, shape index: {}]
  %s15 = inlined_call_operand.vmem [shape: bf16[2,32,32], index: 15, kind: input, shape index: {}]
  %s16 = inlined_call_operand.vmem [shape: f32[2,1,32], index: 16, kind: input, shape index: {}]
  %s17 = inlined_call_operand.vmem [shape: f32[2,16,32], index: 17, kind: output, shape index: {}]
  %s18 = sld [smem:[#allocation0]]
  $region109: #{clip_text_prompt_encoder_forward.1} parent=0
    _
  %s20 = ssub.s32 1, %s18
  %s21 = scalar_select 0, %s20, %s18
  loop: start=0, step=1, limit=6
  $region2: #{clip_text_prompt_encoder_forward.1} parent=0 // loop_pre_header
    _
  $region3: #{clip_text_prompt_encoder_forward.1} parent=0 // loop_header
    %s23 = sphi 0, %s27
    %p24 = scmp.ge.s32.totalorder %s23, 6
    %s30 = sphi 0, %s42
    %s31 = sphi 0, %s38
    %s32 = sphi 0, %s30
    %s33 = sphi 0, %s31
    %s34 = sphi 0, %s32
    %s35 = sphi 0, %s33
    %s45 = sphi 0, %s47
    %s48 = sphi 0, %s45
    %s49 = sphi 0, %s48
    %s65 = sphi 0, %s49
    %s71 = sphi 0, %s73
    %s74 = sphi 0, %s71
    %s75 = sphi 0, %s74
    %s91 = sphi 0, %s75
    %s97 = sphi 0, %s99
    %s100 = sphi 0, %s97
    %s101 = sphi 0, %s100
    %s117 = sphi 0, %s101
    %s123 = sphi 0, %s125
    %s126 = sphi 0, %s123
    %s127 = sphi 0, %s126
    %s143 = sphi 0, %s127
    %s149 = sphi 0, %s151
    %s152 = sphi 0, %s149
    %s153 = sphi 0, %s152
    %s169 = sphi 0, %s153
    %s175 = sphi 0, %s177
    %s178 = sphi 0, %s175
    %s179 = sphi 0, %s178
    %s195 = sphi 0, %s179
    %s201 = sphi 0, %s203
    %s204 = sphi 0, %s201
    %s205 = sphi 0, %s204
    %s221 = sphi 0, %s205
    %s227 = sphi 0, %s229
    %s230 = sphi 0, %s227
    %s231 = sphi 0, %s230
    %s247 = sphi 0, %s231
    %s253 = sphi 0, %s255
    %s256 = sphi 0, %s253
    %s257 = sphi 0, %s256
    %s273 = sphi 0, %s257
    %s279 = sphi 0, %s281
    %s282 = sphi 0, %s279
    %s283 = sphi 0, %s282
    %s299 = sphi 0, %s283
    %s305 = sphi 0, %s307
    %s308 = sphi 0, %s305
    %s309 = sphi 0, %s308
    %s325 = sphi 0, %s309
    %s335 = sphi 0, %s337
    %s338 = sphi 0, %s335
    %s339 = sphi 0, %s338
    %s355 = sphi 0, %s339
    %s365 = sphi 0, %s367
    %s368 = sphi 0, %s365
    %s369 = sphi 0, %s368
    %s385 = sphi 0, %s369
    %s395 = sphi 0, %s397
    %s398 = sphi 0, %s395
    %s399 = sphi 0, %s398
    %s415 = sphi 0, %s399
    %s425 = sphi 0, %s427
    %s428 = sphi 0, %s425
    %s429 = sphi 0, %s428
    %s445 = sphi 0, %s429
    %s455 = sphi 0, %s457
    %s458 = sphi 0, %s455
    %s459 = sphi 0, %s458
    %s475 = sphi 0, %s459
    %s485 = sphi 0, %s487
    %s488 = sphi 0, %s485
    %s489 = sphi 0, %s488
    %s505 = sphi 0, %s489
    %s511 = sphi 0, %s513
    %s514 = sphi 0, %s511
    %s515 = sphi 0, %s514
    %s531 = sphi 0, %s515
  $region4: #{clip_text_prompt_encoder_forward.1} parent=0 // loop_header_branch
    %26 = sbr.rel (%p24) target = $region8
  $region5: #{clip_text_prompt_encoder_forward.1} parent=0 // loop_body
    %s28 = ssub.s32 %s23, 1
    %s29 = ssub.s32 %s23, 2
    %s36 = sadd.s32 1, %s31
    %p37 = scmp.ge.s32.totalorder %s36, 4
    %s38 = scalar_select %p37, 0, %s36
    %s39 = sadd.s32 1, %s30
    %s40 = scalar_select %p37, %s39, %s30
    %p41 = scmp.ge.s32.totalorder %s40, 1
    %s42 = scalar_select %p41, 0, %s40
    %s43 = ssub.s32 %s30, %s42
    %p44 = scmp.eq.s32.totalorder %s43, 0
    %s46 = sadd.s32 %s45, 1
    %s47 = scalar_select %p44, %s45, %s46
    %p50 = pneg %p44
    %p51 = scmp.eq.s32.totalorder %s23, 3
    %p52 = por %p50, %p51
    %p53 = scmp.ne.s32.totalorder %s45, %s48
    %p54 = scmp.eq.s32.totalorder %s23, 0
    %p55 = por %p53, %p54
    %p56 = scmp.ne.s32.totalorder %s45, %s48
    %p57 = scmp.eq.s32.totalorder %s28, 3
    %p58 = por %p56, %p57
    %p59 = scmp.ne.s32.totalorder %s48, %s49
    %p60 = scmp.eq.s32.totalorder %s28, 0
    %p61 = por %p59, %p60
    %p62 = scmp.ne.s32.totalorder %s48, %s49
    %p63 = scmp.eq.s32.totalorder %s29, 3
    %p64 = por %p62, %p63
    %p66 = scmp.ne.s32.totalorder %s49, %s65
    %p67 = scmp.eq.s32.totalorder %s29, 0
    %p68 = por %p66, %p67
    %s69 = ssub.s32 %s30, %s42
    %p70 = scmp.eq.s32.totalorder %s69, 0
    %s72 = sadd.s32 %s71, 1
    %s73 = scalar_select %p70, %s71, %s72
    %p76 = pneg %p70
    %p77 = scmp.eq.s32.totalorder %s23, 3
    %p78 = por %p76, %p77
    %p79 = scmp.ne.s32.totalorder %s71, %s74
    %p80 = scmp.eq.s32.totalorder %s23, 0
    %p81 = por %p79, %p80
    %p82 = scmp.ne.s32.totalorder %s71, %s74
    %p83 = scmp.eq.s32.totalorder %s28, 3
    %p84 = por %p82, %p83
    %p85 = scmp.ne.s32.totalorder %s74, %s75
    %p86 = scmp.eq.s32.totalorder %s28, 0
    %p87 = por %p85, %p86
    %p88 = scmp.ne.s32.totalorder %s74, %s75
    %p89 = scmp.eq.s32.totalorder %s29, 3
    %p90 = por %p88, %p89
    %p92 = scmp.ne.s32.totalorder %s75, %s91
    %p93 = scmp.eq.s32.totalorder %s29, 0
    %p94 = por %p92, %p93
    %s95 = ssub.s32 %s31, %s38
    %p96 = scmp.eq.s32.totalorder %s95, 0
    %s98 = sadd.s32 %s97, 1
    %s99 = scalar_select %p96, %s97, %s98
    %p102 = pneg %p96
    %p103 = scmp.eq.s32.totalorder %s23, 3
    %p104 = por %p102, %p103
    %p105 = scmp.ne.s32.totalorder %s97, %s100
    %p106 = scmp.eq.s32.totalorder %s23, 0
    %p107 = por %p105, %p106
    %p108 = scmp.ne.s32.totalorder %s97, %s100
    %p109 = scmp.eq.s32.totalorder %s28, 3
    %p110 = por %p108, %p109
    %p111 = scmp.ne.s32.totalorder %s100, %s101
    %p112 = scmp.eq.s32.totalorder %s28, 0
    %p113 = por %p111, %p112
    %p114 = scmp.ne.s32.totalorder %s100, %s101
    %p115 = scmp.eq.s32.totalorder %s29, 3
    %p116 = por %p114, %p115
    %p118 = scmp.ne.s32.totalorder %s101, %s117
    %p119 = scmp.eq.s32.totalorder %s29, 0
    %p120 = por %p118, %p119
    %s121 = ssub.s32 %s31, %s38
    %p122 = scmp.eq.s32.totalorder %s121, 0
    %s124 = sadd.s32 %s123, 1
    %s125 = scalar_select %p122, %s123, %s124
    %p128 = pneg %p122
    %p129 = scmp.eq.s32.totalorder %s23, 3
    %p130 = por %p128, %p129
    %p131 = scmp.ne.s32.totalorder %s123, %s126
    %p132 = scmp.eq.s32.totalorder %s23, 0
    %p133 = por %p131, %p132
    %p134 = scmp.ne.s32.totalorder %s123, %s126
    %p135 = scmp.eq.s32.totalorder %s28, 3
    %p136 = por %p134, %p135
    %p137 = scmp.ne.s32.totalorder %s126, %s127
    %p138 = scmp.eq.s32.totalorder %s28, 0
    %p139 = por %p137, %p138
    %p140 = scmp.ne.s32.totalorder %s126, %s127
    %p141 = scmp.eq.s32.totalorder %s29, 3
    %p142 = por %p140, %p141
    %p144 = scmp.ne.s32.totalorder %s127, %s143
    %p145 = scmp.eq.s32.totalorder %s29, 0
    %p146 = por %p144, %p145
    %s147 = ssub.s32 %s31, %s38
    %p148 = scmp.eq.s32.totalorder %s147, 0
    %s150 = sadd.s32 %s149, 1
    %s151 = scalar_select %p148, %s149, %s150
    %p154 = pneg %p148
    %p155 = scmp.eq.s32.totalorder %s23, 3
    %p156 = por %p154, %p155
    %p157 = scmp.ne.s32.totalorder %s149, %s152
    %p158 = scmp.eq.s32.totalorder %s23, 0
    %p159 = por %p157, %p158
    %p160 = scmp.ne.s32.totalorder %s149, %s152
    %p161 = scmp.eq.s32.totalorder %s28, 3
    %p162 = por %p160, %p161
    %p163 = scmp.ne.s32.totalorder %s152, %s153
    %p164 = scmp.eq.s32.totalorder %s28, 0
    %p165 = por %p163, %p164
    %p166 = scmp.ne.s32.totalorder %s152, %s153
    %p167 = scmp.eq.s32.totalorder %s29, 3
    %p168 = por %p166, %p167
    %p170 = scmp.ne.s32.totalorder %s153, %s169
    %p171 = scmp.eq.s32.totalorder %s29, 0
    %p172 = por %p170, %p171
    %s173 = ssub.s32 %s31, %s38
    %p174 = scmp.eq.s32.totalorder %s173, 0
    %s176 = sadd.s32 %s175, 1
    %s177 = scalar_select %p174, %s175, %s176
    %p180 = pneg %p174
    %p181 = scmp.eq.s32.totalorder %s23, 3
    %p182 = por %p180, %p181
    %p183 = scmp.ne.s32.totalorder %s175, %s178
    %p184 = scmp.eq.s32.totalorder %s23, 0
    %p185 = por %p183, %p184
    %p186 = scmp.ne.s32.totalorder %s175, %s178
    %p187 = scmp.eq.s32.totalorder %s28, 3
    %p188 = por %p186, %p187
    %p189 = scmp.ne.s32.totalorder %s178, %s179
    %p190 = scmp.eq.s32.totalorder %s28, 0
    %p191 = por %p189, %p190
    %p192 = scmp.ne.s32.totalorder %s178, %s179
    %p193 = scmp.eq.s32.totalorder %s29, 3
    %p194 = por %p192, %p193
    %p196 = scmp.ne.s32.totalorder %s179, %s195
    %p197 = scmp.eq.s32.totalorder %s29, 0
    %p198 = por %p196, %p197
    %s199 = ssub.s32 %s31, %s38
    %p200 = scmp.eq.s32.totalorder %s199, 0
    %s202 = sadd.s32 %s201, 1
    %s203 = scalar_select %p200, %s201, %s202
    %p206 = pneg %p200
    %p207 = scmp.eq.s32.totalorder %s23, 3
    %p208 = por %p206, %p207
    %p209 = scmp.ne.s32.totalorder %s201, %s204
    %p210 = scmp.eq.s32.totalorder %s23, 0
    %p211 = por %p209, %p210
    %p212 = scmp.ne.s32.totalorder %s201, %s204
    %p213 = scmp.eq.s32.totalorder %s28, 3
    %p214 = por %p212, %p213
    %p215 = scmp.ne.s32.totalorder %s204, %s205
    %p216 = scmp.eq.s32.totalorder %s28, 0
    %p217 = por %p215, %p216
    %p218 = scmp.ne.s32.totalorder %s204, %s205
    %p219 = scmp.eq.s32.totalorder %s29, 3
    %p220 = por %p218, %p219
    %p222 = scmp.ne.s32.totalorder %s205, %s221
    %p223 = scmp.eq.s32.totalorder %s29, 0
    %p224 = por %p222, %p223
    %s225 = ssub.s32 %s31, %s38
    %p226 = scmp.eq.s32.totalorder %s225, 0
    %s228 = sadd.s32 %s227, 1
    %s229 = scalar_select %p226, %s227, %s228
    %p232 = pneg %p226
    %p233 = scmp.eq.s32.totalorder %s23, 3
    %p234 = por %p232, %p233
    %p235 = scmp.ne.s32.totalorder %s227, %s230
    %p236 = scmp.eq.s32.totalorder %s23, 0
    %p237 = por %p235, %p236
    %p238 = scmp.ne.s32.totalorder %s227, %s230
    %p239 = scmp.eq.s32.totalorder %s28, 3
    %p240 = por %p238, %p239
    %p241 = scmp.ne.s32.totalorder %s230, %s231
    %p242 = scmp.eq.s32.totalorder %s28, 0
    %p243 = por %p241, %p242
    %p244 = scmp.ne.s32.totalorder %s230, %s231
    %p245 = scmp.eq.s32.totalorder %s29, 3
    %p246 = por %p244, %p245
    %p248 = scmp.ne.s32.totalorder %s231, %s247
    %p249 = scmp.eq.s32.totalorder %s29, 0
    %p250 = por %p248, %p249
    %s251 = ssub.s32 %s31, %s38
    %p252 = scmp.eq.s32.totalorder %s251, 0
    %s254 = sadd.s32 %s253, 1
    %s255 = scalar_select %p252, %s253, %s254
    %p258 = pneg %p252
    %p259 = scmp.eq.s32.totalorder %s23, 3
    %p260 = por %p258, %p259
    %p261 = scmp.ne.s32.totalorder %s253, %s256
    %p262 = scmp.eq.s32.totalorder %s23, 0
    %p263 = por %p261, %p262
    %p264 = scmp.ne.s32.totalorder %s253, %s256
    %p265 = scmp.eq.s32.totalorder %s28, 3
    %p266 = por %p264, %p265
    %p267 = scmp.ne.s32.totalorder %s256, %s257
    %p268 = scmp.eq.s32.totalorder %s28, 0
    %p269 = por %p267, %p268
    %p270 = scmp.ne.s32.totalorder %s256, %s257
    %p271 = scmp.eq.s32.totalorder %s29, 3
    %p272 = por %p270, %p271
    %p274 = scmp.ne.s32.totalorder %s257, %s273
    %p275 = scmp.eq.s32.totalorder %s29, 0
    %p276 = por %p274, %p275
    %s277 = ssub.s32 %s31, %s38
    %p278 = scmp.eq.s32.totalorder %s277, 0
    %s280 = sadd.s32 %s279, 1
    %s281 = scalar_select %p278, %s279, %s280
    %p284 = pneg %p278
    %p285 = scmp.eq.s32.totalorder %s23, 3
    %p286 = por %p284, %p285
    %p287 = scmp.ne.s32.totalorder %s279, %s282
    %p288 = scmp.eq.s32.totalorder %s23, 0
    %p289 = por %p287, %p288
    %p290 = scmp.ne.s32.totalorder %s279, %s282
    %p291 = scmp.eq.s32.totalorder %s28, 3
    %p292 = por %p290, %p291
    %p293 = scmp.ne.s32.totalorder %s282, %s283
    %p294 = scmp.eq.s32.totalorder %s28, 0
    %p295 = por %p293, %p294
    %p296 = scmp.ne.s32.totalorder %s282, %s283
    %p297 = scmp.eq.s32.totalorder %s29, 3
    %p298 = por %p296, %p297
    %p300 = scmp.ne.s32.totalorder %s283, %s299
    %p301 = scmp.eq.s32.totalorder %s29, 0
    %p302 = por %p300, %p301
    %s303 = ssub.s32 %s31, %s38
    %p304 = scmp.eq.s32.totalorder %s303, 0
    %s306 = sadd.s32 %s305, 1
    %s307 = scalar_select %p304, %s305, %s306
    %p310 = pneg %p304
    %p311 = scmp.eq.s32.totalorder %s23, 3
    %p312 = por %p310, %p311
    %p313 = scmp.ne.s32.totalorder %s305, %s308
    %p314 = scmp.eq.s32.totalorder %s23, 0
    %p315 = por %p313, %p314
    %p316 = scmp.ne.s32.totalorder %s305, %s308
    %p317 = scmp.eq.s32.totalorder %s28, 3
    %p318 = por %p316, %p317
    %p319 = scmp.ne.s32.totalorder %s308, %s309
    %p320 = scmp.eq.s32.totalorder %s28, 0
    %p321 = por %p319, %p320
    %p322 = scmp.ne.s32.totalorder %s308, %s309
    %p323 = scmp.eq.s32.totalorder %s29, 3
    %p324 = por %p322, %p323
    %p326 = scmp.ne.s32.totalorder %s309, %s325
    %p327 = scmp.eq.s32.totalorder %s29, 0
    %p328 = por %p326, %p327
    %p329 = scmp.lt.s32.totalorder %s31, 1
    %s330 = scalar_select %p329, %s31, 1
    %p331 = scmp.lt.s32.totalorder %s38, 1
    %s332 = scalar_select %p331, %s38, 1
    %s333 = ssub.s32 %s330, %s332
    %p334 = scmp.eq.s32.totalorder %s333, 0
    %s336 = sadd.s32 %s335, 1
    %s337 = scalar_select %p334, %s335, %s336
    %p340 = pneg %p334
    %p341 = scmp.eq.s32.totalorder %s23, 3
    %p342 = por %p340, %p341
    %p343 = scmp.ne.s32.totalorder %s335, %s338
    %p344 = scmp.eq.s32.totalorder %s23, 0
    %p345 = por %p343, %p344
    %p346 = scmp.ne.s32.totalorder %s335, %s338
    %p347 = scmp.eq.s32.totalorder %s28, 3
    %p348 = por %p346, %p347
    %p349 = scmp.ne.s32.totalorder %s338, %s339
    %p350 = scmp.eq.s32.totalorder %s28, 0
    %p351 = por %p349, %p350
    %p352 = scmp.ne.s32.totalorder %s338, %s339
    %p353 = scmp.eq.s32.totalorder %s29, 3
    %p354 = por %p352, %p353
    %p356 = scmp.ne.s32.totalorder %s339, %s355
    %p357 = scmp.eq.s32.totalorder %s29, 0
    %p358 = por %p356, %p357
    %p359 = scmp.lt.s32.totalorder %s31, 1
    %s360 = scalar_select %p359, %s31, 1
    %p361 = scmp.lt.s32.totalorder %s38, 1
    %s362 = scalar_select %p361, %s38, 1
    %s363 = ssub.s32 %s360, %s362
    %p364 = scmp.eq.s32.totalorder %s363, 0
    %s366 = sadd.s32 %s365, 1
    %s367 = scalar_select %p364, %s365, %s366
    %p370 = pneg %p364
    %p371 = scmp.eq.s32.totalorder %s23, 3
    %p372 = por %p370, %p371
    %p373 = scmp.ne.s32.totalorder %s365, %s368
    %p374 = scmp.eq.s32.totalorder %s23, 0
    %p375 = por %p373, %p374
    %p376 = scmp.ne.s32.totalorder %s365, %s368
    %p377 = scmp.eq.s32.totalorder %s28, 3
    %p378 = por %p376, %p377
    %p379 = scmp.ne.s32.totalorder %s368, %s369
    %p380 = scmp.eq.s32.totalorder %s28, 0
    %p381 = por %p379, %p380
    %p382 = scmp.ne.s32.totalorder %s368, %s369
    %p383 = scmp.eq.s32.totalorder %s29, 3
    %p384 = por %p382, %p383
    %p386 = scmp.ne.s32.totalorder %s369, %s385
    %p387 = scmp.eq.s32.totalorder %s29, 0
    %p388 = por %p386, %p387
    %p389 = scmp.lt.s32.totalorder %s31, 1
    %s390 = scalar_select %p389, %s31, 1
    %p391 = scmp.lt.s32.totalorder %s38, 1
    %s392 = scalar_select %p391, %s38, 1
    %s393 = ssub.s32 %s390, %s392
    %p394 = scmp.eq.s32.totalorder %s393, 0
    %s396 = sadd.s32 %s395, 1
    %s397 = scalar_select %p394, %s395, %s396
    %p400 = pneg %p394
    %p401 = scmp.eq.s32.totalorder %s23, 3
    %p402 = por %p400, %p401
    %p403 = scmp.ne.s32.totalorder %s395, %s398
    %p404 = scmp.eq.s32.totalorder %s23, 0
    %p405 = por %p403, %p404
    %p406 = scmp.ne.s32.totalorder %s395, %s398
    %p407 = scmp.eq.s32.totalorder %s28, 3
    %p408 = por %p406, %p407
    %p409 = scmp.ne.s32.totalorder %s398, %s399
    %p410 = scmp.eq.s32.totalorder %s28, 0
    %p411 = por %p409, %p410
    %p412 = scmp.ne.s32.totalorder %s398, %s399
    %p413 = scmp.eq.s32.totalorder %s29, 3
    %p414 = por %p412, %p413
    %p416 = scmp.ne.s32.totalorder %s399, %s415
    %p417 = scmp.eq.s32.totalorder %s29, 0
    %p418 = por %p416, %p417
    %p419 = scmp.lt.s32.totalorder %s31, 1
    %s420 = scalar_select %p419, %s31, 1
    %p421 = scmp.lt.s32.totalorder %s38, 1
    %s422 = scalar_select %p421, %s38, 1
    %s423 = ssub.s32 %s420, %s422
    %p424 = scmp.eq.s32.totalorder %s423, 0
    %s426 = sadd.s32 %s425, 1
    %s427 = scalar_select %p424, %s425, %s426
    %p430 = pneg %p424
    %p431 = scmp.eq.s32.totalorder %s23, 3
    %p432 = por %p430, %p431
    %p433 = scmp.ne.s32.totalorder %s425, %s428
    %p434 = scmp.eq.s32.totalorder %s23, 0
    %p435 = por %p433, %p434
    %p436 = scmp.ne.s32.totalorder %s425, %s428
    %p437 = scmp.eq.s32.totalorder %s28, 3
    %p438 = por %p436, %p437
    %p439 = scmp.ne.s32.totalorder %s428, %s429
    %p440 = scmp.eq.s32.totalorder %s28, 0
    %p441 = por %p439, %p440
    %p442 = scmp.ne.s32.totalorder %s428, %s429
    %p443 = scmp.eq.s32.totalorder %s29, 3
    %p444 = por %p442, %p443
    %p446 = scmp.ne.s32.totalorder %s429, %s445
    %p447 = scmp.eq.s32.totalorder %s29, 0
    %p448 = por %p446, %p447
    %p449 = scmp.lt.s32.totalorder %s31, 1
    %s450 = scalar_select %p449, %s31, 1
    %p451 = scmp.lt.s32.totalorder %s38, 1
    %s452 = scalar_select %p451, %s38, 1
    %s453 = ssub.s32 %s450, %s452
    %p454 = scmp.eq.s32.totalorder %s453, 0
    %s456 = sadd.s32 %s455, 1
    %s457 = scalar_select %p454, %s455, %s456
    %p460 = pneg %p454
    %p461 = scmp.eq.s32.totalorder %s23, 3
    %p462 = por %p460, %p461
    %p463 = scmp.ne.s32.totalorder %s455, %s458
    %p464 = scmp.eq.s32.totalorder %s23, 0
    %p465 = por %p463, %p464
    %p466 = scmp.ne.s32.totalorder %s455, %s458
    %p467 = scmp.eq.s32.totalorder %s28, 3
    %p468 = por %p466, %p467
    %p469 = scmp.ne.s32.totalorder %s458, %s459
    %p470 = scmp.eq.s32.totalorder %s28, 0
    %p471 = por %p469, %p470
    %p472 = scmp.ne.s32.totalorder %s458, %s459
    %p473 = scmp.eq.s32.totalorder %s29, 3
    %p474 = por %p472, %p473
    %p476 = scmp.ne.s32.totalorder %s459, %s475
    %p477 = scmp.eq.s32.totalorder %s29, 0
    %p478 = por %p476, %p477
    %p479 = scmp.lt.s32.totalorder %s31, 1
    %s480 = scalar_select %p479, %s31, 1
    %p481 = scmp.lt.s32.totalorder %s38, 1
    %s482 = scalar_select %p481, %s38, 1
    %s483 = ssub.s32 %s480, %s482
    %p484 = scmp.eq.s32.totalorder %s483, 0
    %s486 = sadd.s32 %s485, 1
    %s487 = scalar_select %p484, %s485, %s486
    %p490 = pneg %p484
    %p491 = scmp.eq.s32.totalorder %s23, 3
    %p492 = por %p490, %p491
    %p493 = scmp.ne.s32.totalorder %s485, %s488
    %p494 = scmp.eq.s32.totalorder %s23, 0
    %p495 = por %p493, %p494
    %p496 = scmp.ne.s32.totalorder %s485, %s488
    %p497 = scmp.eq.s32.totalorder %s28, 3
    %p498 = por %p496, %p497
    %p499 = scmp.ne.s32.totalorder %s488, %s489
    %p500 = scmp.eq.s32.totalorder %s28, 0
    %p501 = por %p499, %p500
    %p502 = scmp.ne.s32.totalorder %s488, %s489
    %p503 = scmp.eq.s32.totalorder %s29, 3
    %p504 = por %p502, %p503
    %p506 = scmp.ne.s32.totalorder %s489, %s505
    %p507 = scmp.eq.s32.totalorder %s29, 0
    %p508 = por %p506, %p507
    %s509 = ssub.s32 %s30, %s42
    %p510 = scmp.eq.s32.totalorder %s509, 0
    %s512 = sadd.s32 %s511, 1
    %s513 = scalar_select %p510, %s511, %s512
    %p516 = pneg %p510
    %p517 = scmp.eq.s32.totalorder %s23, 3
    %p518 = por %p516, %p517
    %p519 = scmp.ne.s32.totalorder %s511, %s514
    %p520 = scmp.eq.s32.totalorder %s23, 0
    %p521 = por %p519, %p520
    %p522 = scmp.ne.s32.totalorder %s511, %s514
    %p523 = scmp.eq.s32.totalorder %s28, 3
    %p524 = por %p522, %p523
    %p525 = scmp.ne.s32.totalorder %s514, %s515
    %p526 = scmp.eq.s32.totalorder %s28, 0
    %p527 = por %p525, %p526
    %p528 = scmp.ne.s32.totalorder %s514, %s515
    %p529 = scmp.eq.s32.totalorder %s29, 3
    %p530 = por %p528, %p529
    %p532 = scmp.ne.s32.totalorder %s515, %s531
    %p533 = scmp.eq.s32.totalorder %s29, 0
    %p534 = por %p532, %p533
    %p535 = scmp.le.s32.totalorder 1, %s23
    %p536 = scmp.lt.s32.totalorder %s23, 5
    %p537 = pnand %p535, %p536
    %p538 = pneg %p537
    // Predicated region
    $region9: #{clip_text_prompt_encoder_forward.1} parent=5 // pred_check
      _
    $region10: #{clip_text_prompt_encoder_forward.1} parent=5 // pred_check_branch
      %540 = sbr.rel (%p537) target = $region12
    $region11: #{clip_text_prompt_encoder_forward.1} parent=5 // pred_region
      %s541 = ssub.s32 %s23, 1
      // Predicated region
      $region13: #{clip_text_prompt_encoder_forward.1} parent=11 // pred_check
        %p542 = pneg %p61
      $region14: #{clip_text_prompt_encoder_forward.1} parent=11 // pred_check_branch
        %544 = sbr.rel (%p542) target = $region16
      $region15: #{clip_text_prompt_encoder_forward.1} parent=11 // pred_region
        %s545 = smul.u32 2, %s32
        %p546 = scmp.lt.s32.totalorder %s545, 1
        %s547 = scalar_select %p546, %s545, 1
        %s548 = smul.addr %s547, 2
        %s549 = smul.addr %s548, 8
        %s550 = scalar_lea.vmem %s0, %s549
        %s551 = smul.u32 2, %s32
      $region16: #{clip_text_prompt_encoder_forward.1} parent=11 // pred_fallthru
        _
      // Predicated region
      $region17: #{clip_text_prompt_encoder_forward.1} parent=11 // pred_check
        %p552 = pneg %p87
      $region18: #{clip_text_prompt_encoder_forward.1} parent=11 // pred_check_branch
        %554 = sbr.rel (%p552) target = $region20
      $region19: #{clip_text_prompt_encoder_forward.1} parent=11 // pred_region
        %s555 = smul.u32 2, %s32
        %p556 = scmp.lt.s32.totalorder %s555, 1
        %s557 = scalar_select %p556, %s555, 1
        %s558 = smul.addr %s557, 2
        %s559 = scalar_lea.vmem %s1, %s558
        %s560 = smul.u32 2, %s32
      $region20: #{clip_text_prompt_encoder_forward.1} parent=11 // pred_fallthru
        _
    $region12: #{clip_text_prompt_encoder_forward.1} parent=5 // pred_fallthru
      _
    %p561 = scmp.lt.s32.totalorder %s23, 4
    // Predicated region
    $region21: #{clip_text_prompt_encoder_forward.1} parent=5 // pred_check
      %p562 = pneg %p561
    $region22: #{clip_text_prompt_encoder_forward.1} parent=5 // pred_check_branch
      %564 = sbr.rel (%p562) target = $region24
    $region23: #{clip_text_prompt_encoder_forward.1} parent=5 // pred_region
      // Predicated region
      $region25: #{clip_text_prompt_encoder_forward.1} parent=23 // pred_check
        %p565 = pneg %p107
      $region26: #{clip_text_prompt_encoder_forward.1} parent=23 // pred_check_branch
        %567 = sbr.rel (%p565) target = $region28
      $region27: #{clip_text_prompt_encoder_forward.1} parent=23 // pred_region
        %p568 = scmp.lt.s32.totalorder %s31, 3
        %s569 = scalar_select %p568, %s31, 3
        %s570 = smul.addr %s569, 4
        %s571 = scalar_lea.vmem %s2, %s570
      $region28: #{clip_text_prompt_encoder_forward.1} parent=23 // pred_fallthru
        _
      // Predicated region
      $region29: #{clip_text_prompt_encoder_forward.1} parent=23 // pred_check
        %p572 = pneg %p133
      $region30: #{clip_text_prompt_encoder_forward.1} parent=23 // pred_check_branch
        %574 = sbr.rel (%p572) target = $region32
      $region31: #{clip_text_prompt_encoder_forward.1} parent=23 // pred_region
        %p575 = scmp.lt.s32.totalorder %s31, 3
        %s576 = scalar_select %p575, %s31, 3
        %s577 = smul.addr %s576, 4
        %s578 = smul.addr %s577, 4
        %s579 = scalar_lea.vmem %s3, %s578
      $region32: #{clip_text_prompt_encoder_forward.1} parent=23 // pred_fallthru
        _
      // Predicated region
      $region33: #{clip_text_prompt_encoder_forward.1} parent=23 // pred_check
        %p580 = pneg %p159
      $region34: #{clip_text_prompt_encoder_forward.1} parent=23 // pred_check_branch
        %582 = sbr.rel (%p580) target = $region36
      $region35: #{clip_text_prompt_encoder_forward.1} parent=23 // pred_region
        %p583 = scmp.lt.s32.totalorder %s31, 3
        %s584 = scalar_select %p583, %s31, 3
        %s585 = scalar_lea.vmem %s4, %s584
      $region36: #{clip_text_prompt_encoder_forward.1} parent=23 // pred_fallthru
        _
      // Predicated region
      $region37: #{clip_text_prompt_encoder_forward.1} parent=23 // pred_check
        %p586 = pneg %p185
      $region38: #{clip_text_prompt_encoder_forward.1} parent=23 // pred_check_branch
        %588 = sbr.rel (%p586) target = $region40
      $region39: #{clip_text_prompt_encoder_forward.1} parent=23 // pred_region
        %p589 = scmp.lt.s32.totalorder %s31, 3
        %s590 = scalar_select %p589, %s31, 3
        %s591 = smul.addr %s590, 4
        %s592 = smul.addr %s591, 4
        %s593 = scalar_lea.vmem %s5, %s592
      $region40: #{clip_text_prompt_encoder_forward.1} parent=23 // pred_fallthru
        _
      // Predicated region
      $region41: #{clip_text_prompt_encoder_forward.1} parent=23 // pred_check
        %p594 = pneg %p211
      $region42: #{clip_text_prompt_encoder_forward.1} parent=23 // pred_check_branch
        %596 = sbr.rel (%p594) target = $region44
      $region43: #{clip_text_prompt_encoder_forward.1} parent=23 // pred_region
        %p597 = scmp.lt.s32.totalorder %s31, 3
        %s598 = scalar_select %p597, %s31, 3
        %s599 = scalar_lea.vmem %s6, %s598
      $region44: #{clip_text_prompt_encoder_forward.1} parent=23 // pred_fallthru
        _
      // Predicated region
      $region45: #{clip_text_prompt_encoder_forward.1} parent=23 // pred_check
        %p600 = pneg %p237
      $region46: #{clip_text_prompt_encoder_forward.1} parent=23 // pred_check_branch
        %602 = sbr.rel (%p600) target = $region48
      $region47: #{clip_text_prompt_encoder_forward.1} parent=23 // pred_region
        %p603 = scmp.lt.s32.totalorder %s31, 3
        %s604 = scalar_select %p603, %s31, 3
        %s605 = smul.addr %s604, 4
        %s606 = smul.addr %s605, 4
        %s607 = scalar_lea.vmem %s7, %s606
      $region48: #{clip_text_prompt_encoder_forward.1} parent=23 // pred_fallthru
        _
      // Predicated region
      $region49: #{clip_text_prompt_encoder_forward.1} parent=23 // pred_check
        %p608 = pneg %p263
      $region50: #{clip_text_prompt_encoder_forward.1} parent=23 // pred_check_branch
        %610 = sbr.rel (%p608) target = $region52
      $region51: #{clip_text_prompt_encoder_forward.1} parent=23 // pred_region
        %p611 = scmp.lt.s32.totalorder %s31, 3
        %s612 = scalar_select %p611, %s31, 3
        %s613 = scalar_lea.vmem %s8, %s612
      $region52: #{clip_text_prompt_encoder_forward.1} parent=23 // pred_fallthru
        _
      // Predicated region
      $region53: #{clip_text_prompt_encoder_forward.1} parent=23 // pred_check
        %p614 = pneg %p289
      $region54: #{clip_text_prompt_encoder_forward.1} parent=23 // pred_check_branch
        %616 = sbr.rel (%p614) target = $region56
      $region55: #{clip_text_prompt_encoder_forward.1} parent=23 // pred_region
        %p617 = scmp.lt.s32.totalorder %s31, 3
        %s618 = scalar_select %p617, %s31, 3
        %s619 = smul.addr %s618, 16
        %s620 = smul.addr %s619, 4
        %s621 = scalar_lea.vmem %s9, %s620
      $region56: #{clip_text_prompt_encoder_forward.1} parent=23 // pred_fallthru
        _
      // Predicated region
      $region57: #{clip_text_prompt_encoder_forward.1} parent=23 // pred_check
        %p622 = pneg %p315
      $region58: #{clip_text_prompt_encoder_forward.1} parent=23 // pred_check_branch
        %624 = sbr.rel (%p622) target = $region60
      $region59: #{clip_text_prompt_encoder_forward.1} parent=23 // pred_region
        %p625 = scmp.lt.s32.totalorder %s31, 3
        %s626 = scalar_select %p625, %s31, 3
        %s627 = scalar_lea.vmem %s10, %s626
      $region60: #{clip_text_prompt_encoder_forward.1} parent=23 // pred_fallthru
        _
      // Predicated region
      $region61: #{clip_text_prompt_encoder_forward.1} parent=23 // pred_check
        %p628 = pneg %p345
      $region62: #{clip_text_prompt_encoder_forward.1} parent=23 // pred_check_branch
        %630 = sbr.rel (%p628) target = $region64
      $region63: #{clip_text_prompt_encoder_forward.1} parent=23 // pred_region
        %p631 = scmp.lt.s32.totalorder %s31, 1
        %s632 = scalar_select %p631, %s31, 1
        %p633 = scmp.lt.s32.totalorder %s632, 1
        %s634 = scalar_select %p633, %s632, 1
        %s635 = smul.addr %s634, 4
        %s636 = scalar_lea.vmem %s11, %s635
        %p637 = scmp.lt.s32.totalorder %s31, 1
        %s638 = scalar_select %p637, %s31, 1
      $region64: #{clip_text_prompt_encoder_forward.1} parent=23 // pred_fallthru
        _
      // Predicated region
      $region65: #{clip_text_prompt_encoder_forward.1} parent=23 // pred_check
        %p639 = pneg %p375
      $region66: #{clip_text_prompt_encoder_forward.1} parent=23 // pred_check_branch
        %641 = sbr.rel (%p639) target = $region68
      $region67: #{clip_text_prompt_encoder_forward.1} parent=23 // pred_region
        %p642 = scmp.lt.s32.totalorder %s31, 1
        %s643 = scalar_select %p642, %s31, 1
        %p644 = scmp.lt.s32.totalorder %s643, 1
        %s645 = scalar_select %p644, %s643, 1
        %s646 = smul.addr %s645, 4
        %s647 = smul.addr %s646, 4
        %s648 = scalar_lea.vmem %s12, %s647
        %p649 = scmp.lt.s32.totalorder %s31, 1
        %s650 = scalar_select %p649, %s31, 1
      $region68: #{clip_text_prompt_encoder_forward.1} parent=23 // pred_fallthru
        _
      // Predicated region
      $region69: #{clip_text_prompt_encoder_forward.1} parent=23 // pred_check
        %p651 = pneg %p405
      $region70: #{clip_text_prompt_encoder_forward.1} parent=23 // pred_check_branch
        %653 = sbr.rel (%p651) target = $region72
      $region71: #{clip_text_prompt_encoder_forward.1} parent=23 // pred_region
        %p654 = scmp.lt.s32.totalorder %s31, 1
        %s655 = scalar_select %p654, %s31, 1
        %p656 = scmp.lt.s32.totalorder %s655, 1
        %s657 = scalar_select %p656, %s655, 1
        %s658 = smul.addr %s657, 4
        %s659 = smul.addr %s658, 4
        %s660 = scalar_lea.vmem %s13, %s659
        %p661 = scmp.lt.s32.totalorder %s31, 1
        %s662 = scalar_select %p661, %s31, 1
      $region72: #{clip_text_prompt_encoder_forward.1} parent=23 // pred_fallthru
        _
      // Predicated region
      $region73: #{clip_text_prompt_encoder_forward.1} parent=23 // pred_check
        %p663 = pneg %p435
      $region74: #{clip_text_prompt_encoder_forward.1} parent=23 // pred_check_branch
        %665 = sbr.rel (%p663) target = $region76
      $region75: #{clip_text_prompt_encoder_forward.1} parent=23 // pred_region
        %p666 = scmp.lt.s32.totalorder %s31, 1
        %s667 = scalar_select %p666, %s31, 1
        %p668 = scmp.lt.s32.totalorder %s667, 1
        %s669 = scalar_select %p668, %s667, 1
        %s670 = scalar_lea.vmem %s14, %s669
        %p671 = scmp.lt.s32.totalorder %s31, 1
        %s672 = scalar_select %p671, %s31, 1
      $region76: #{clip_text_prompt_encoder_forward.1} parent=23 // pred_fallthru
        _
      // Predicated region
      $region77: #{clip_text_prompt_encoder_forward.1} parent=23 // pred_check
        %p673 = pneg %p465
      $region78: #{clip_text_prompt_encoder_forward.1} parent=23 // pred_check_branch
        %675 = sbr.rel (%p673) target = $region80
      $region79: #{clip_text_prompt_encoder_forward.1} parent=23 // pred_region
        %p676 = scmp.lt.s32.totalorder %s31, 1
        %s677 = scalar_select %p676, %s31, 1
        %p678 = scmp.lt.s32.totalorder %s677, 1
        %s679 = scalar_select %p678, %s677, 1
        %s680 = smul.addr %s679, 4
        %s681 = smul.addr %s680, 4
        %s682 = scalar_lea.vmem %s15, %s681
        %p683 = scmp.lt.s32.totalorder %s31, 1
        %s684 = scalar_select %p683, %s31, 1
      $region80: #{clip_text_prompt_encoder_forward.1} parent=23 // pred_fallthru
        _
      // Predicated region
      $region81: #{clip_text_prompt_encoder_forward.1} parent=23 // pred_check
        %p685 = pneg %p495
      $region82: #{clip_text_prompt_encoder_forward.1} parent=23 // pred_check_branch
        %687 = sbr.rel (%p685) target = $region84
      $region83: #{clip_text_prompt_encoder_forward.1} parent=23 // pred_region
        %p688 = scmp.lt.s32.totalorder %s31, 1
        %s689 = scalar_select %p688, %s31, 1
        %p690 = scmp.lt.s32.totalorder %s689, 1
        %s691 = scalar_select %p690, %s689, 1
        %s692 = scalar_lea.vmem %s16, %s691
        %p693 = scmp.lt.s32.totalorder %s31, 1
        %s694 = scalar_select %p693, %s31, 1
      $region84: #{clip_text_prompt_encoder_forward.1} parent=23 // pred_fallthru
        _
    $region24: #{clip_text_prompt_encoder_forward.1} parent=5 // pred_fallthru
      _
    %p695 = scmp.le.s32.totalorder 1, %s23
    %p696 = scmp.lt.s32.totalorder %s23, 5
    %p697 = pnand %p695, %p696
    %p698 = pneg %p697
    // Predicated region
    $region85: #{clip_text_prompt_encoder_forward.1} parent=5 // pred_check
      _
    $region86: #{clip_text_prompt_encoder_forward.1} parent=5 // pred_check_branch
      %700 = sbr.rel (%p697) target = $region88
    $region87: #{clip_text_prompt_encoder_forward.1} parent=5 // pred_region
      %s701 = ssub.s32 %s23, 1
      %s702 = smul.u32 2, %s32
      %p703 = scmp.lt.s32.totalorder %s702, 1
      %s704 = scalar_select %p703, %s702, 1
      %s705 = smul.addr %s704, 2
      %s706 = smul.addr %s705, 8
      %s707 = scalar_lea.vmem %s0, %s706
      %p708 = pneg %p61
      %p709 = pneg %p58
      %s710 = smul.u32 2, %s32
      %p711 = scmp.lt.s32.totalorder %s710, 1
      %s712 = scalar_select %p711, %s710, 1
      %s713 = smul.addr %s712, 2
      %s714 = scalar_lea.vmem %s1, %s713
      %p715 = pneg %p87
      %p716 = pneg %p84
      %p717 = scmp.lt.s32.totalorder %s33, 3
      %s718 = scalar_select %p717, %s33, 3
      %s719 = smul.addr %s718, 4
      %s720 = scalar_lea.vmem %s2, %s719
      %p721 = pneg %p113
      %p722 = pneg %p110
      %p723 = scmp.lt.s32.totalorder %s33, 3
      %s724 = scalar_select %p723, %s33, 3
      %s725 = smul.addr %s724, 4
      %s726 = smul.addr %s725, 4
      %s727 = scalar_lea.vmem %s3, %s726
      %p728 = pneg %p139
      %p729 = pneg %p136
      %p730 = scmp.lt.s32.totalorder %s33, 3
      %s731 = scalar_select %p730, %s33, 3
      %s732 = scalar_lea.vmem %s4, %s731
      %p733 = pneg %p165
      %p734 = pneg %p162
      %p735 = scmp.lt.s32.totalorder %s33, 3
      %s736 = scalar_select %p735, %s33, 3
      %s737 = smul.addr %s736, 4
      %s738 = smul.addr %s737, 4
      %s739 = scalar_lea.vmem %s5, %s738
      %p740 = pneg %p191
      %p741 = pneg %p188
      %p742 = scmp.lt.s32.totalorder %s33, 3
      %s743 = scalar_select %p742, %s33, 3
      %s744 = scalar_lea.vmem %s6, %s743
      %p745 = pneg %p217
      %p746 = pneg %p214
      %p747 = scmp.lt.s32.totalorder %s33, 3
      %s748 = scalar_select %p747, %s33, 3
      %s749 = smul.addr %s748, 4
      %s750 = smul.addr %s749, 4
      %s751 = scalar_lea.vmem %s7, %s750
      %p752 = pneg %p243
      %p753 = pneg %p240
      %p754 = scmp.lt.s32.totalorder %s33, 3
      %s755 = scalar_select %p754, %s33, 3
      %s756 = scalar_lea.vmem %s8, %s755
      %p757 = pneg %p269
      %p758 = pneg %p266
      %p759 = scmp.lt.s32.totalorder %s33, 3
      %s760 = scalar_select %p759, %s33, 3
      %s761 = smul.addr %s760, 16
      %s762 = smul.addr %s761, 4
      %s763 = scalar_lea.vmem %s9, %s762
      %p764 = pneg %p295
      %p765 = pneg %p292
      %p766 = scmp.lt.s32.totalorder %s33, 3
      %s767 = scalar_select %p766, %s33, 3
      %s768 = scalar_lea.vmem %s10, %s767
      %p769 = pneg %p321
      %p770 = pneg %p318
      %p771 = scmp.lt.s32.totalorder %s33, 1
      %s772 = scalar_select %p771, %s33, 1
      %p773 = scmp.lt.s32.totalorder %s772, 1
      %s774 = scalar_select %p773, %s772, 1
      %s775 = smul.addr %s774, 4
      %s776 = scalar_lea.vmem %s11, %s775
      %p777 = pneg %p351
      %p778 = pneg %p348
      %p779 = scmp.lt.s32.totalorder %s33, 1
      %s780 = scalar_select %p779, %s33, 1
      %p781 = scmp.lt.s32.totalorder %s780, 1
      %s782 = scalar_select %p781, %s780, 1
      %s783 = smul.addr %s782, 4
      %s784 = smul.addr %s783, 4
      %s785 = scalar_lea.vmem %s12, %s784
      %p786 = pneg %p381
      %p787 = pneg %p378
      %p788 = scmp.lt.s32.totalorder %s33, 1
      %s789 = scalar_select %p788, %s33, 1
      %p790 = scmp.lt.s32.totalorder %s789, 1
      %s791 = scalar_select %p790, %s789, 1
      %s792 = smul.addr %s791, 4
      %s793 = smul.addr %s792, 4
      %s794 = scalar_lea.vmem %s13, %s793
      %p795 = pneg %p411
      %p796 = pneg %p408
      %p797 = scmp.lt.s32.totalorder %s33, 1
      %s798 = scalar_select %p797, %s33, 1
      %p799 = scmp.lt.s32.totalorder %s798, 1
      %s800 = scalar_select %p799, %s798, 1
      %s801 = scalar_lea.vmem %s14, %s800
      %p802 = pneg %p441
      %p803 = pneg %p438
      %p804 = scmp.lt.s32.totalorder %s33, 1
      %s805 = scalar_select %p804, %s33, 1
      %p806 = scmp.lt.s32.totalorder %s805, 1
      %s807 = scalar_select %p806, %s805, 1
      %s808 = smul.addr %s807, 4
      %s809 = smul.addr %s808, 4
      %s810 = scalar_lea.vmem %s15, %s809
      %p811 = pneg %p471
      %p812 = pneg %p468
      %p813 = scmp.lt.s32.totalorder %s33, 1
      %s814 = scalar_select %p813, %s33, 1
      %p815 = scmp.lt.s32.totalorder %s814, 1
      %s816 = scalar_select %p815, %s814, 1
      %s817 = scalar_lea.vmem %s16, %s816
      %p818 = pneg %p501
      %p819 = pneg %p498
      %p820 = pneg %p527
      %p821 = pneg %p524
      %s822 = smul.u32 2, %s32
      %p823 = scmp.lt.s32.totalorder %s822, 1
      %s824 = scalar_select %p823, %s822, 1
      %s825 = smul.addr %s824, 2
      %s826 = smul.addr %s825, 8
      %s827 = scalar_lea.vmem %s17, %s826
      %s828 = smul.u32 2, %s32
      %p829 = scmp.lt.s32.totalorder %s828, 1
      %s830 = scalar_select %p829, %s828, 1
      %s831 = smul.addr %s830, 2
      %s832 = smul.addr %s831, 8
      %s833 = scalar_lea.vmem %s0, %s832
      %s834 = smul.u32 2, %s32
      %s835 = smul.u32 2, %s32
      %p836 = scmp.lt.s32.totalorder %s835, 1
      %s837 = scalar_select %p836, %s835, 1
      %s838 = smul.addr %s837, 2
      %s839 = scalar_lea.vmem %s1, %s838
      %s840 = smul.u32 2, %s32
      %p841 = scmp.lt.s32.totalorder %s33, 3
      %s842 = scalar_select %p841, %s33, 3
      %s843 = smul.addr %s842, 4
      %s844 = scalar_lea.vmem %s2, %s843
      %p845 = scmp.lt.s32.totalorder %s33, 3
      %s846 = scalar_select %p845, %s33, 3
      %s847 = smul.addr %s846, 4
      %s848 = smul.addr %s847, 4
      %s849 = scalar_lea.vmem %s3, %s848
      %p850 = scmp.lt.s32.totalorder %s33, 3
      %s851 = scalar_select %p850, %s33, 3
      %s852 = scalar_lea.vmem %s4, %s851
      %p853 = scmp.lt.s32.totalorder %s33, 3
      %s854 = scalar_select %p853, %s33, 3
      %s855 = smul.addr %s854, 4
      %s856 = smul.addr %s855, 4
      %s857 = scalar_lea.vmem %s5, %s856
      %p858 = scmp.lt.s32.totalorder %s33, 3
      %s859 = scalar_select %p858, %s33, 3
      %s860 = scalar_lea.vmem %s6, %s859
      %p861 = scmp.lt.s32.totalorder %s33, 3
      %s862 = scalar_select %p861, %s33, 3
      %s863 = smul.addr %s862, 4
      %s864 = smul.addr %s863, 4
      %s865 = scalar_lea.vmem %s7, %s864
      %p866 = scmp.lt.s32.totalorder %s33, 3
      %s867 = scalar_select %p866, %s33, 3
      %s868 = scalar_lea.vmem %s8, %s867
      %p869 = scmp.lt.s32.totalorder %s33, 3
      %s870 = scalar_select %p869, %s33, 3
      %s871 = smul.addr %s870, 16
      %s872 = smul.addr %s871, 4
      %s873 = scalar_lea.vmem %s9, %s872
      %p874 = scmp.lt.s32.totalorder %s33, 3
      %s875 = scalar_select %p874, %s33, 3
      %s876 = scalar_lea.vmem %s10, %s875
      %p877 = scmp.lt.s32.totalorder %s33, 1
      %s878 = scalar_select %p877, %s33, 1
      %p879 = scmp.lt.s32.totalorder %s878, 1
      %s880 = scalar_select %p879, %s878, 1
      %s881 = smul.addr %s880, 4
      %s882 = scalar_lea.vmem %s11, %s881
      %p883 = scmp.lt.s32.totalorder %s33, 1
      %s884 = scalar_select %p883, %s33, 1
      %p885 = scmp.lt.s32.totalorder %s33, 1
      %s886 = scalar_select %p885, %s33, 1
      %p887 = scmp.lt.s32.totalorder %s886, 1
      %s888 = scalar_select %p887, %s886, 1
      %s889 = smul.addr %s888, 4
      %s890 = smul.addr %s889, 4
      %s891 = scalar_lea.vmem %s12, %s890
      %p892 = scmp.lt.s32.totalorder %s33, 1
      %s893 = scalar_select %p892, %s33, 1
      %p894 = scmp.lt.s32.totalorder %s33, 1
      %s895 = scalar_select %p894, %s33, 1
      %p896 = scmp.lt.s32.totalorder %s895, 1
      %s897 = scalar_select %p896, %s895, 1
      %s898 = smul.addr %s897, 4
      %s899 = smul.addr %s898, 4
      %s900 = scalar_lea.vmem %s13, %s899
      %p901 = scmp.lt.s32.totalorder %s33, 1
      %s902 = scalar_select %p901, %s33, 1
      %p903 = scmp.lt.s32.totalorder %s33, 1
      %s904 = scalar_select %p903, %s33, 1
      %p905 = scmp.lt.s32.totalorder %s904, 1
      %s906 = scalar_select %p905, %s904, 1
      %s907 = scalar_lea.vmem %s14, %s906
      %p908 = scmp.lt.s32.totalorder %s33, 1
      %s909 = scalar_select %p908, %s33, 1
      %p910 = scmp.lt.s32.totalorder %s33, 1
      %s911 = scalar_select %p910, %s33, 1
      %p912 = scmp.lt.s32.totalorder %s911, 1
      %s913 = scalar_select %p912, %s911, 1
      %s914 = smul.addr %s913, 4
      %s915 = smul.addr %s914, 4
      %s916 = scalar_lea.vmem %s15, %s915
      %p917 = scmp.lt.s32.totalorder %s33, 1
      %s918 = scalar_select %p917, %s33, 1
      %p919 = scmp.lt.s32.totalorder %s33, 1
      %s920 = scalar_select %p919, %s33, 1
      %p921 = scmp.lt.s32.totalorder %s920, 1
      %s922 = scalar_select %p921, %s920, 1
      %s923 = scalar_lea.vmem %s16, %s922
      %p924 = scmp.lt.s32.totalorder %s33, 1
      %s925 = scalar_select %p924, %s33, 1
      %s926 = smul.u32 2, %s32
      %p927 = scmp.lt.s32.totalorder %s926, 1
      %s928 = scalar_select %p927, %s926, 1
      %s929 = smul.addr %s928, 2
      %s930 = smul.addr %s929, 8
      %s931 = scalar_lea.vmem %s17, %s930
      %s932 = smul.u32 2, %s32
      %p936 = scmp.eq.s32.totalorder %s33, 0
      // Predicated region
      $region89: #{clip_text_prompt_encoder_forward.1} parent=87 // pred_check
        %p937 = pneg %p936
      $region90: #{clip_text_prompt_encoder_forward.1} parent=87 // pred_check_branch
        %939 = sbr.rel (%p937) target = $region92
      $region91: #{clip_text_prompt_encoder_forward.1} parent=87 // pred_region
        %v940 = vld [vmem:[%s833] sm:$0xff]
        %v941 = vld [vmem:[%s833 + $0x8] sm:$0xff]
        %v942 = vld [vmem:[%s833 + $0x10] sm:$0xff]
        %v943 = vld [vmem:[%s833 + $0x18] sm:$0xff]
        %vm944 = vcmask 261120
        %945 = vst.msk [vmem:[%s931] sm:$0xff] %vm944, %v940
        %946 = vst.msk [vmem:[%s931 + $0x8] sm:$0xff] %vm944, %v941
        %947 = vst.msk [vmem:[%s931 + $0x10] sm:$0xff] %vm944, %v942
        %948 = vst.msk [vmem:[%s931 + $0x18] sm:$0xff] %vm944, %v943
      $region92: #{clip_text_prompt_encoder_forward.1} parent=87 // pred_fallthru
        _
      %v949 = vld [vmem:[%s844] sm:$0xf]
      %v950 = vld [vmem:[%s849] sm:$0xf]
      %v951 = vld [vmem:[%s849 + $0x4] sm:$0xf]
      %v952 = vld [vmem:[%s849 + $0x8] sm:$0xf]
      %v953 = vld [vmem:[%s849 + $0xc] sm:$0xf]
      %v954 = vld [vmem:[%s852] sm:$0x1]
      %v955 = vld [vmem:[%s857] sm:$0xf]
      %v956 = vld [vmem:[%s857 + $0x4] sm:$0xf]
      %v957 = vld [vmem:[%s857 + $0x8] sm:$0xf]
      %v958 = vld [vmem:[%s857 + $0xc] sm:$0xf]
      %v959 = vld [vmem:[%s860] sm:$0x1]
      %v960 = vld [vmem:[%s865] sm:$0xf]
      %v961 = vld [vmem:[%s865 + $0x4] sm:$0xf]
      %v962 = vld [vmem:[%s865 + $0x8] sm:$0xf]
      %v963 = vld [vmem:[%s865 + $0xc] sm:$0xf]
      %v964 = vld [vmem:[%s868] sm:$0x1]
      %v965 = vld [vmem:[%s873] sm:$0xf]
      %v966 = vld [vmem:[%s873 + $0x4] sm:$0xf]
      %v967 = vld [vmem:[%s873 + $0x8] sm:$0xf]
      %v968 = vld [vmem:[%s873 + $0xc] sm:$0xf]
      %v969 = vld [vmem:[%s873 + $0x10] sm:$0xf]
      %v970 = vld [vmem:[%s873 + $0x14] sm:$0xf]
      %v971 = vld [vmem:[%s873 + $0x18] sm:$0xf]
      %v972 = vld [vmem:[%s873 + $0x1c] sm:$0xf]
      %v973 = vld [vmem:[%s873 + $0x20] sm:$0xf]
      %v974 = vld [vmem:[%s873 + $0x24] sm:$0xf]
      %v975 = vld [vmem:[%s873 + $0x28] sm:$0xf]
      %v976 = vld [vmem:[%s873 + $0x2c] sm:$0xf]
      %v977 = vld [vmem:[%s873 + $0x30] sm:$0xf]
      %v978 = vld [vmem:[%s873 + $0x34] sm:$0xf]
      %v979 = vld [vmem:[%s873 + $0x38] sm:$0xf]
      %v980 = vld [vmem:[%s873 + $0x3c] sm:$0xf]
      %v981 = vld [vmem:[%s876] sm:$0x1]
      %p982 = scmp.lt.s32.totalorder %s33, 2
      %s983 = scalar_select %p982, 1, 0
      %s984 = scvt.s32.f32 %s983
      %v985 = vld [vmem:[%s839] sm:$0x3]
      %v986 = vld [vmem:[%s839 + $0x2] sm:$0x3]
      %v987 = vstv %s984
      %v988 = vmul.f32 %v985, %v987
      %v989 = vmul.f32 %v986, %v987
      %s990 = ssub.f32 1.0, %s984
      %v991 = vstv %s990
      %v992 = vmul.f32 %v985, %v991
      %v993 = vmul.f32 %v986, %v991
      %v996 = vrot.slane %v992, 1
      %v997 = vrot.slane %v993, 1
      %v1000 = vadd.f32 %v988, %v996
      %v1001 = vadd.f32 %v989, %v997
      %v1002 = vld [vmem:[%s931] sm:$0xff]
      %v1003 = vld [vmem:[%s931 + $0x8] sm:$0xff]
      %v1004 = vld [vmem:[%s931 + $0x10] sm:$0xff]
      %v1005 = vld [vmem:[%s931 + $0x18] sm:$0xff]
      %vm1006 = vcmask 261120
      %v1007 = vsel %vm1006, %v1002, 0.0
      %1008 = vadd.xlane.f32.xlu0 %v1007
      %v1009 = vpop.xlane.xlu0 %1008
      %v1010 = vsel %vm1006, %v1003, 0.0
      %1011 = vadd.xlane.f32.xlu0 %v1010
      %v1012 = vpop.xlane.xlu0 %1011
      %v1013 = vsel %vm1006, %v1004, 0.0
      %1014 = vadd.xlane.f32.xlu0 %v1013
      %v1015 = vpop.xlane.xlu0 %1014
      %v1016 = vsel %vm1006, %v1005, 0.0
      %1017 = vadd.xlane.f32.xlu0 %v1016
      %v1018 = vpop.xlane.xlu0 %1017
      %v1019 = vrcp.pop 32.0
      %v1020 = vmul.f32 %v1009, %v1019
      %v1021 = vmul.f32 %v1012, %v1019
      %v1022 = vmul.f32 %v1015, %v1019
      %v1023 = vmul.f32 %v1018, %v1019
      %v1024 = vsub.f32 %v1002, %v1020
      %v1025 = vsub.f32 %v1003, %v1021
      %v1026 = vsub.f32 %v1004, %v1022
      %v1027 = vsub.f32 %v1005, %v1023
      %v1028 = vmul.f32 %v1024, %v1024
      %v1029 = vmul.f32 %v1025, %v1025
      %v1030 = vmul.f32 %v1026, %v1026
      %v1031 = vmul.f32 %v1027, %v1027
      %v1032 = vsel %vm1006, %v1028, 0.0
      %1033 = vadd.xlane.f32.xlu0 %v1032
      %v1034 = vpop.xlane.xlu0 %1033
      %v1035 = vsel %vm1006, %v1029, 0.0
      %1036 = vadd.xlane.f32.xlu0 %v1035
      %v1037 = vpop.xlane.xlu0 %1036
      %v1038 = vsel %vm1006, %v1030, 0.0
      %1039 = vadd.xlane.f32.xlu0 %v1038
      %v1040 = vpop.xlane.xlu0 %1039
      %v1041 = vsel %vm1006, %v1031, 0.0
      %1042 = vadd.xlane.f32.xlu0 %v1041
      %v1043 = vpop.xlane.xlu0 %1042
      %v1044 = vmul.f32 %v1034, %v1019
      %v1045 = vmul.f32 %v1037, %v1019
      %v1046 = vmul.f32 %v1040, %v1019
      %v1047 = vmul.f32 %v1043, %v1019
      %v1048 = vadd.f32 %v1044, 1e-05
      %v1049 = vadd.f32 %v1045, 1e-05
      %v1050 = vadd.f32 %v1046, 1e-05
      %v1051 = vadd.f32 %v1047, 1e-05
      %v1052 = vrsqrt.pop %v1048
      %v1053 = vrsqrt.pop %v1049
      %v1054 = vrsqrt.pop %v1050
      %v1055 = vrsqrt.pop %v1051
      %v1056 = vmul.f32 %v1024, %v1052
      %v1057 = vmul.f32 %v1025, %v1053
      %v1058 = vmul.f32 %v1026, %v1054
      %v1059 = vmul.f32 %v1027, %v1055
      %v1060 = vlaneseq
      %v1061 = vshrl.u32 %v1060, 7
      %v1062 = vsub.s32 0, %v1061
      %v1063 = vrot.slane %v949, %v1062
      %v1064 = vmul.f32 %v1056, %v1063
      %v1065 = vmul.f32 %v1057, %v1063
      %v1066 = vmul.f32 %v1058, %v1063
      %v1067 = vmul.f32 %v1059, %v1063
      %v1068 = vlaneseq
      %v1069 = vshrl.u32 %v1068, 7
      %v1070 = vsub.s32 1, %v1069
      %v1071 = vrot.slane %v949, %v1070
      %v1072 = vadd.f32 %v1064, %v1071
      %v1073 = vadd.f32 %v1065, %v1071
      %v1074 = vadd.f32 %v1066, %v1071
      %v1075 = vadd.f32 %v1067, %v1071
      %v1076 = vpack.c.bf16 %v1073, %v1072
      %v1077 = vpack.c.bf16 %v1075, %v1074
      %v1079 = vlaneseq
      %v1080 = vshrl.u32 %v1079, 7
      %v1081 = vsub.s32 0, %v1080
      %v1082 = vrot.slane %v954, %v1081
      %v1088 = vunpack.c.l.b16 %v950
      %v1089 = vunpack.c.l.b16 %v951
      %v1090 = vunpack.c.l.b16 %v952
      %v1091 = vunpack.c.l.b16 %v953
      %v1092 = vpack.c.b16 %v1089, %v1088
      %v1093 = vpack.c.b16 %v1091, %v1090
      %v1097 = vsel %vm1006, %v1076, 0
      %v1100 = vsel %vm1006, %v1077, 0
      %1102 = vmatprep.subr.bf16.mxu0 0
      %1103 = vmatpush1.bf16.msra.mxu0 %v1092
      %1104 = vmatprep.subr.bf16.mxu0 0
      %1105 = vmatpush1.bf16.msra.mxu0 %v1093
      %1106 = vmatprep.subr.bf16.mxu0 0
      %1107 = vmatpush1.bf16.msra.mxu0 0
      %1108 = vmatprep.subr.bf16.mxu0 0
      %1109 = vmatpush1.bf16.msra.mxu0 0
      %1110 = vmatprep.subr.bf16.mxu0 0
      %1111 = vmatpush1.bf16.msra.mxu0 0
      %1112 = vmatprep.subr.bf16.mxu0 0
      %1113 = vmatpush1.bf16.msra.mxu0 0
      %1114 = vmatprep.subr.bf16.mxu0 0
      %1115 = vmatpush1.bf16.msra.mxu0 0
      %1116 = vmatprep.subr.bf16.mxu0 0
      %1117 = vmatpush1.bf16.msra.mxu0 0
      %1118 = vmatprep.subr.bf16.mxu0 0
      %1119 = vmatpush1.bf16.msra.mxu0 0
      %1120 = vmatprep.subr.bf16.mxu0 0
      %1121 = vmatpush1.bf16.msra.mxu0 0
      %1122 = vmatprep.subr.bf16.mxu0 0
      %1123 = vmatpush1.bf16.msra.mxu0 0
      %1124 = vmatprep.subr.bf16.mxu0 0
      %1125 = vmatpush1.bf16.msra.mxu0 0
      %1126 = vmatprep.subr.bf16.mxu0 0
      %1127 = vmatpush1.bf16.msra.mxu0 0
      %1128 = vmatprep.subr.bf16.mxu0 0
      %1129 = vmatpush1.bf16.msra.mxu0 0
      %1130 = vmatprep.subr.bf16.mxu0 0
      %1131 = vmatpush1.bf16.msra.mxu0 0
      %1132 = vmatprep.subr.bf16.mxu0 0
      %1133 = vmatpush1.bf16.msra.mxu0 0
      %1134 = vmatprep.mubr.bf16.mxu0 0
      %1135 = vmatmul.mubr.bf16.gmra.mrb[0].mxu0 %v1097
      %v1136 = vpop.f32.mrb[0].mxu0
      %v1137 = vadd.f32 %v1082, %v1136
      %v1138 = vpop.f32.mrb[0].mxu0
      %v1139 = vpop.f32.mrb[0].mxu0
      %v1140 = vadd.f32 %v1082, %v1139
      %v1141 = vpop.f32.mrb[0].mxu0
      %1142 = vmatprep.mubr.bf16.mxu0 0
      %1143 = vmatmul.mubr.bf16.gmra.mrb[0].mxu0 %v1100
      %v1144 = vpop.f32.mrb[0].mxu0
      %v1145 = vadd.f32 %v1082, %v1144
      %v1146 = vpop.f32.mrb[0].mxu0
      %v1147 = vpop.f32.mrb[0].mxu0
      %v1148 = vadd.f32 %v1082, %v1147
      %v1149 = vpop.f32.mrb[0].mxu0
      %1150 = vdwg.mxu0
      %v1151 = vmul.f32 %v1137, 0.35355338
      %v1152 = vmul.f32 %v1140, 0.35355338
      %v1153 = vmul.f32 %v1145, 0.35355338
      %v1154 = vmul.f32 %v1148, 0.35355338
      %v1155 = vpack.c.bf16 %v1152, %v1151
      %v1156 = vpack.c.bf16 %v1154, %v1153
      %v1157 = vpack.c.bf16 %v1140, %v1137
      %v1158 = vpack.c.bf16 %v1148, %v1145
      %v1159 = vlaneseq
      %v1160 = vshrl.u32 %v1159, 7
      %v1161 = vsub.s32 0, %v1160
      %v1162 = vrot.slane %v1000, %v1161
      %1164 = vrot.lane.b32.xlu0 %v1157, 96
      %v1165 = vpop.permute.xlu0 %1164
      %vm1166 = vcmask 64512
      %v1168 = vsel %vm1166, %v1155, 0
      %v1171 = vsel %vm1166, %v1165, 0
      %1173 = vmatprep.subr.bf16.mxu0 0
      %1174 = vmatpush1.bf16.xpose.msra.mxu0 %v1171
      %1175 = vmatprep.subr.bf16.mxu0 0
      %1176 = vmatpush1.bf16.xpose.msra.mxu0 0
      %1177 = vmatprep.subr.bf16.mxu0 0
      %1178 = vmatpush1.bf16.xpose.msra.mxu0 0
      %1179 = vmatprep.subr.bf16.mxu0 0
      %1180 = vmatpush1.bf16.xpose.msra.mxu0 0
      %1181 = vmatprep.subr.bf16.mxu0 0
      %1182 = vmatpush1.bf16.xpose.msra.mxu0 0
      %1183 = vmatprep.subr.bf16.mxu0 0
      %1184 = vmatpush1.bf16.xpose.msra.mxu0 0
      %1185 = vmatprep.subr.bf16.mxu0 0
      %1186 = vmatpush1.bf16.xpose.msra.mxu0 0
      %1187 = vmatprep.subr.bf16.mxu0 0
      %1188 = vmatpush1.bf16.xpose.msra.mxu0 0
      %1189 = vmatprep.subr.bf16.mxu0 0
      %1190 = vmatpush1.bf16.xpose.msra.mxu0 0
      %1191 = vmatprep.subr.bf16.mxu0 0
      %1192 = vmatpush1.bf16.xpose.msra.mxu0 0
      %1193 = vmatprep.subr.bf16.mxu0 0
      %1194 = vmatpush1.bf16.xpose.msra.mxu0 0
      %1195 = vmatprep.subr.bf16.mxu0 0
      %1196 = vmatpush1.bf16.xpose.msra.mxu0 0
      %1197 = vmatprep.subr.bf16.mxu0 0
      %1198 = vmatpush1.bf16.xpose.msra.mxu0 0
      %1199 = vmatprep.subr.bf16.mxu0 0
      %1200 = vmatpush1.bf16.xpose.msra.mxu0 0
      %1201 = vmatprep.subr.bf16.mxu0 0
      %1202 = vmatpush1.bf16.xpose.msra.mxu0 0
      %1203 = vmatprep.subr.bf16.mxu0 0
      %1204 = vmatpush1.bf16.xpose.msra.mxu0 0
      %1205 = vmatprep.mubr.bf16.mxu0 0
      %1206 = vmatmul.mubr.bf16.gmra.mrb[0].mxu0 %v1168
      %v1207 = vpop.f32.mrb[0].mxu0
      %v1208 = vadd.f32 %v1162, %v1207
      %v1209 = vpop.f32.mrb[0].mxu0
      %v1210 = vpop.f32.mrb[0].mxu0
      %v1211 = vadd.f32 %v1162, %v1210
      %v1212 = vpop.f32.mrb[0].mxu0
      %1213 = vdwg.mxu0
      %vm1214 = vcmask 130048
      %v1215 = vsel %vm1214, %v1208, -inf
      %1216 = vmax.xlane.f32.xlu0 %v1215
      %v1217 = vpop.xlane.xlu0 %1216
      %v1218 = vsel %vm1214, %v1211, -inf
      %1219 = vmax.xlane.f32.xlu0 %v1218
      %v1220 = vpop.xlane.xlu0 %1219
      %v1221 = vsub.f32 %v1208, %v1217
      %v1222 = vsub.f32 %v1211, %v1220
      %v1223 = vmul.f32 %v1221, 1.442695
      %v1224 = vpow.pop %v1223
      %v1225 = vmul.f32 %v1222, 1.442695
      %v1226 = vpow.pop %v1225
      %v1227 = vsel %vm1214, %v1224, 0.0
      %1228 = vadd.xlane.f32.xlu0 %v1227
      %v1229 = vpop.xlane.xlu0 %1228
      %v1230 = vsel %vm1214, %v1226, 0.0
      %1231 = vadd.xlane.f32.xlu0 %v1230
      %v1232 = vpop.xlane.xlu0 %1231
      %v1233 = vrcp.pop %v1229
      %v1234 = vrcp.pop %v1232
      %v1235 = vmul.f32 %v1224, %v1233
      %v1236 = vmul.f32 %v1226, %v1234
      %v1237 = vpack.c.bf16 %v1236, %v1235
      %1238 = vrot.lane.b32.xlu0 %v1157, 64
      %v1239 = vpop.permute.xlu0 %1238
      %v1242 = vsel %vm1214, %v1237, 0
      %1244 = vmatprep.subr.bf16.mxu0 0
      %1245 = vmatpush1.bf16.msra.mxu0 %v1239
      %1246 = vmatprep.subr.bf16.mxu0 0
      %1247 = vmatpush1.bf16.msra.mxu0 0
      %1248 = vmatprep.subr.bf16.mxu0 0
      %1249 = vmatpush1.bf16.msra.mxu0 0
      %1250 = vmatprep.subr.bf16.mxu0 0
      %1251 = vmatpush1.bf16.msra.mxu0 0
      %1252 = vmatprep.subr.bf16.mxu0 0
      %1253 = vmatpush1.bf16.msra.mxu0 0
      %1254 = vmatprep.subr.bf16.mxu0 0
      %1255 = vmatpush1.bf16.msra.mxu0 0
      %1256 = vmatprep.subr.bf16.mxu0 0
      %1257 = vmatpush1.bf16.msra.mxu0 0
      %1258 = vmatprep.subr.bf16.mxu0 0
      %1259 = vmatpush1.bf16.msra.mxu0 0
      %1260 = vmatprep.subr.bf16.mxu0 0
      %1261 = vmatpush1.bf16.msra.mxu0 0
      %1262 = vmatprep.subr.bf16.mxu0 0
      %1263 = vmatpush1.bf16.msra.mxu0 0
      %1264 = vmatprep.subr.bf16.mxu0 0
      %1265 = vmatpush1.bf16.msra.mxu0 0
      %1266 = vmatprep.subr.bf16.mxu0 0
      %1267 = vmatpush1.bf16.msra.mxu0 0
      %1268 = vmatprep.subr.bf16.mxu0 0
      %1269 = vmatpush1.bf16.msra.mxu0 0
      %1270 = vmatprep.subr.bf16.mxu0 0
      %1271 = vmatpush1.bf16.msra.mxu0 0
      %1272 = vmatprep.subr.bf16.mxu0 0
      %1273 = vmatpush1.bf16.msra.mxu0 0
      %1274 = vmatprep.subr.bf16.mxu0 0
      %1275 = vmatpush1.bf16.msra.mxu0 0
      %1276 = vmatprep.mubr.bf16.mxu0 0
      %1277 = vmatmul.mubr.bf16.gmra.mrb[0].mxu0 %v1242
      %v1278 = vpop.f32.mrb[0].mxu0
      %v1279 = vadd.f32 0.0, %v1278
      %v1280 = vpop.f32.mrb[0].mxu0
      %v1281 = vpop.f32.mrb[0].mxu0
      %v1282 = vadd.f32 0.0, %v1281
      %v1283 = vpop.f32.mrb[0].mxu0
      %1284 = vdwg.mxu0
      %1286 = vrot.lane.b32.xlu0 %v1155, 120
      %v1287 = vpop.permute.xlu0 %1286
      %1288 = vrot.lane.b32.xlu0 %v1157, 88
      %v1289 = vpop.permute.xlu0 %1288
      %v1291 = vsel %vm1166, %v1287, 0
      %v1294 = vsel %vm1166, %v1289, 0
      %1296 = vmatprep.subr.bf16.mxu0 0
      %1297 = vmatpush1.bf16.xpose.msra.mxu0 %v1294
      %1298 = vmatprep.subr.bf16.mxu0 0
      %1299 = vmatpush1.bf16.xpose.msra.mxu0 0
      %1300 = vmatprep.subr.bf16.mxu0 0
      %1301 = vmatpush1.bf16.xpose.msra.mxu0 0
      %1302 = vmatprep.subr.bf16.mxu0 0
      %1303 = vmatpush1.bf16.xpose.msra.mxu0 0
      %1304 = vmatprep.subr.bf16.mxu0 0
      %1305 = vmatpush1.bf16.xpose.msra.mxu0 0
      %1306 = vmatprep.subr.bf16.mxu0 0
      %1307 = vmatpush1.bf16.xpose.msra.mxu0 0
      %1308 = vmatprep.subr.bf16.mxu0 0
      %1309 = vmatpush1.bf16.xpose.msra.mxu0 0
      %1310 = vmatprep.subr.bf16.mxu0 0
      %1311 = vmatpush1.bf16.xpose.msra.mxu0 0
      %1312 = vmatprep.subr.bf16.mxu0 0
      %1313 = vmatpush1.bf16.xpose.msra.mxu0 0
      %1314 = vmatprep.subr.bf16.mxu0 0
      %1315 = vmatpush1.bf16.xpose.msra.mxu0 0
      %1316 = vmatprep.subr.bf16.mxu0 0
      %1317 = vmatpush1.bf16.xpose.msra.mxu0 0
      %1318 = vmatprep.subr.bf16.mxu0 0
      %1319 = vmatpush1.bf16.xpose.msra.mxu0 0
      %1320 = vmatprep.subr.bf16.mxu0 0
      %1321 = vmatpush1.bf16.xpose.msra.mxu0 0
      %1322 = vmatprep.subr.bf16.mxu0 0
      %1323 = vmatpush1.bf16.xpose.msra.mxu0 0
      %1324 = vmatprep.subr.bf16.mxu0 0
      %1325 = vmatpush1.bf16.xpose.msra.mxu0 0
      %1326 = vmatprep.subr.bf16.mxu0 0
      %1327 = vmatpush1.bf16.xpose.msra.mxu0 0
      %1328 = vmatprep.mubr.bf16.mxu0 0
      %1329 = vmatmul.mubr.bf16.gmra.mrb[0].mxu0 %v1291
      %v1330 = vpop.f32.mrb[0].mxu0
      %v1331 = vadd.f32 %v1162, %v1330
      %v1332 = vpop.f32.mrb[0].mxu0
      %v1333 = vpop.f32.mrb[0].mxu0
      %v1334 = vadd.f32 %v1162, %v1333
      %v1335 = vpop.f32.mrb[0].mxu0
      %1336 = vdwg.mxu0
      %v1337 = vsel %vm1214, %v1331, -inf
      %1338 = vmax.xlane.f32.xlu0 %v1337
      %v1339 = vpop.xlane.xlu0 %1338
      %v1340 = vsel %vm1214, %v1334, -inf
      %1341 = vmax.xlane.f32.xlu0 %v1340
      %v1342 = vpop.xlane.xlu0 %1341
      %v1343 = vsub.f32 %v1331, %v1339
      %v1344 = vsub.f32 %v1334, %v1342
      %v1345 = vmul.f32 %v1343, 1.442695
      %v1346 = vpow.pop %v1345
      %v1347 = vmul.f32 %v1344, 1.442695
      %v1348 = vpow.pop %v1347
      %v1349 = vsel %vm1214, %v1346, 0.0
      %1350 = vadd.xlane.f32.xlu0 %v1349
      %v1351 = vpop.xlane.xlu0 %1350
      %v1352 = vsel %vm1214, %v1348, 0.0
      %1353 = vadd.xlane.f32.xlu0 %v1352
      %v1354 = vpop.xlane.xlu0 %1353
      %v1355 = vrcp.pop %v1351
      %v1356 = vrcp.pop %v1354
      %v1357 = vmul.f32 %v1346, %v1355
      %v1358 = vmul.f32 %v1348, %v1356
      %v1359 = vpack.c.bf16 %v1358, %v1357
      %1360 = vrot.lane.b32.xlu0 %v1157, 56
      %v1361 = vpop.permute.xlu0 %1360
      %v1364 = vsel %vm1214, %v1359, 0
      %1366 = vmatprep.subr.bf16.mxu0 0
      %1367 = vmatpush1.bf16.msra.mxu0 %v1361
      %1368 = vmatprep.subr.bf16.mxu0 0
      %1369 = vmatpush1.bf16.msra.mxu0 0
      %1370 = vmatprep.subr.bf16.mxu0 0
      %1371 = vmatpush1.bf16.msra.mxu0 0
      %1372 = vmatprep.subr.bf16.mxu0 0
      %1373 = vmatpush1.bf16.msra.mxu0 0
      %1374 = vmatprep.subr.bf16.mxu0 0
      %1375 = vmatpush1.bf16.msra.mxu0 0
      %1376 = vmatprep.subr.bf16.mxu0 0
      %1377 = vmatpush1.bf16.msra.mxu0 0
      %1378 = vmatprep.subr.bf16.mxu0 0
      %1379 = vmatpush1.bf16.msra.mxu0 0
      %1380 = vmatprep.subr.bf16.mxu0 0
      %1381 = vmatpush1.bf16.msra.mxu0 0
      %1382 = vmatprep.subr.bf16.mxu0 0
      %1383 = vmatpush1.bf16.msra.mxu0 0
      %1384 = vmatprep.subr.bf16.mxu0 0
      %1385 = vmatpush1.bf16.msra.mxu0 0
      %1386 = vmatprep.subr.bf16.mxu0 0
      %1387 = vmatpush1.bf16.msra.mxu0 0
      %1388 = vmatprep.subr.bf16.mxu0 0
      %1389 = vmatpush1.bf16.msra.mxu0 0
      %1390 = vmatprep.subr.bf16.mxu0 0
      %1391 = vmatpush1.bf16.msra.mxu0 0
      %1392 = vmatprep.subr.bf16.mxu0 0
      %1393 = vmatpush1.bf16.msra.mxu0 0
      %1394 = vmatprep.subr.bf16.mxu0 0
      %1395 = vmatpush1.bf16.msra.mxu0 0
      %1396 = vmatprep.subr.bf16.mxu0 0
      %1397 = vmatpush1.bf16.msra.mxu0 0
      %1398 = vmatprep.mubr.bf16.mxu0 0
      %1399 = vmatmul.mubr.bf16.gmra.mrb[0].mxu0 %v1364
      %v1400 = vpop.f32.mrb[0].mxu0
      %v1401 = vadd.f32 0.0, %v1400
      %v1402 = vpop.f32.mrb[0].mxu0
      %v1403 = vpop.f32.mrb[0].mxu0
      %v1404 = vadd.f32 0.0, %v1403
      %v1405 = vpop.f32.mrb[0].mxu0
      %1406 = vdwg.mxu0
      %1407 = vrot.lane.b32.xlu0 %v1155, 112
      %v1408 = vpop.permute.xlu0 %1407
      %1409 = vrot.lane.b32.xlu0 %v1157, 80
      %v1410 = vpop.permute.xlu0 %1409
      %v1412 = vsel %vm1166, %v1408, 0
      %v1415 = vsel %vm1166, %v1410, 0
      %1417 = vmatprep.subr.bf16.mxu0 0
      %1418 = vmatpush1.bf16.xpose.msra.mxu0 %v1415
      %1419 = vmatprep.subr.bf16.mxu0 0
      %1420 = vmatpush1.bf16.xpose.msra.mxu0 0
      %1421 = vmatprep.subr.bf16.mxu0 0
      %1422 = vmatpush1.bf16.xpose.msra.mxu0 0
      %1423 = vmatprep.subr.bf16.mxu0 0
      %1424 = vmatpush1.bf16.xpose.msra.mxu0 0
      %1425 = vmatprep.subr.bf16.mxu0 0
      %1426 = vmatpush1.bf16.xpose.msra.mxu0 0
      %1427 = vmatprep.subr.bf16.mxu0 0
      %1428 = vmatpush1.bf16.xpose.msra.mxu0 0
      %1429 = vmatprep.subr.bf16.mxu0 0
      %1430 = vmatpush1.bf16.xpose.msra.mxu0 0
      %1431 = vmatprep.subr.bf16.mxu0 0
      %1432 = vmatpush1.bf16.xpose.msra.mxu0 0
      %1433 = vmatprep.subr.bf16.mxu0 0
      %1434 = vmatpush1.bf16.xpose.msra.mxu0 0
      %1435 = vmatprep.subr.bf16.mxu0 0
      %1436 = vmatpush1.bf16.xpose.msra.mxu0 0
      %1437 = vmatprep.subr.bf16.mxu0 0
      %1438 = vmatpush1.bf16.xpose.msra.mxu0 0
      %1439 = vmatprep.subr.bf16.mxu0 0
      %1440 = vmatpush1.bf16.xpose.msra.mxu0 0
      %1441 = vmatprep.subr.bf16.mxu0 0
      %1442 = vmatpush1.bf16.xpose.msra.mxu0 0
      %1443 = vmatprep.subr.bf16.mxu0 0
      %1444 = vmatpush1.bf16.xpose.msra.mxu0 0
      %1445 = vmatprep.subr.bf16.mxu0 0
      %1446 = vmatpush1.bf16.xpose.msra.mxu0 0
      %1447 = vmatprep.subr.bf16.mxu0 0
      %1448 = vmatpush1.bf16.xpose.msra.mxu0 0
      %1449 = vmatprep.mubr.bf16.mxu0 0
      %1450 = vmatmul.mubr.bf16.gmra.mrb[0].mxu0 %v1412
      %v1451 = vpop.f32.mrb[0].mxu0
      %v1452 = vadd.f32 %v1162, %v1451
      %v1453 = vpop.f32.mrb[0].mxu0
      %v1454 = vpop.f32.mrb[0].mxu0
      %v1455 = vadd.f32 %v1162, %v1454
      %v1456 = vpop.f32.mrb[0].mxu0
      %1457 = vdwg.mxu0
      %v1458 = vsel %vm1214, %v1452, -inf
      %1459 = vmax.xlane.f32.xlu0 %v1458
      %v1460 = vpop.xlane.xlu0 %1459
      %v1461 = vsel %vm1214, %v1455, -inf
      %1462 = vmax.xlane.f32.xlu0 %v1461
      %v1463 = vpop.xlane.xlu0 %1462
      %v1464 = vsub.f32 %v1452, %v1460
      %v1465 = vsub.f32 %v1455, %v1463
      %v1466 = vmul.f32 %v1464, 1.442695
      %v1467 = vpow.pop %v1466
      %v1468 = vmul.f32 %v1465, 1.442695
      %v1469 = vpow.pop %v1468
      %v1470 = vsel %vm1214, %v1467, 0.0
      %1471 = vadd.xlane.f32.xlu0 %v1470
      %v1472 = vpop.xlane.xlu0 %1471
      %v1473 = vsel %vm1214, %v1469, 0.0
      %1474 = vadd.xlane.f32.xlu0 %v1473
      %v1475 = vpop.xlane.xlu0 %1474
      %v1476 = vrcp.pop %v1472
      %v1477 = vrcp.pop %v1475
      %v1478 = vmul.f32 %v1467, %v1476
      %v1479 = vmul.f32 %v1469, %v1477
      %v1480 = vpack.c.bf16 %v1479, %v1478
      %1481 = vrot.lane.b32.xlu0 %v1157, 48
      %v1482 = vpop.permute.xlu0 %1481
      %v1485 = vsel %vm1214, %v1480, 0
      %1487 = vmatprep.subr.bf16.mxu0 0
      %1488 = vmatpush1.bf16.msra.mxu0 %v1482
      %1489 = vmatprep.subr.bf16.mxu0 0
      %1490 = vmatpush1.bf16.msra.mxu0 0
      %1491 = vmatprep.subr.bf16.mxu0 0
      %1492 = vmatpush1.bf16.msra.mxu0 0
      %1493 = vmatprep.subr.bf16.mxu0 0
      %1494 = vmatpush1.bf16.msra.mxu0 0
      %1495 = vmatprep.subr.bf16.mxu0 0
      %1496 = vmatpush1.bf16.msra.mxu0 0
      %1497 = vmatprep.subr.bf16.mxu0 0
      %1498 = vmatpush1.bf16.msra.mxu0 0
      %1499 = vmatprep.subr.bf16.mxu0 0
      %1500 = vmatpush1.bf16.msra.mxu0 0
      %1501 = vmatprep.subr.bf16.mxu0 0
      %1502 = vmatpush1.bf16.msra.mxu0 0
      %1503 = vmatprep.subr.bf16.mxu0 0
      %1504 = vmatpush1.bf16.msra.mxu0 0
      %1505 = vmatprep.subr.bf16.mxu0 0
      %1506 = vmatpush1.bf16.msra.mxu0 0
      %1507 = vmatprep.subr.bf16.mxu0 0
      %1508 = vmatpush1.bf16.msra.mxu0 0
      %1509 = vmatprep.subr.bf16.mxu0 0
      %1510 = vmatpush1.bf16.msra.mxu0 0
      %1511 = vmatprep.subr.bf16.mxu0 0
      %1512 = vmatpush1.bf16.msra.mxu0 0
      %1513 = vmatprep.subr.bf16.mxu0 0
      %1514 = vmatpush1.bf16.msra.mxu0 0
      %1515 = vmatprep.subr.bf16.mxu0 0
      %1516 = vmatpush1.bf16.msra.mxu0 0
      %1517 = vmatprep.subr.bf16.mxu0 0
      %1518 = vmatpush1.bf16.msra.mxu0 0
      %1519 = vmatprep.mubr.bf16.mxu0 0
      %1520 = vmatmul.mubr.bf16.gmra.mrb[0].mxu0 %v1485
      %v1521 = vpop.f32.mrb[0].mxu0
      %v1522 = vadd.f32 0.0, %v1521
      %v1523 = vpop.f32.mrb[0].mxu0
      %v1524 = vpop.f32.mrb[0].mxu0
      %v1525 = vadd.f32 0.0, %v1524
      %v1526 = vpop.f32.mrb[0].mxu0
      %1527 = vdwg.mxu0
      %1528 = vrot.lane.b32.xlu0 %v1155, 104
      %v1529 = vpop.permute.xlu0 %1528
      %1530 = vrot.lane.b32.xlu0 %v1157, 72
      %v1531 = vpop.permute.xlu0 %1530
      %v1533 = vsel %vm1166, %v1529, 0
      %v1536 = vsel %vm1166, %v1531, 0
      %1538 = vmatprep.subr.bf16.mxu0 0
      %1539 = vmatpush1.bf16.xpose.msra.mxu0 %v1536
      %1540 = vmatprep.subr.bf16.mxu0 0
      %1541 = vmatpush1.bf16.xpose.msra.mxu0 0
      %1542 = vmatprep.subr.bf16.mxu0 0
      %1543 = vmatpush1.bf16.xpose.msra.mxu0 0
      %1544 = vmatprep.subr.bf16.mxu0 0
      %1545 = vmatpush1.bf16.xpose.msra.mxu0 0
      %1546 = vmatprep.subr.bf16.mxu0 0
      %1547 = vmatpush1.bf16.xpose.msra.mxu0 0
      %1548 = vmatprep.subr.bf16.mxu0 0
      %1549 = vmatpush1.bf16.xpose.msra.mxu0 0
      %1550 = vmatprep.subr.bf16.mxu0 0
      %1551 = vmatpush1.bf16.xpose.msra.mxu0 0
      %1552 = vmatprep.subr.bf16.mxu0 0
      %1553 = vmatpush1.bf16.xpose.msra.mxu0 0
      %1554 = vmatprep.subr.bf16.mxu0 0
      %1555 = vmatpush1.bf16.xpose.msra.mxu0 0
      %1556 = vmatprep.subr.bf16.mxu0 0
      %1557 = vmatpush1.bf16.xpose.msra.mxu0 0
      %1558 = vmatprep.subr.bf16.mxu0 0
      %1559 = vmatpush1.bf16.xpose.msra.mxu0 0
      %1560 = vmatprep.subr.bf16.mxu0 0
      %1561 = vmatpush1.bf16.xpose.msra.mxu0 0
      %1562 = vmatprep.subr.bf16.mxu0 0
      %1563 = vmatpush1.bf16.xpose.msra.mxu0 0
      %1564 = vmatprep.subr.bf16.mxu0 0
      %1565 = vmatpush1.bf16.xpose.msra.mxu0 0
      %1566 = vmatprep.subr.bf16.mxu0 0
      %1567 = vmatpush1.bf16.xpose.msra.mxu0 0
      %1568 = vmatprep.subr.bf16.mxu0 0
      %1569 = vmatpush1.bf16.xpose.msra.mxu0 0
      %1570 = vmatprep.mubr.bf16.mxu0 0
      %1571 = vmatmul.mubr.bf16.gmra.mrb[0].mxu0 %v1533
      %v1572 = vpop.f32.mrb[0].mxu0
      %v1573 = vadd.f32 %v1162, %v1572
      %v1574 = vpop.f32.mrb[0].mxu0
      %v1575 = vpop.f32.mrb[0].mxu0
      %v1576 = vadd.f32 %v1162, %v1575
      %v1577 = vpop.f32.mrb[0].mxu0
      %1578 = vdwg.mxu0
      %v1579 = vsel %vm1214, %v1573, -inf
      %1580 = vmax.xlane.f32.xlu0 %v1579
      %v1581 = vpop.xlane.xlu0 %1580
      %v1582 = vsel %vm1214, %v1576, -inf
      %1583 = vmax.xlane.f32.xlu0 %v1582
      %v1584 = vpop.xlane.xlu0 %1583
      %v1585 = vsub.f32 %v1573, %v1581
      %v1586 = vsub.f32 %v1576, %v1584
      %v1587 = vmul.f32 %v1585, 1.442695
      %v1588 = vpow.pop %v1587
      %v1589 = vmul.f32 %v1586, 1.442695
      %v1590 = vpow.pop %v1589
      %v1591 = vsel %vm1214, %v1588, 0.0
      %1592 = vadd.xlane.f32.xlu0 %v1591
      %v1593 = vpop.xlane.xlu0 %1592
      %v1594 = vsel %vm1214, %v1590, 0.0
      %1595 = vadd.xlane.f32.xlu0 %v1594
      %v1596 = vpop.xlane.xlu0 %1595
      %v1597 = vrcp.pop %v1593
      %v1598 = vrcp.pop %v1596
      %v1599 = vmul.f32 %v1588, %v1597
      %v1600 = vmul.f32 %v1590, %v1598
      %v1601 = vpack.c.bf16 %v1600, %v1599
      %1602 = vrot.lane.b32.xlu0 %v1157, 40
      %v1603 = vpop.permute.xlu0 %1602
      %v1606 = vsel %vm1214, %v1601, 0
      %1608 = vmatprep.subr.bf16.mxu0 0
      %1609 = vmatpush1.bf16.msra.mxu0 %v1603
      %1610 = vmatprep.subr.bf16.mxu0 0
      %1611 = vmatpush1.bf16.msra.mxu0 0
      %1612 = vmatprep.subr.bf16.mxu0 0
      %1613 = vmatpush1.bf16.msra.mxu0 0
      %1614 = vmatprep.subr.bf16.mxu0 0
      %1615 = vmatpush1.bf16.msra.mxu0 0
      %1616 = vmatprep.subr.bf16.mxu0 0
      %1617 = vmatpush1.bf16.msra.mxu0 0
      %1618 = vmatprep.subr.bf16.mxu0 0
      %1619 = vmatpush1.bf16.msra.mxu0 0
      %1620 = vmatprep.subr.bf16.mxu0 0
      %1621 = vmatpush1.bf16.msra.mxu0 0
      %1622 = vmatprep.subr.bf16.mxu0 0
      %1623 = vmatpush1.bf16.msra.mxu0 0
      %1624 = vmatprep.subr.bf16.mxu0 0
      %1625 = vmatpush1.bf16.msra.mxu0 0
      %1626 = vmatprep.subr.bf16.mxu0 0
      %1627 = vmatpush1.bf16.msra.mxu0 0
      %1628 = vmatprep.subr.bf16.mxu0 0
      %1629 = vmatpush1.bf16.msra.mxu0 0
      %1630 = vmatprep.subr.bf16.mxu0 0
      %1631 = vmatpush1.bf16.msra.mxu0 0
      %1632 = vmatprep.subr.bf16.mxu0 0
      %1633 = vmatpush1.bf16.msra.mxu0 0
      %1634 = vmatprep.subr.bf16.mxu0 0
      %1635 = vmatpush1.bf16.msra.mxu0 0
      %1636 = vmatprep.subr.bf16.mxu0 0
      %1637 = vmatpush1.bf16.msra.mxu0 0
      %1638 = vmatprep.subr.bf16.mxu0 0
      %1639 = vmatpush1.bf16.msra.mxu0 0
      %1640 = vmatprep.mubr.bf16.mxu0 0
      %1641 = vmatmul.mubr.bf16.gmra.mrb[0].mxu0 %v1606
      %v1642 = vpop.f32.mrb[0].mxu0
      %v1643 = vadd.f32 0.0, %v1642
      %v1644 = vpop.f32.mrb[0].mxu0
      %v1645 = vpop.f32.mrb[0].mxu0
      %v1646 = vadd.f32 0.0, %v1645
      %v1647 = vpop.f32.mrb[0].mxu0
      %1648 = vdwg.mxu0
      %1651 = vrot.lane.b32.xlu0 %v1401, 8
      %v1652 = vpop.permute.xlu0 %1651
      %1653 = vrot.lane.b32.xlu0 %v1404, 8
      %v1654 = vpop.permute.xlu0 %1653
      %1659 = vrot.lane.b32.xlu0 %v1522, 16
      %v1660 = vpop.permute.xlu0 %1659
      %1661 = vrot.lane.b32.xlu0 %v1525, 16
      %v1662 = vpop.permute.xlu0 %1661
      %1667 = vrot.lane.b32.xlu0 %v1643, 24
      %v1668 = vpop.permute.xlu0 %1667
      %1669 = vrot.lane.b32.xlu0 %v1646, 24
      %v1670 = vpop.permute.xlu0 %1669
      %v1673 = vsel %vm1166, %v1279, %v1652
      %v1674 = vsel %vm1166, %v1282, %v1654
      %v1675 = vsel %vm1214, %v1673, %v1660
      %v1676 = vsel %vm1214, %v1674, %v1662
      %vm1677 = vcmask 195584
      %v1678 = vsel %vm1677, %v1675, %v1668
      %v1679 = vsel %vm1677, %v1676, %v1670
      %v1680 = vlaneseq
      %v1681 = vshrl.u32 %v1680, 7
      %v1682 = vsub.s32 0, %v1681
      %v1683 = vrot.slane %v1001, %v1682
      %1685 = vrot.lane.b32.xlu0 %v1158, 96
      %v1686 = vpop.permute.xlu0 %1685
      %v1688 = vsel %vm1166, %v1156, 0
      %v1691 = vsel %vm1166, %v1686, 0
      %1693 = vmatprep.subr.bf16.mxu0 0
      %1694 = vmatpush1.bf16.xpose.msra.mxu0 %v1691
      %1695 = vmatprep.subr.bf16.mxu0 0
      %1696 = vmatpush1.bf16.xpose.msra.mxu0 0
      %1697 = vmatprep.subr.bf16.mxu0 0
      %1698 = vmatpush1.bf16.xpose.msra.mxu0 0
      %1699 = vmatprep.subr.bf16.mxu0 0
      %1700 = vmatpush1.bf16.xpose.msra.mxu0 0
      %1701 = vmatprep.subr.bf16.mxu0 0
      %1702 = vmatpush1.bf16.xpose.msra.mxu0 0
      %1703 = vmatprep.subr.bf16.mxu0 0
      %1704 = vmatpush1.bf16.xpose.msra.mxu0 0
      %1705 = vmatprep.subr.bf16.mxu0 0
      %1706 = vmatpush1.bf16.xpose.msra.mxu0 0
      %1707 = vmatprep.subr.bf16.mxu0 0
      %1708 = vmatpush1.bf16.xpose.msra.mxu0 0
      %1709 = vmatprep.subr.bf16.mxu0 0
      %1710 = vmatpush1.bf16.xpose.msra.mxu0 0
      %1711 = vmatprep.subr.bf16.mxu0 0
      %1712 = vmatpush1.bf16.xpose.msra.mxu0 0
      %1713 = vmatprep.subr.bf16.mxu0 0
      %1714 = vmatpush1.bf16.xpose.msra.mxu0 0
      %1715 = vmatprep.subr.bf16.mxu0 0
      %1716 = vmatpush1.bf16.xpose.msra.mxu0 0
      %1717 = vmatprep.subr.bf16.mxu0 0
      %1718 = vmatpush1.bf16.xpose.msra.mxu0 0
      %1719 = vmatprep.subr.bf16.mxu0 0
      %1720 = vmatpush1.bf16.xpose.msra.mxu0 0
      %1721 = vmatprep.subr.bf16.mxu0 0
      %1722 = vmatpush1.bf16.xpose.msra.mxu0 0
      %1723 = vmatprep.subr.bf16.mxu0 0
      %1724 = vmatpush1.bf16.xpose.msra.mxu0 0
      %1725 = vmatprep.mubr.bf16.mxu0 0
      %1726 = vmatmul.mubr.bf16.gmra.mrb[0].mxu0 %v1688
      %v1727 = vpop.f32.mrb[0].mxu0
      %v1728 = vadd.f32 %v1683, %v1727
      %v1729 = vpop.f32.mrb[0].mxu0
      %v1730 = vpop.f32.mrb[0].mxu0
      %v1731 = vadd.f32 %v1683, %v1730
      %v1732 = vpop.f32.mrb[0].mxu0
      %1733 = vdwg.mxu0
      %v1734 = vsel %vm1214, %v1728, -inf
      %1735 = vmax.xlane.f32.xlu0 %v1734
      %v1736 = vpop.xlane.xlu0 %1735
      %v1737 = vsel %vm1214, %v1731, -inf
      %1738 = vmax.xlane.f32.xlu0 %v1737
      %v1739 = vpop.xlane.xlu0 %1738
      %v1740 = vsub.f32 %v1728, %v1736
      %v1741 = vsub.f32 %v1731, %v1739
      %v1742 = vmul.f32 %v1740, 1.442695
      %v1743 = vpow.pop %v1742
      %v1744 = vmul.f32 %v1741, 1.442695
      %v1745 = vpow.pop %v1744
      %v1746 = vsel %vm1214, %v1743, 0.0
      %1747 = vadd.xlane.f32.xlu0 %v1746
      %v1748 = vpop.xlane.xlu0 %1747
      %v1749 = vsel %vm1214, %v1745, 0.0
      %1750 = vadd.xlane.f32.xlu0 %v1749
      %v1751 = vpop.xlane.xlu0 %1750
      %v1752 = vrcp.pop %v1748
      %v1753 = vrcp.pop %v1751
      %v1754 = vmul.f32 %v1743, %v1752
      %v1755 = vmul.f32 %v1745, %v1753
      %v1756 = vpack.c.bf16 %v1755, %v1754
      %1757 = vrot.lane.b32.xlu0 %v1158, 64
      %v1758 = vpop.permute.xlu0 %1757
      %v1761 = vsel %vm1214, %v1756, 0
      %1763 = vmatprep.subr.bf16.mxu0 0
      %1764 = vmatpush1.bf16.msra.mxu0 %v1758
      %1765 = vmatprep.subr.bf16.mxu0 0
      %1766 = vmatpush1.bf16.msra.mxu0 0
      %1767 = vmatprep.subr.bf16.mxu0 0
      %1768 = vmatpush1.bf16.msra.mxu0 0
      %1769 = vmatprep.subr.bf16.mxu0 0
      %1770 = vmatpush1.bf16.msra.mxu0 0
      %1771 = vmatprep.subr.bf16.mxu0 0
      %1772 = vmatpush1.bf16.msra.mxu0 0
      %1773 = vmatprep.subr.bf16.mxu0 0
      %1774 = vmatpush1.bf16.msra.mxu0 0
      %1775 = vmatprep.subr.bf16.mxu0 0
      %1776 = vmatpush1.bf16.msra.mxu0 0
      %1777 = vmatprep.subr.bf16.mxu0 0
      %1778 = vmatpush1.bf16.msra.mxu0 0
      %1779 = vmatprep.subr.bf16.mxu0 0
      %1780 = vmatpush1.bf16.msra.mxu0 0
      %1781 = vmatprep.subr.bf16.mxu0 0
      %1782 = vmatpush1.bf16.msra.mxu0 0
      %1783 = vmatprep.subr.bf16.mxu0 0
      %1784 = vmatpush1.bf16.msra.mxu0 0
      %1785 = vmatprep.subr.bf16.mxu0 0
      %1786 = vmatpush1.bf16.msra.mxu0 0
      %1787 = vmatprep.subr.bf16.mxu0 0
      %1788 = vmatpush1.bf16.msra.mxu0 0
      %1789 = vmatprep.subr.bf16.mxu0 0
      %1790 = vmatpush1.bf16.msra.mxu0 0
      %1791 = vmatprep.subr.bf16.mxu0 0
      %1792 = vmatpush1.bf16.msra.mxu0 0
      %1793 = vmatprep.subr.bf16.mxu0 0
      %1794 = vmatpush1.bf16.msra.mxu0 0
      %1795 = vmatprep.mubr.bf16.mxu0 0
      %1796 = vmatmul.mubr.bf16.gmra.mrb[0].mxu0 %v1761
      %v1797 = vpop.f32.mrb[0].mxu0
      %v1798 = vadd.f32 0.0, %v1797
      %v1799 = vpop.f32.mrb[0].mxu0
      %v1800 = vpop.f32.mrb[0].mxu0
      %v1801 = vadd.f32 0.0, %v1800
      %v1802 = vpop.f32.mrb[0].mxu0
      %1803 = vdwg.mxu0
      %1805 = vrot.lane.b32.xlu0 %v1156, 120
      %v1806 = vpop.permute.xlu0 %1805
      %1807 = vrot.lane.b32.xlu0 %v1158, 88
      %v1808 = vpop.permute.xlu0 %1807
      %v1810 = vsel %vm1166, %v1806, 0
      %v1813 = vsel %vm1166, %v1808, 0
      %1815 = vmatprep.subr.bf16.mxu0 0
      %1816 = vmatpush1.bf16.xpose.msra.mxu0 %v1813
      %1817 = vmatprep.subr.bf16.mxu0 0
      %1818 = vmatpush1.bf16.xpose.msra.mxu0 0
      %1819 = vmatprep.subr.bf16.mxu0 0
      %1820 = vmatpush1.bf16.xpose.msra.mxu0 0
      %1821 = vmatprep.subr.bf16.mxu0 0
      %1822 = vmatpush1.bf16.xpose.msra.mxu0 0
      %1823 = vmatprep.subr.bf16.mxu0 0
      %1824 = vmatpush1.bf16.xpose.msra.mxu0 0
      %1825 = vmatprep.subr.bf16.mxu0 0
      %1826 = vmatpush1.bf16.xpose.msra.mxu0 0
      %1827 = vmatprep.subr.bf16.mxu0 0
      %1828 = vmatpush1.bf16.xpose.msra.mxu0 0
      %1829 = vmatprep.subr.bf16.mxu0 0
      %1830 = vmatpush1.bf16.xpose.msra.mxu0 0
      %1831 = vmatprep.subr.bf16.mxu0 0
      %1832 = vmatpush1.bf16.xpose.msra.mxu0 0
      %1833 = vmatprep.subr.bf16.mxu0 0
      %1834 = vmatpush1.bf16.xpose.msra.mxu0 0
      %1835 = vmatprep.subr.bf16.mxu0 0
      %1836 = vmatpush1.bf16.xpose.msra.mxu0 0
      %1837 = vmatprep.subr.bf16.mxu0 0
      %1838 = vmatpush1.bf16.xpose.msra.mxu0 0
      %1839 = vmatprep.subr.bf16.mxu0 0
      %1840 = vmatpush1.bf16.xpose.msra.mxu0 0
      %1841 = vmatprep.subr.bf16.mxu0 0
      %1842 = vmatpush1.bf16.xpose.msra.mxu0 0
      %1843 = vmatprep.subr.bf16.mxu0 0
      %1844 = vmatpush1.bf16.xpose.msra.mxu0 0
      %1845 = vmatprep.subr.bf16.mxu0 0
      %1846 = vmatpush1.bf16.xpose.msra.mxu0 0
      %1847 = vmatprep.mubr.bf16.mxu0 0
      %1848 = vmatmul.mubr.bf16.gmra.mrb[0].mxu0 %v1810
      %v1849 = vpop.f32.mrb[0].mxu0
      %v1850 = vadd.f32 %v1683, %v1849
      %v1851 = vpop.f32.mrb[0].mxu0
      %v1852 = vpop.f32.mrb[0].mxu0
      %v1853 = vadd.f32 %v1683, %v1852
      %v1854 = vpop.f32.mrb[0].mxu0
      %1855 = vdwg.mxu0
      %v1856 = vsel %vm1214, %v1850, -inf
      %1857 = vmax.xlane.f32.xlu0 %v1856
      %v1858 = vpop.xlane.xlu0 %1857
      %v1859 = vsel %vm1214, %v1853, -inf
      %1860 = vmax.xlane.f32.xlu0 %v1859
      %v1861 = vpop.xlane.xlu0 %1860
      %v1862 = vsub.f32 %v1850, %v1858
      %v1863 = vsub.f32 %v1853, %v1861
      %v1864 = vmul.f32 %v1862, 1.442695
      %v1865 = vpow.pop %v1864
      %v1866 = vmul.f32 %v1863, 1.442695
      %v1867 = vpow.pop %v1866
      %v1868 = vsel %vm1214, %v1865, 0.0
      %1869 = vadd.xlane.f32.xlu0 %v1868
      %v1870 = vpop.xlane.xlu0 %1869
      %v1871 = vsel %vm1214, %v1867, 0.0
      %1872 = vadd.xlane.f32.xlu0 %v1871
      %v1873 = vpop.xlane.xlu0 %1872
      %v1874 = vrcp.pop %v1870
      %v1875 = vrcp.pop %v1873
      %v1876 = vmul.f32 %v1865, %v1874
      %v1877 = vmul.f32 %v1867, %v1875
      %v1878 = vpack.c.bf16 %v1877, %v1876
      %1879 = vrot.lane.b32.xlu0 %v1158, 56
      %v1880 = vpop.permute.xlu0 %1879
      %v1883 = vsel %vm1214, %v1878, 0
      %1885 = vmatprep.subr.bf16.mxu0 0
      %1886 = vmatpush1.bf16.msra.mxu0 %v1880
      %1887 = vmatprep.subr.bf16.mxu0 0
      %1888 = vmatpush1.bf16.msra.mxu0 0
      %1889 = vmatprep.subr.bf16.mxu0 0
      %1890 = vmatpush1.bf16.msra.mxu0 0
      %1891 = vmatprep.subr.bf16.mxu0 0
      %1892 = vmatpush1.bf16.msra.mxu0 0
      %1893 = vmatprep.subr.bf16.mxu0 0
      %1894 = vmatpush1.bf16.msra.mxu0 0
      %1895 = vmatprep.subr.bf16.mxu0 0
      %1896 = vmatpush1.bf16.msra.mxu0 0
      %1897 = vmatprep.subr.bf16.mxu0 0
      %1898 = vmatpush1.bf16.msra.mxu0 0
      %1899 = vmatprep.subr.bf16.mxu0 0
      %1900 = vmatpush1.bf16.msra.mxu0 0
      %1901 = vmatprep.subr.bf16.mxu0 0
      %1902 = vmatpush1.bf16.msra.mxu0 0
      %1903 = vmatprep.subr.bf16.mxu0 0
      %1904 = vmatpush1.bf16.msra.mxu0 0
      %1905 = vmatprep.subr.bf16.mxu0 0
      %1906 = vmatpush1.bf16.msra.mxu0 0
      %1907 = vmatprep.subr.bf16.mxu0 0
      %1908 = vmatpush1.bf16.msra.mxu0 0
      %1909 = vmatprep.subr.bf16.mxu0 0
      %1910 = vmatpush1.bf16.msra.mxu0 0
      %1911 = vmatprep.subr.bf16.mxu0 0
      %1912 = vmatpush1.bf16.msra.mxu0 0
      %1913 = vmatprep.subr.bf16.mxu0 0
      %1914 = vmatpush1.bf16.msra.mxu0 0
      %1915 = vmatprep.subr.bf16.mxu0 0
      %1916 = vmatpush1.bf16.msra.mxu0 0
      %1917 = vmatprep.mubr.bf16.mxu0 0
      %1918 = vmatmul.mubr.bf16.gmra.mrb[0].mxu0 %v1883
      %v1919 = vpop.f32.mrb[0].mxu0
      %v1920 = vadd.f32 0.0, %v1919
      %v1921 = vpop.f32.mrb[0].mxu0
      %v1922 = vpop.f32.mrb[0].mxu0
      %v1923 = vadd.f32 0.0, %v1922
      %v1924 = vpop.f32.mrb[0].mxu0
      %1925 = vdwg.mxu0
      %1926 = vrot.lane.b32.xlu0 %v1156, 112
      %v1927 = vpop.permute.xlu0 %1926
      %1928 = vrot.lane.b32.xlu0 %v1158, 80
      %v1929 = vpop.permute.xlu0 %1928
      %v1931 = vsel %vm1166, %v1927, 0
      %v1934 = vsel %vm1166, %v1929, 0
      %1936 = vmatprep.subr.bf16.mxu0 0
      %1937 = vmatpush1.bf16.xpose.msra.mxu0 %v1934
      %1938 = vmatprep.subr.bf16.mxu0 0
      %1939 = vmatpush1.bf16.xpose.msra.mxu0 0
      %1940 = vmatprep.subr.bf16.mxu0 0
      %1941 = vmatpush1.bf16.xpose.msra.mxu0 0
      %1942 = vmatprep.subr.bf16.mxu0 0
      %1943 = vmatpush1.bf16.xpose.msra.mxu0 0
      %1944 = vmatprep.subr.bf16.mxu0 0
      %1945 = vmatpush1.bf16.xpose.msra.mxu0 0
      %1946 = vmatprep.subr.bf16.mxu0 0
      %1947 = vmatpush1.bf16.xpose.msra.mxu0 0
      %1948 = vmatprep.subr.bf16.mxu0 0
      %1949 = vmatpush1.bf16.xpose.msra.mxu0 0
      %1950 = vmatprep.subr.bf16.mxu0 0
      %1951 = vmatpush1.bf16.xpose.msra.mxu0 0
      %1952 = vmatprep.subr.bf16.mxu0 0
      %1953 = vmatpush1.bf16.xpose.msra.mxu0 0
      %1954 = vmatprep.subr.bf16.mxu0 0
      %1955 = vmatpush1.bf16.xpose.msra.mxu0 0
      %1956 = vmatprep.subr.bf16.mxu0 0
      %1957 = vmatpush1.bf16.xpose.msra.mxu0 0
      %1958 = vmatprep.subr.bf16.mxu0 0
      %1959 = vmatpush1.bf16.xpose.msra.mxu0 0
      %1960 = vmatprep.subr.bf16.mxu0 0
      %1961 = vmatpush1.bf16.xpose.msra.mxu0 0
      %1962 = vmatprep.subr.bf16.mxu0 0
      %1963 = vmatpush1.bf16.xpose.msra.mxu0 0
      %1964 = vmatprep.subr.bf16.mxu0 0
      %1965 = vmatpush1.bf16.xpose.msra.mxu0 0
      %1966 = vmatprep.subr.bf16.mxu0 0
      %1967 = vmatpush1.bf16.xpose.msra.mxu0 0
      %1968 = vmatprep.mubr.bf16.mxu0 0
      %1969 = vmatmul.mubr.bf16.gmra.mrb[0].mxu0 %v1931
      %v1970 = vpop.f32.mrb[0].mxu0
      %v1971 = vadd.f32 %v1683, %v1970
      %v1972 = vpop.f32.mrb[0].mxu0
      %v1973 = vpop.f32.mrb[0].mxu0
      %v1974 = vadd.f32 %v1683, %v1973
      %v1975 = vpop.f32.mrb[0].mxu0
      %1976 = vdwg.mxu0
      %v1977 = vsel %vm1214, %v1971, -inf
      %1978 = vmax.xlane.f32.xlu0 %v1977
      %v1979 = vpop.xlane.xlu0 %1978
      %v1980 = vsel %vm1214, %v1974, -inf
      %1981 = vmax.xlane.f32.xlu0 %v1980
      %v1982 = vpop.xlane.xlu0 %1981
      %v1983 = vsub.f32 %v1971, %v1979
      %v1984 = vsub.f32 %v1974, %v1982
      %v1985 = vmul.f32 %v1983, 1.442695
      %v1986 = vpow.pop %v1985
      %v1987 = vmul.f32 %v1984, 1.442695
      %v1988 = vpow.pop %v1987
      %v1989 = vsel %vm1214, %v1986, 0.0
      %1990 = vadd.xlane.f32.xlu0 %v1989
      %v1991 = vpop.xlane.xlu0 %1990
      %v1992 = vsel %vm1214, %v1988, 0.0
      %1993 = vadd.xlane.f32.xlu0 %v1992
      %v1994 = vpop.xlane.xlu0 %1993
      %v1995 = vrcp.pop %v1991
      %v1996 = vrcp.pop %v1994
      %v1997 = vmul.f32 %v1986, %v1995
      %v1998 = vmul.f32 %v1988, %v1996
      %v1999 = vpack.c.bf16 %v1998, %v1997
      %2000 = vrot.lane.b32.xlu0 %v1158, 48
      %v2001 = vpop.permute.xlu0 %2000
      %v2004 = vsel %vm1214, %v1999, 0
      %2006 = vmatprep.subr.bf16.mxu0 0
      %2007 = vmatpush1.bf16.msra.mxu0 %v2001
      %2008 = vmatprep.subr.bf16.mxu0 0
      %2009 = vmatpush1.bf16.msra.mxu0 0
      %2010 = vmatprep.subr.bf16.mxu0 0
      %2011 = vmatpush1.bf16.msra.mxu0 0
      %2012 = vmatprep.subr.bf16.mxu0 0
      %2013 = vmatpush1.bf16.msra.mxu0 0
      %2014 = vmatprep.subr.bf16.mxu0 0
      %2015 = vmatpush1.bf16.msra.mxu0 0
      %2016 = vmatprep.subr.bf16.mxu0 0
      %2017 = vmatpush1.bf16.msra.mxu0 0
      %2018 = vmatprep.subr.bf16.mxu0 0
      %2019 = vmatpush1.bf16.msra.mxu0 0
      %2020 = vmatprep.subr.bf16.mxu0 0
      %2021 = vmatpush1.bf16.msra.mxu0 0
      %2022 = vmatprep.subr.bf16.mxu0 0
      %2023 = vmatpush1.bf16.msra.mxu0 0
      %2024 = vmatprep.subr.bf16.mxu0 0
      %2025 = vmatpush1.bf16.msra.mxu0 0
      %2026 = vmatprep.subr.bf16.mxu0 0
      %2027 = vmatpush1.bf16.msra.mxu0 0
      %2028 = vmatprep.subr.bf16.mxu0 0
      %2029 = vmatpush1.bf16.msra.mxu0 0
      %2030 = vmatprep.subr.bf16.mxu0 0
      %2031 = vmatpush1.bf16.msra.mxu0 0
      %2032 = vmatprep.subr.bf16.mxu0 0
      %2033 = vmatpush1.bf16.msra.mxu0 0
      %2034 = vmatprep.subr.bf16.mxu0 0
      %2035 = vmatpush1.bf16.msra.mxu0 0
      %2036 = vmatprep.subr.bf16.mxu0 0
      %2037 = vmatpush1.bf16.msra.mxu0 0
      %2038 = vmatprep.mubr.bf16.mxu0 0
      %2039 = vmatmul.mubr.bf16.gmra.mrb[0].mxu0 %v2004
      %v2040 = vpop.f32.mrb[0].mxu0
      %v2041 = vadd.f32 0.0, %v2040
      %v2042 = vpop.f32.mrb[0].mxu0
      %v2043 = vpop.f32.mrb[0].mxu0
      %v2044 = vadd.f32 0.0, %v2043
      %v2045 = vpop.f32.mrb[0].mxu0
      %2046 = vdwg.mxu0
      %2047 = vrot.lane.b32.xlu0 %v1156, 104
      %v2048 = vpop.permute.xlu0 %2047
      %2049 = vrot.lane.b32.xlu0 %v1158, 72
      %v2050 = vpop.permute.xlu0 %2049
      %v2052 = vsel %vm1166, %v2048, 0
      %v2055 = vsel %vm1166, %v2050, 0
      %2057 = vmatprep.subr.bf16.mxu0 0
      %2058 = vmatpush1.bf16.xpose.msra.mxu0 %v2055
      %2059 = vmatprep.subr.bf16.mxu0 0
      %2060 = vmatpush1.bf16.xpose.msra.mxu0 0
      %2061 = vmatprep.subr.bf16.mxu0 0
      %2062 = vmatpush1.bf16.xpose.msra.mxu0 0
      %2063 = vmatprep.subr.bf16.mxu0 0
      %2064 = vmatpush1.bf16.xpose.msra.mxu0 0
      %2065 = vmatprep.subr.bf16.mxu0 0
      %2066 = vmatpush1.bf16.xpose.msra.mxu0 0
      %2067 = vmatprep.subr.bf16.mxu0 0
      %2068 = vmatpush1.bf16.xpose.msra.mxu0 0
      %2069 = vmatprep.subr.bf16.mxu0 0
      %2070 = vmatpush1.bf16.xpose.msra.mxu0 0
      %2071 = vmatprep.subr.bf16.mxu0 0
      %2072 = vmatpush1.bf16.xpose.msra.mxu0 0
      %2073 = vmatprep.subr.bf16.mxu0 0
      %2074 = vmatpush1.bf16.xpose.msra.mxu0 0
      %2075 = vmatprep.subr.bf16.mxu0 0
      %2076 = vmatpush1.bf16.xpose.msra.mxu0 0
      %2077 = vmatprep.subr.bf16.mxu0 0
      %2078 = vmatpush1.bf16.xpose.msra.mxu0 0
      %2079 = vmatprep.subr.bf16.mxu0 0
      %2080 = vmatpush1.bf16.xpose.msra.mxu0 0
      %2081 = vmatprep.subr.bf16.mxu0 0
      %2082 = vmatpush1.bf16.xpose.msra.mxu0 0
      %2083 = vmatprep.subr.bf16.mxu0 0
      %2084 = vmatpush1.bf16.xpose.msra.mxu0 0
      %2085 = vmatprep.subr.bf16.mxu0 0
      %2086 = vmatpush1.bf16.xpose.msra.mxu0 0
      %2087 = vmatprep.subr.bf16.mxu0 0
      %2088 = vmatpush1.bf16.xpose.msra.mxu0 0
      %2089 = vmatprep.mubr.bf16.mxu0 0
      %2090 = vmatmul.mubr.bf16.gmra.mrb[0].mxu0 %v2052
      %v2091 = vpop.f32.mrb[0].mxu0
      %v2092 = vadd.f32 %v1683, %v2091
      %v2093 = vpop.f32.mrb[0].mxu0
      %v2094 = vpop.f32.mrb[0].mxu0
      %v2095 = vadd.f32 %v1683, %v2094
      %v2096 = vpop.f32.mrb[0].mxu0
      %2097 = vdwg.mxu0
      %v2098 = vsel %vm1214, %v2092, -inf
      %2099 = vmax.xlane.f32.xlu0 %v2098
      %v2100 = vpop.xlane.xlu0 %2099
      %v2101 = vsel %vm1214, %v2095, -inf
      %2102 = vmax.xlane.f32.xlu0 %v2101
      %v2103 = vpop.xlane.xlu0 %2102
      %v2104 = vsub.f32 %v2092, %v2100
      %v2105 = vsub.f32 %v2095, %v2103
      %v2106 = vmul.f32 %v2104, 1.442695
      %v2107 = vpow.pop %v2106
      %v2108 = vmul.f32 %v2105, 1.442695
      %v2109 = vpow.pop %v2108
      %v2110 = vsel %vm1214, %v2107, 0.0
      %2111 = vadd.xlane.f32.xlu0 %v2110
      %v2112 = vpop.xlane.xlu0 %2111
      %v2113 = vsel %vm1214, %v2109, 0.0
      %2114 = vadd.xlane.f32.xlu0 %v2113
      %v2115 = vpop.xlane.xlu0 %2114
      %v2116 = vrcp.pop %v2112
      %v2117 = vrcp.pop %v2115
      %v2118 = vmul.f32 %v2107, %v2116
      %v2119 = vmul.f32 %v2109, %v2117
      %v2120 = vpack.c.bf16 %v2119, %v2118
      %2121 = vrot.lane.b32.xlu0 %v1158, 40
      %v2122 = vpop.permute.xlu0 %2121
      %v2125 = vsel %vm1214, %v2120, 0
      %2127 = vmatprep.subr.bf16.mxu0 0
      %2128 = vmatpush1.bf16.msra.mxu0 %v2122
      %2129 = vmatprep.subr.bf16.mxu0 0
      %2130 = vmatpush1.bf16.msra.mxu0 0
      %2131 = vmatprep.subr.bf16.mxu0 0
      %2132 = vmatpush1.bf16.msra.mxu0 0
      %2133 = vmatprep.subr.bf16.mxu0 0
      %2134 = vmatpush1.bf16.msra.mxu0 0
      %2135 = vmatprep.subr.bf16.mxu0 0
      %2136 = vmatpush1.bf16.msra.mxu0 0
      %2137 = vmatprep.subr.bf16.mxu0 0
      %2138 = vmatpush1.bf16.msra.mxu0 0
      %2139 = vmatprep.subr.bf16.mxu0 0
      %2140 = vmatpush1.bf16.msra.mxu0 0
      %2141 = vmatprep.subr.bf16.mxu0 0
      %2142 = vmatpush1.bf16.msra.mxu0 0
      %2143 = vmatprep.subr.bf16.mxu0 0
      %2144 = vmatpush1.bf16.msra.mxu0 0
      %2145 = vmatprep.subr.bf16.mxu0 0
      %2146 = vmatpush1.bf16.msra.mxu0 0
      %2147 = vmatprep.subr.bf16.mxu0 0
      %2148 = vmatpush1.bf16.msra.mxu0 0
      %2149 = vmatprep.subr.bf16.mxu0 0
      %2150 = vmatpush1.bf16.msra.mxu0 0
      %2151 = vmatprep.subr.bf16.mxu0 0
      %2152 = vmatpush1.bf16.msra.mxu0 0
      %2153 = vmatprep.subr.bf16.mxu0 0
      %2154 = vmatpush1.bf16.msra.mxu0 0
      %2155 = vmatprep.subr.bf16.mxu0 0
      %2156 = vmatpush1.bf16.msra.mxu0 0
      %2157 = vmatprep.subr.bf16.mxu0 0
      %2158 = vmatpush1.bf16.msra.mxu0 0
      %2159 = vmatprep.mubr.bf16.mxu0 0
      %2160 = vmatmul.mubr.bf16.gmra.mrb[0].mxu0 %v2125
      %v2161 = vpop.f32.mrb[0].mxu0
      %v2162 = vadd.f32 0.0, %v2161
      %v2163 = vpop.f32.mrb[0].mxu0
      %v2164 = vpop.f32.mrb[0].mxu0
      %v2165 = vadd.f32 0.0, %v2164
      %v2166 = vpop.f32.mrb[0].mxu0
      %2167 = vdwg.mxu0
      %2170 = vrot.lane.b32.xlu0 %v1920, 8
      %v2171 = vpop.permute.xlu0 %2170
      %2172 = vrot.lane.b32.xlu0 %v1923, 8
      %v2173 = vpop.permute.xlu0 %2172
      %2178 = vrot.lane.b32.xlu0 %v2041, 16
      %v2179 = vpop.permute.xlu0 %2178
      %2180 = vrot.lane.b32.xlu0 %v2044, 16
      %v2181 = vpop.permute.xlu0 %2180
      %2186 = vrot.lane.b32.xlu0 %v2162, 24
      %v2187 = vpop.permute.xlu0 %2186
      %2188 = vrot.lane.b32.xlu0 %v2165, 24
      %v2189 = vpop.permute.xlu0 %2188
      %v2192 = vsel %vm1166, %v1798, %v2171
      %v2193 = vsel %vm1166, %v1801, %v2173
      %v2194 = vsel %vm1214, %v2192, %v2179
      %v2195 = vsel %vm1214, %v2193, %v2181
      %v2196 = vsel %vm1677, %v2194, %v2187
      %v2197 = vsel %vm1677, %v2195, %v2189
      %v2198 = vpack.c.bf16 %v1679, %v1678
      %v2199 = vpack.c.bf16 %v2197, %v2196
      %v2201 = vlaneseq
      %v2202 = vshrl.u32 %v2201, 7
      %v2203 = vsub.s32 0, %v2202
      %v2204 = vrot.slane %v959, %v2203
      %v2210 = vunpack.c.l.b16 %v955
      %v2211 = vunpack.c.l.b16 %v956
      %v2212 = vunpack.c.l.b16 %v957
      %v2213 = vunpack.c.l.b16 %v958
      %v2214 = vpack.c.b16 %v2211, %v2210
      %v2215 = vpack.c.b16 %v2213, %v2212
      %v2219 = vsel %vm1006, %v2198, 0
      %v2222 = vsel %vm1006, %v2199, 0
      %2224 = vmatprep.subr.bf16.mxu0 0
      %2225 = vmatpush1.bf16.msra.mxu0 %v2214
      %2226 = vmatprep.subr.bf16.mxu0 0
      %2227 = vmatpush1.bf16.msra.mxu0 %v2215
      %2228 = vmatprep.subr.bf16.mxu0 0
      %2229 = vmatpush1.bf16.msra.mxu0 0
      %2230 = vmatprep.subr.bf16.mxu0 0
      %2231 = vmatpush1.bf16.msra.mxu0 0
      %2232 = vmatprep.subr.bf16.mxu0 0
      %2233 = vmatpush1.bf16.msra.mxu0 0
      %2234 = vmatprep.subr.bf16.mxu0 0
      %2235 = vmatpush1.bf16.msra.mxu0 0
      %2236 = vmatprep.subr.bf16.mxu0 0
      %2237 = vmatpush1.bf16.msra.mxu0 0
      %2238 = vmatprep.subr.bf16.mxu0 0
      %2239 = vmatpush1.bf16.msra.mxu0 0
      %2240 = vmatprep.subr.bf16.mxu0 0
      %2241 = vmatpush1.bf16.msra.mxu0 0
      %2242 = vmatprep.subr.bf16.mxu0 0
      %2243 = vmatpush1.bf16.msra.mxu0 0
      %2244 = vmatprep.subr.bf16.mxu0 0
      %2245 = vmatpush1.bf16.msra.mxu0 0
      %2246 = vmatprep.subr.bf16.mxu0 0
      %2247 = vmatpush1.bf16.msra.mxu0 0
      %2248 = vmatprep.subr.bf16.mxu0 0
      %2249 = vmatpush1.bf16.msra.mxu0 0
      %2250 = vmatprep.subr.bf16.mxu0 0
      %2251 = vmatpush1.bf16.msra.mxu0 0
      %2252 = vmatprep.subr.bf16.mxu0 0
      %2253 = vmatpush1.bf16.msra.mxu0 0
      %2254 = vmatprep.subr.bf16.mxu0 0
      %2255 = vmatpush1.bf16.msra.mxu0 0
      %2256 = vmatprep.mubr.bf16.mxu0 0
      %2257 = vmatmul.mubr.bf16.gmra.mrb[0].mxu0 %v2219
      %v2258 = vpop.f32.mrb[0].mxu0
      %v2259 = vadd.f32 %v2204, %v2258
      %v2260 = vpop.f32.mrb[0].mxu0
      %v2261 = vpop.f32.mrb[0].mxu0
      %v2262 = vadd.f32 %v2204, %v2261
      %v2263 = vpop.f32.mrb[0].mxu0
      %2264 = vmatprep.mubr.bf16.mxu0 0
      %2265 = vmatmul.mubr.bf16.gmra.mrb[0].mxu0 %v2222
      %v2266 = vpop.f32.mrb[0].mxu0
      %v2267 = vadd.f32 %v2204, %v2266
      %v2268 = vpop.f32.mrb[0].mxu0
      %v2269 = vpop.f32.mrb[0].mxu0
      %v2270 = vadd.f32 %v2204, %v2269
      %v2271 = vpop.f32.mrb[0].mxu0
      %2272 = vdwg.mxu0
      %v2273 = vadd.f32 %v1002, %v2259
      %v2274 = vadd.f32 %v1003, %v2262
      %v2275 = vadd.f32 %v1004, %v2267
      %v2276 = vadd.f32 %v1005, %v2270
      %v2277 = vsel %vm1006, %v2273, 0.0
      %2278 = vadd.xlane.f32.xlu0 %v2277
      %v2279 = vpop.xlane.xlu0 %2278
      %v2280 = vsel %vm1006, %v2274, 0.0
      %2281 = vadd.xlane.f32.xlu0 %v2280
      %v2282 = vpop.xlane.xlu0 %2281
      %v2283 = vsel %vm1006, %v2275, 0.0
      %2284 = vadd.xlane.f32.xlu0 %v2283
      %v2285 = vpop.xlane.xlu0 %2284
      %v2286 = vsel %vm1006, %v2276, 0.0
      %2287 = vadd.xlane.f32.xlu0 %v2286
      %v2288 = vpop.xlane.xlu0 %2287
      %v2289 = vmul.f32 %v2279, %v1019
      %v2290 = vmul.f32 %v2282, %v1019
      %v2291 = vmul.f32 %v2285, %v1019
      %v2292 = vmul.f32 %v2288, %v1019
      %v2293 = vsub.f32 %v2273, %v2289
      %v2294 = vsub.f32 %v2274, %v2290
      %v2295 = vsub.f32 %v2275, %v2291
      %v2296 = vsub.f32 %v2276, %v2292
      %v2297 = vmul.f32 %v2293, %v2293
      %v2298 = vmul.f32 %v2294, %v2294
      %v2299 = vmul.f32 %v2295, %v2295
      %v2300 = vmul.f32 %v2296, %v2296
      %v2301 = vsel %vm1006, %v2297, 0.0
      %2302 = vadd.xlane.f32.xlu0 %v2301
      %v2303 = vpop.xlane.xlu0 %2302
      %v2304 = vsel %vm1006, %v2298, 0.0
      %2305 = vadd.xlane.f32.xlu0 %v2304
      %v2306 = vpop.xlane.xlu0 %2305
      %v2307 = vsel %vm1006, %v2299, 0.0
      %2308 = vadd.xlane.f32.xlu0 %v2307
      %v2309 = vpop.xlane.xlu0 %2308
      %v2310 = vsel %vm1006, %v2300, 0.0
      %2311 = vadd.xlane.f32.xlu0 %v2310
      %v2312 = vpop.xlane.xlu0 %2311
      %v2313 = vmul.f32 %v2303, %v1019
      %v2314 = vmul.f32 %v2306, %v1019
      %v2315 = vmul.f32 %v2309, %v1019
      %v2316 = vmul.f32 %v2312, %v1019
      %v2317 = vadd.f32 %v2313, 1e-05
      %v2318 = vadd.f32 %v2314, 1e-05
      %v2319 = vadd.f32 %v2315, 1e-05
      %v2320 = vadd.f32 %v2316, 1e-05
      %v2321 = vrsqrt.pop %v2317
      %v2322 = vrsqrt.pop %v2318
      %v2323 = vrsqrt.pop %v2319
      %v2324 = vrsqrt.pop %v2320
      %v2325 = vmul.f32 %v2293, %v2321
      %v2326 = vmul.f32 %v2294, %v2322
      %v2327 = vmul.f32 %v2295, %v2323
      %v2328 = vmul.f32 %v2296, %v2324
      %v2329 = vlaneseq
      %v2330 = vshrl.u32 %v2329, 7
      %v2331 = vsub.s32 2, %v2330
      %v2332 = vrot.slane %v949, %v2331
      %v2333 = vmul.f32 %v2325, %v2332
      %v2334 = vmul.f32 %v2326, %v2332
      %v2335 = vmul.f32 %v2327, %v2332
      %v2336 = vmul.f32 %v2328, %v2332
      %v2337 = vlaneseq
      %v2338 = vshrl.u32 %v2337, 7
      %v2339 = vsub.s32 3, %v2338
      %v2340 = vrot.slane %v949, %v2339
      %v2341 = vadd.f32 %v2333, %v2340
      %v2342 = vadd.f32 %v2334, %v2340
      %v2343 = vadd.f32 %v2335, %v2340
      %v2344 = vadd.f32 %v2336, %v2340
      %v2345 = vpack.c.bf16 %v2342, %v2341
      %v2346 = vpack.c.bf16 %v2344, %v2343
      %v2348 = vlaneseq
      %v2349 = vshrl.u32 %v2348, 7
      %v2350 = vsub.s32 0, %v2349
      %v2351 = vrot.slane %v964, %v2350
      %v2357 = vunpack.c.l.b16 %v960
      %v2358 = vunpack.c.l.b16 %v961
      %v2359 = vunpack.c.l.b16 %v962
      %v2360 = vunpack.c.l.b16 %v963
      %v2361 = vpack.c.b16 %v2358, %v2357
      %v2362 = vpack.c.b16 %v2360, %v2359
      %v2366 = vsel %vm1006, %v2345, 0
      %v2369 = vsel %vm1006, %v2346, 0
      %2371 = vmatprep.subr.bf16.mxu0 0
      %2372 = vmatpush1.bf16.msra.mxu0 %v2361
      %2373 = vmatprep.subr.bf16.mxu0 0
      %2374 = vmatpush1.bf16.msra.mxu0 %v2362
      %2375 = vmatprep.subr.bf16.mxu0 0
      %2376 = vmatpush1.bf16.msra.mxu0 0
      %2377 = vmatprep.subr.bf16.mxu0 0
      %2378 = vmatpush1.bf16.msra.mxu0 0
      %2379 = vmatprep.subr.bf16.mxu0 0
      %2380 = vmatpush1.bf16.msra.mxu0 0
      %2381 = vmatprep.subr.bf16.mxu0 0
      %2382 = vmatpush1.bf16.msra.mxu0 0
      %2383 = vmatprep.subr.bf16.mxu0 0
      %2384 = vmatpush1.bf16.msra.mxu0 0
      %2385 = vmatprep.subr.bf16.mxu0 0
      %2386 = vmatpush1.bf16.msra.mxu0 0
      %2387 = vmatprep.subr.bf16.mxu0 0
      %2388 = vmatpush1.bf16.msra.mxu0 0
      %2389 = vmatprep.subr.bf16.mxu0 0
      %2390 = vmatpush1.bf16.msra.mxu0 0
      %2391 = vmatprep.subr.bf16.mxu0 0
      %2392 = vmatpush1.bf16.msra.mxu0 0
      %2393 = vmatprep.subr.bf16.mxu0 0
      %2394 = vmatpush1.bf16.msra.mxu0 0
      %2395 = vmatprep.subr.bf16.mxu0 0
      %2396 = vmatpush1.bf16.msra.mxu0 0
      %2397 = vmatprep.subr.bf16.mxu0 0
      %2398 = vmatpush1.bf16.msra.mxu0 0
      %2399 = vmatprep.subr.bf16.mxu0 0
      %2400 = vmatpush1.bf16.msra.mxu0 0
      %2401 = vmatprep.subr.bf16.mxu0 0
      %2402 = vmatpush1.bf16.msra.mxu0 0
      %2403 = vmatprep.mubr.bf16.mxu0 0
      %2404 = vmatmul.mubr.bf16.gmra.mrb[0].mxu0 %v2366
      %v2405 = vpop.f32.mrb[0].mxu0
      %v2406 = vadd.f32 %v2351, %v2405
      %v2407 = vpop.f32.mrb[0].mxu0
      %v2408 = vpop.f32.mrb[0].mxu0
      %v2409 = vadd.f32 %v2351, %v2408
      %v2410 = vpop.f32.mrb[0].mxu0
      %2411 = vmatprep.mubr.bf16.mxu0 0
      %2412 = vmatmul.mubr.bf16.gmra.mrb[0].mxu0 %v2369
      %v2413 = vpop.f32.mrb[0].mxu0
      %v2414 = vadd.f32 %v2351, %v2413
      %v2415 = vpop.f32.mrb[0].mxu0
      %v2416 = vpop.f32.mrb[0].mxu0
      %v2417 = vadd.f32 %v2351, %v2416
      %v2418 = vpop.f32.mrb[0].mxu0
      %2419 = vdwg.mxu0
      %v2420 = vpack.c.bf16 %v2409, %v2406
      %v2421 = vpack.c.bf16 %v2417, %v2414
      %v2422 = vmul.bf16 %v2420, 1071267802
      %v2423 = vmul.bf16 %v2421, 1071267802
      %v2424 = vxor.u32 %v2422, 2147516416
      %v2425 = vxor.u32 %v2423, 2147516416
      %v2427 = vmul.bf16 %v2424, 1069105081
      %v2428 = vpow.bf16.pop %v2427
      %v2430 = vmul.bf16 %v2425, 1069105081
      %v2431 = vpow.bf16.pop %v2430
      %v2432 = vadd.bf16 %v2428, 1065369472
      %v2433 = vadd.bf16 %v2431, 1065369472
      %v2434 = vrcp.bf16.pop %v2432
      %v2435 = vmul.bf16 1065369472, %v2434
      %v2436 = vrcp.bf16.pop %v2433
      %v2437 = vmul.bf16 1065369472, %v2436
      %v2438 = vmul.bf16 %v2420, %v2435
      %v2439 = vmul.bf16 %v2421, %v2437
      %v2441 = vlaneseq
      %v2442 = vshrl.u32 %v2441, 7
      %v2443 = vsub.s32 0, %v2442
      %v2444 = vrot.slane %v981, %v2443
      %v2462 = vunpack.c.l.b16 %v965
      %v2463 = vunpack.c.l.b16 %v966
      %v2464 = vunpack.c.l.b16 %v967
      %v2465 = vunpack.c.l.b16 %v968
      %v2466 = vunpack.c.l.b16 %v969
      %v2467 = vunpack.c.l.b16 %v970
      %v2468 = vunpack.c.l.b16 %v971
      %v2469 = vunpack.c.l.b16 %v972
      %v2470 = vunpack.c.l.b16 %v973
      %v2471 = vunpack.c.l.b16 %v974
      %v2472 = vunpack.c.l.b16 %v975
      %v2473 = vunpack.c.l.b16 %v976
      %v2474 = vunpack.c.l.b16 %v977
      %v2475 = vunpack.c.l.b16 %v978
      %v2476 = vunpack.c.l.b16 %v979
      %v2477 = vunpack.c.l.b16 %v980
      %v2478 = vpack.c.b16 %v2463, %v2462
      %v2479 = vpack.c.b16 %v2465, %v2464
      %v2480 = vpack.c.b16 %v2467, %v2466
      %v2481 = vpack.c.b16 %v2469, %v2468
      %v2482 = vpack.c.b16 %v2471, %v2470
      %v2483 = vpack.c.b16 %v2473, %v2472
      %v2484 = vpack.c.b16 %v2475, %v2474
      %v2485 = vpack.c.b16 %v2477, %v2476
      %2494 = vmatprep.subr.bf16.mxu0 0
      %2495 = vmatpush1.bf16.msra.mxu0 %v2478
      %2496 = vmatprep.subr.bf16.mxu0 0
      %2497 = vmatpush1.bf16.msra.mxu0 %v2479
      %2498 = vmatprep.subr.bf16.mxu0 0
      %2499 = vmatpush1.bf16.msra.mxu0 %v2480
      %2500 = vmatprep.subr.bf16.mxu0 0
      %2501 = vmatpush1.bf16.msra.mxu0 %v2481
      %2502 = vmatprep.subr.bf16.mxu0 0
      %2503 = vmatpush1.bf16.msra.mxu0 %v2482
      %2504 = vmatprep.subr.bf16.mxu0 0
      %2505 = vmatpush1.bf16.msra.mxu0 %v2483
      %2506 = vmatprep.subr.bf16.mxu0 0
      %2507 = vmatpush1.bf16.msra.mxu0 %v2484
      %2508 = vmatprep.subr.bf16.mxu0 0
      %2509 = vmatpush1.bf16.msra.mxu0 %v2485
      %2510 = vmatprep.subr.bf16.mxu0 0
      %2511 = vmatpush1.bf16.msra.mxu0 0
      %2512 = vmatprep.subr.bf16.mxu0 0
      %2513 = vmatpush1.bf16.msra.mxu0 0
      %2514 = vmatprep.subr.bf16.mxu0 0
      %2515 = vmatpush1.bf16.msra.mxu0 0
      %2516 = vmatprep.subr.bf16.mxu0 0
      %2517 = vmatpush1.bf16.msra.mxu0 0
      %2518 = vmatprep.subr.bf16.mxu0 0
      %2519 = vmatpush1.bf16.msra.mxu0 0
      %2520 = vmatprep.subr.bf16.mxu0 0
      %2521 = vmatpush1.bf16.msra.mxu0 0
      %2522 = vmatprep.subr.bf16.mxu0 0
      %2523 = vmatpush1.bf16.msra.mxu0 0
      %2524 = vmatprep.subr.bf16.mxu0 0
      %2525 = vmatpush1.bf16.msra.mxu0 0
      %2526 = vmatprep.mubr.bf16.mxu0 0
      %2527 = vmatmul.mubr.bf16.gmra.mrb[0].mxu0 %v2438
      %v2528 = vpop.f32.mrb[0].mxu0
      %v2529 = vadd.f32 %v2444, %v2528
      %v2530 = vpop.f32.mrb[0].mxu0
      %v2531 = vpop.f32.mrb[0].mxu0
      %v2532 = vadd.f32 %v2444, %v2531
      %v2533 = vpop.f32.mrb[0].mxu0
      %2534 = vmatprep.mubr.bf16.mxu0 0
      %2535 = vmatmul.mubr.bf16.gmra.mrb[0].mxu0 %v2439
      %v2536 = vpop.f32.mrb[0].mxu0
      %v2537 = vadd.f32 %v2444, %v2536
      %v2538 = vpop.f32.mrb[0].mxu0
      %v2539 = vpop.f32.mrb[0].mxu0
      %v2540 = vadd.f32 %v2444, %v2539
      %v2541 = vpop.f32.mrb[0].mxu0
      %2542 = vdwg.mxu0
      %v2543 = vadd.f32 %v2273, %v2529
      %v2544 = vadd.f32 %v2274, %v2532
      %v2545 = vadd.f32 %v2275, %v2537
      %v2546 = vadd.f32 %v2276, %v2540
      %2547 = vst.msk [vmem:[%s931] sm:$0xff] %vm1006, %v2543
      %2548 = vst.msk [vmem:[%s931 + $0x8] sm:$0xff] %vm1006, %v2544
      %2549 = vst.msk [vmem:[%s931 + $0x10] sm:$0xff] %vm1006, %v2545
      %2550 = vst.msk [vmem:[%s931 + $0x18] sm:$0xff] %vm1006, %v2546
      // Predicated region
      $region93: #{clip_text_prompt_encoder_forward.1} parent=87 // pred_check
        %p2551 = pneg %p982
      $region94: #{clip_text_prompt_encoder_forward.1} parent=87 // pred_check_branch
        %2553 = sbr.rel (%p2551) target = $region96
      $region95: #{clip_text_prompt_encoder_forward.1} parent=87 // pred_region
        %v2554 = vld [vmem:[%s882] sm:$0xf]
        %v2555 = vld [vmem:[%s891] sm:$0xf]
        %v2556 = vld [vmem:[%s891 + $0x4] sm:$0xf]
        %v2557 = vld [vmem:[%s891 + $0x8] sm:$0xf]
        %v2558 = vld [vmem:[%s891 + $0xc] sm:$0xf]
        %v2559 = vld [vmem:[%s900] sm:$0xf]
        %v2560 = vld [vmem:[%s900 + $0x4] sm:$0xf]
        %v2561 = vld [vmem:[%s900 + $0x8] sm:$0xf]
        %v2562 = vld [vmem:[%s900 + $0xc] sm:$0xf]
        %v2563 = vld [vmem:[%s907] sm:$0x1]
        %v2564 = vld [vmem:[%s916] sm:$0xf]
        %v2565 = vld [vmem:[%s916 + $0x4] sm:$0xf]
        %v2566 = vld [vmem:[%s916 + $0x8] sm:$0xf]
        %v2567 = vld [vmem:[%s916 + $0xc] sm:$0xf]
        %v2568 = vld [vmem:[%s923] sm:$0x1]
        %vm2571 = vcmask 1042432
        %v2572 = vrot.slane %v2543, 5
        %v2573 = vrot.slane %v2544, 5
        %v2574 = vsel %vm2571, %v2572, %v2573
        %v2576 = vsel %vm1006, %v2574, 0.0
        %v2577 = vrot.slane %v2576, 4
        %v2578 = vadd.f32 %v2576, %v2577
        %v2579 = vrot.slane %v2578, 2
        %v2580 = vadd.f32 %v2578, %v2579
        %v2581 = vrot.slane %v2580, 1
        %v2582 = vadd.f32 %v2580, %v2581
        %v2583 = vmul.f32 %v2582, 0.125
        %vm2584 = vcmask 258048
        %v2585 = vsel %vm2584, %v2543, 0.0
        %2586 = vadd.xlane.f32.xlu0 %v2585
        %v2587 = vpop.xlane.xlu0 %2586
        %v2588 = vsel %vm1006, %v2583, 0.0
        %2589 = vadd.xlane.f32.xlu0 %v2588
        %v2590 = vpop.xlane.xlu0 %2589
        %v2591 = vadd.f32 %v2587, %v2590
        %v2592 = vrcp.pop 64.0
        %v2593 = vmul.f32 %v2591, %v2592
        %v2594 = vsub.f32 %v2543, %v2593
        %v2595 = vsub.f32 %v2583, %v2593
        %v2596 = vmul.f32 %v2594, %v2594
        %v2597 = vsel %vm2584, %v2596, 0.0
        %2598 = vadd.xlane.f32.xlu0 %v2597
        %v2599 = vpop.xlane.xlu0 %2598
        %v2600 = vmul.f32 %v2595, %v2595
        %v2601 = vsel %vm2584, %v2600, 0.0
        %2602 = vadd.xlane.f32.xlu0 %v2601
        %v2603 = vpop.xlane.xlu0 %2602
        %v2604 = vadd.f32 %v2599, %v2603
        %v2605 = vmul.f32 %v2604, %v2592
        %v2606 = vadd.f32 %v2605, 1e-05
        %v2607 = vrsqrt.pop %v2606
        %v2608 = vmul.f32 %v2594, %v2607
        %v2609 = vlaneseq
        %v2610 = vshrl.u32 %v2609, 7
        %v2611 = vsub.s32 0, %v2610
        %v2612 = vrot.slane %v2554, %v2611
        %v2613 = vmul.f32 %v2608, %v2612
        %v2614 = vlaneseq
        %v2615 = vshrl.u32 %v2614, 7
        %v2616 = vsub.s32 2, %v2615
        %v2617 = vrot.slane %v2554, %v2616
        %v2618 = vadd.f32 %v2613, %v2617
        %v2619 = vmul.f32 %v2595, %v2607
        %v2620 = vlaneseq
        %v2621 = vshrl.u32 %v2620, 7
        %v2622 = vsub.s32 1, %v2621
        %v2623 = vrot.slane %v2554, %v2622
        %v2624 = vmul.f32 %v2619, %v2623
        %v2625 = vlaneseq
        %v2626 = vshrl.u32 %v2625, 7
        %v2627 = vsub.s32 3, %v2626
        %v2628 = vrot.slane %v2554, %v2627
        %v2629 = vadd.f32 %v2624, %v2628
        %v2630 = vpack.c.bf16 %v2618, %v2618
        %v2631 = vpack.c.bf16 %v2629, %v2629
        %v2636 = vunpack.c.l.b16 %v2559
        %v2637 = vunpack.c.l.b16 %v2560
        %v2638 = vunpack.c.l.b16 %v2561
        %v2639 = vunpack.c.l.b16 %v2562
        %v2640 = vpack.c.b16 %v2637, %v2636
        %v2641 = vpack.c.b16 %v2639, %v2638
        %v2645 = vsel %vm1006, %v2631, 0
        %2647 = vmatprep.subr.bf16.mxu0 0
        %2648 = vmatpush1.bf16.msra.mxu0 %v2640
        %2649 = vmatprep.subr.bf16.mxu0 0
        %2650 = vmatpush1.bf16.msra.mxu0 %v2641
        %2651 = vmatprep.subr.bf16.mxu0 0
        %2652 = vmatpush1.bf16.msra.mxu0 0
        %2653 = vmatprep.subr.bf16.mxu0 0
        %2654 = vmatpush1.bf16.msra.mxu0 0
        %2655 = vmatprep.subr.bf16.mxu0 0
        %2656 = vmatpush1.bf16.msra.mxu0 0
        %2657 = vmatprep.subr.bf16.mxu0 0
        %2658 = vmatpush1.bf16.msra.mxu0 0
        %2659 = vmatprep.subr.bf16.mxu0 0
        %2660 = vmatpush1.bf16.msra.mxu0 0
        %2661 = vmatprep.subr.bf16.mxu0 0
        %2662 = vmatpush1.bf16.msra.mxu0 0
        %2663 = vmatprep.subr.bf16.mxu0 0
        %2664 = vmatpush1.bf16.msra.mxu0 0
        %2665 = vmatprep.subr.bf16.mxu0 0
        %2666 = vmatpush1.bf16.msra.mxu0 0
        %2667 = vmatprep.subr.bf16.mxu0 0
        %2668 = vmatpush1.bf16.msra.mxu0 0
        %2669 = vmatprep.subr.bf16.mxu0 0
        %2670 = vmatpush1.bf16.msra.mxu0 0
        %2671 = vmatprep.subr.bf16.mxu0 0
        %2672 = vmatpush1.bf16.msra.mxu0 0
        %2673 = vmatprep.subr.bf16.mxu0 0
        %2674 = vmatpush1.bf16.msra.mxu0 0
        %2675 = vmatprep.subr.bf16.mxu0 0
        %2676 = vmatpush1.bf16.msra.mxu0 0
        %2677 = vmatprep.subr.bf16.mxu0 0
        %2678 = vmatpush1.bf16.msra.mxu0 0
        %2679 = vmatprep.mubr.bf16.mxu0 0
        %2680 = vmatmul.mubr.bf16.gmra.mrb[0].mxu0 %v2645
        %v2681 = vpop.f32.mrb[0].mxu0
        %v2682 = vadd.f32 0.0, %v2681
        %v2683 = vpop.f32.mrb[0].mxu0
        %v2684 = vpop.f32.mrb[0].mxu0
        %v2685 = vpop.f32.mrb[0].mxu0
        %2686 = vdwg.mxu0
        %v2691 = vunpack.c.l.b16 %v2555
        %v2692 = vunpack.c.l.b16 %v2556
        %v2693 = vunpack.c.l.b16 %v2557
        %v2694 = vunpack.c.l.b16 %v2558
        %v2695 = vpack.c.b16 %v2692, %v2691
        %v2696 = vpack.c.b16 %v2694, %v2693
        %v2700 = vsel %vm1006, %v2630, 0
        %2702 = vmatprep.subr.bf16.mxu0 0
        %2703 = vmatpush1.bf16.msra.mxu0 %v2695
        %2704 = vmatprep.subr.bf16.mxu0 0
        %2705 = vmatpush1.bf16.msra.mxu0 %v2696
        %2706 = vmatprep.subr.bf16.mxu0 0
        %2707 = vmatpush1.bf16.msra.mxu0 0
        %2708 = vmatprep.subr.bf16.mxu0 0
        %2709 = vmatpush1.bf16.msra.mxu0 0
        %2710 = vmatprep.subr.bf16.mxu0 0
        %2711 = vmatpush1.bf16.msra.mxu0 0
        %2712 = vmatprep.subr.bf16.mxu0 0
        %2713 = vmatpush1.bf16.msra.mxu0 0
        %2714 = vmatprep.subr.bf16.mxu0 0
        %2715 = vmatpush1.bf16.msra.mxu0 0
        %2716 = vmatprep.subr.bf16.mxu0 0
        %2717 = vmatpush1.bf16.msra.mxu0 0
        %2718 = vmatprep.subr.bf16.mxu0 0
        %2719 = vmatpush1.bf16.msra.mxu0 0
        %2720 = vmatprep.subr.bf16.mxu0 0
        %2721 = vmatpush1.bf16.msra.mxu0 0
        %2722 = vmatprep.subr.bf16.mxu0 0
        %2723 = vmatpush1.bf16.msra.mxu0 0
        %2724 = vmatprep.subr.bf16.mxu0 0
        %2725 = vmatpush1.bf16.msra.mxu0 0
        %2726 = vmatprep.subr.bf16.mxu0 0
        %2727 = vmatpush1.bf16.msra.mxu0 0
        %2728 = vmatprep.subr.bf16.mxu0 0
        %2729 = vmatpush1.bf16.msra.mxu0 0
        %2730 = vmatprep.subr.bf16.mxu0 0
        %2731 = vmatpush1.bf16.msra.mxu0 0
        %2732 = vmatprep.subr.bf16.mxu0 0
        %2733 = vmatpush1.bf16.msra.mxu0 0
        %2734 = vmatprep.mubr.bf16.mxu0 0
        %2735 = vmatmul.mubr.bf16.gmra.mrb[0].mxu0 %v2700
        %v2736 = vpop.f32.mrb[0].mxu0
        %v2737 = vadd.f32 %v2682, %v2736
        %v2738 = vpop.f32.mrb[0].mxu0
        %v2739 = vpop.f32.mrb[0].mxu0
        %v2740 = vpop.f32.mrb[0].mxu0
        %2741 = vdwg.mxu0
        %v2743 = vlaneseq
        %v2744 = vshrl.u32 %v2743, 7
        %v2745 = vsub.s32 0, %v2744
        %v2746 = vrot.slane %v2563, %v2745
        %v2748 = vadd.f32 %v2737, %v2746
        %v2749 = vmul.f32 %v2748, 0.5
        %v2750 = vmul.f32 %v2748, 0.70710677
        %vm2751 = vcmp.ge.f32.partialorder %v2750, 0.0
        %v2752 = vsel %vm2751, 1.0, -1.0
        %v2753 = vand.u32 2147483647, %v2750
        %v2754 = vmul.f32 %v2753, 0.3275911
        %v2755 = vadd.f32 %v2754, 1.0
        %v2756 = vrcp.pop %v2755
        %v2757 = vmul.f32 1.0, %v2756
        %v2758 = vmul.f32 %v2757, 1.0614054
        %v2759 = vadd.f32 %v2758, -1.4531521
        %v2760 = vmul.f32 %v2759, %v2757
        %v2761 = vadd.f32 %v2760, 1.4214138
        %v2762 = vmul.f32 %v2761, %v2757
        %v2763 = vadd.f32 %v2762, -0.28449672
        %v2764 = vmul.f32 %v2763, %v2757
        %v2765 = vadd.f32 %v2764, 0.2548296
        %v2766 = vmul.f32 %v2765, %v2757
        %v2767 = vsub.f32 0.0, %v2753
        %v2768 = vmul.f32 %v2767, %v2753
        %v2769 = vmul.f32 %v2768, 1.442695
        %v2770 = vpow.pop %v2769
        %v2771 = vmul.f32 %v2766, %v2770
        %v2772 = vsub.f32 1.0, %v2771
        %v2773 = vmul.f32 %v2752, %v2772
        %v2774 = vadd.f32 %v2773, 1.0
        %v2775 = vmul.f32 %v2749, %v2774
        %v2776 = vpack.c.bf16 %v2775, %v2775
        %v2778 = vlaneseq
        %v2779 = vshrl.u32 %v2778, 7
        %v2780 = vsub.s32 0, %v2779
        %v2781 = vrot.slane %v2568, %v2780
        %v2787 = vunpack.c.l.b16 %v2564
        %v2788 = vunpack.c.l.b16 %v2565
        %v2789 = vunpack.c.l.b16 %v2566
        %v2790 = vunpack.c.l.b16 %v2567
        %v2791 = vpack.c.b16 %v2788, %v2787
        %v2792 = vpack.c.b16 %v2790, %v2789
        %v2796 = vsel %vm1006, %v2776, 0
        %2798 = vmatprep.subr.bf16.mxu0 0
        %2799 = vmatpush1.bf16.msra.mxu0 %v2791
        %2800 = vmatprep.subr.bf16.mxu0 0
        %2801 = vmatpush1.bf16.msra.mxu0 %v2792
        %2802 = vmatprep.subr.bf16.mxu0 0
        %2803 = vmatpush1.bf16.msra.mxu0 0
        %2804 = vmatprep.subr.bf16.mxu0 0
        %2805 = vmatpush1.bf16.msra.mxu0 0
        %2806 = vmatprep.subr.bf16.mxu0 0
        %2807 = vmatpush1.bf16.msra.mxu0 0
        %2808 = vmatprep.subr.bf16.mxu0 0
        %2809 = vmatpush1.bf16.msra.mxu0 0
        %2810 = vmatprep.subr.bf16.mxu0 0
        %2811 = vmatpush1.bf16.msra.mxu0 0
        %2812 = vmatprep.subr.bf16.mxu0 0
        %2813 = vmatpush1.bf16.msra.mxu0 0
        %2814 = vmatprep.subr.bf16.mxu0 0
        %2815 = vmatpush1.bf16.msra.mxu0 0
        %2816 = vmatprep.subr.bf16.mxu0 0
        %2817 = vmatpush1.bf16.msra.mxu0 0
        %2818 = vmatprep.subr.bf16.mxu0 0
        %2819 = vmatpush1.bf16.msra.mxu0 0
        %2820 = vmatprep.subr.bf16.mxu0 0
        %2821 = vmatpush1.bf16.msra.mxu0 0
        %2822 = vmatprep.subr.bf16.mxu0 0
        %2823 = vmatpush1.bf16.msra.mxu0 0
        %2824 = vmatprep.subr.bf16.mxu0 0
        %2825 = vmatpush1.bf16.msra.mxu0 0
        %2826 = vmatprep.subr.bf16.mxu0 0
        %2827 = vmatpush1.bf16.msra.mxu0 0
        %2828 = vmatprep.subr.bf16.mxu0 0
        %2829 = vmatpush1.bf16.msra.mxu0 0
        %2830 = vmatprep.mubr.bf16.mxu0 0
        %2831 = vmatmul.mubr.bf16.gmra.mrb[0].mxu0 %v2796
        %v2832 = vpop.f32.mrb[0].mxu0
        %v2833 = vadd.f32 %v2781, %v2832
        %v2834 = vpop.f32.mrb[0].mxu0
        %v2835 = vpop.f32.mrb[0].mxu0
        %v2836 = vpop.f32.mrb[0].mxu0
        %2837 = vdwg.mxu0
        %2838 = vst.msk [vmem:[%s931] sm:$0x1f] %vm2584, %v2833
        %v2841 = vrot.slane %v2545, 5
        %v2842 = vrot.slane %v2546, 5
        %v2843 = vsel %vm2571, %v2841, %v2842
        %v2845 = vsel %vm1006, %v2843, 0.0
        %v2846 = vrot.slane %v2845, 4
        %v2847 = vadd.f32 %v2845, %v2846
        %v2848 = vrot.slane %v2847, 2
        %v2849 = vadd.f32 %v2847, %v2848
        %v2850 = vrot.slane %v2849, 1
        %v2851 = vadd.f32 %v2849, %v2850
        %v2852 = vmul.f32 %v2851, 0.125
        %v2853 = vsel %vm2584, %v2545, 0.0
        %2854 = vadd.xlane.f32.xlu0 %v2853
        %v2855 = vpop.xlane.xlu0 %2854
        %v2856 = vsel %vm1006, %v2852, 0.0
        %2857 = vadd.xlane.f32.xlu0 %v2856
        %v2858 = vpop.xlane.xlu0 %2857
        %v2859 = vadd.f32 %v2855, %v2858
        %v2860 = vmul.f32 %v2859, %v2592
        %v2861 = vsub.f32 %v2545, %v2860
        %v2862 = vsub.f32 %v2852, %v2860
        %v2863 = vmul.f32 %v2861, %v2861
        %v2864 = vsel %vm2584, %v2863, 0.0
        %2865 = vadd.xlane.f32.xlu0 %v2864
        %v2866 = vpop.xlane.xlu0 %2865
        %v2867 = vmul.f32 %v2862, %v2862
        %v2868 = vsel %vm2584, %v2867, 0.0
        %2869 = vadd.xlane.f32.xlu0 %v2868
        %v2870 = vpop.xlane.xlu0 %2869
        %v2871 = vadd.f32 %v2866, %v2870
        %v2872 = vmul.f32 %v2871, %v2592
        %v2873 = vadd.f32 %v2872, 1e-05
        %v2874 = vrsqrt.pop %v2873
        %v2875 = vmul.f32 %v2861, %v2874
        %v2876 = vmul.f32 %v2875, %v2612
        %v2877 = vadd.f32 %v2876, %v2617
        %v2878 = vmul.f32 %v2862, %v2874
        %v2879 = vmul.f32 %v2878, %v2623
        %v2880 = vadd.f32 %v2879, %v2628
        %v2881 = vpack.c.bf16 %v2877, %v2877
        %v2882 = vpack.c.bf16 %v2880, %v2880
        %v2884 = vsel %vm1006, %v2882, 0
        %2886 = vmatprep.subr.bf16.mxu0 0
        %2887 = vmatpush1.bf16.msra.mxu0 %v2640
        %2888 = vmatprep.subr.bf16.mxu0 0
        %2889 = vmatpush1.bf16.msra.mxu0 %v2641
        %2890 = vmatprep.subr.bf16.mxu0 0
        %2891 = vmatpush1.bf16.msra.mxu0 0
        %2892 = vmatprep.subr.bf16.mxu0 0
        %2893 = vmatpush1.bf16.msra.mxu0 0
        %2894 = vmatprep.subr.bf16.mxu0 0
        %2895 = vmatpush1.bf16.msra.mxu0 0
        %2896 = vmatprep.subr.bf16.mxu0 0
        %2897 = vmatpush1.bf16.msra.mxu0 0
        %2898 = vmatprep.subr.bf16.mxu0 0
        %2899 = vmatpush1.bf16.msra.mxu0 0
        %2900 = vmatprep.subr.bf16.mxu0 0
        %2901 = vmatpush1.bf16.msra.mxu0 0
        %2902 = vmatprep.subr.bf16.mxu0 0
        %2903 = vmatpush1.bf16.msra.mxu0 0
        %2904 = vmatprep.subr.bf16.mxu0 0
        %2905 = vmatpush1.bf16.msra.mxu0 0
        %2906 = vmatprep.subr.bf16.mxu0 0
        %2907 = vmatpush1.bf16.msra.mxu0 0
        %2908 = vmatprep.subr.bf16.mxu0 0
        %2909 = vmatpush1.bf16.msra.mxu0 0
        %2910 = vmatprep.subr.bf16.mxu0 0
        %2911 = vmatpush1.bf16.msra.mxu0 0
        %2912 = vmatprep.subr.bf16.mxu0 0
        %2913 = vmatpush1.bf16.msra.mxu0 0
        %2914 = vmatprep.subr.bf16.mxu0 0
        %2915 = vmatpush1.bf16.msra.mxu0 0
        %2916 = vmatprep.subr.bf16.mxu0 0
        %2917 = vmatpush1.bf16.msra.mxu0 0
        %2918 = vmatprep.mubr.bf16.mxu0 0
        %2919 = vmatmul.mubr.bf16.gmra.mrb[0].mxu0 %v2884
        %v2920 = vpop.f32.mrb[0].mxu0
        %v2921 = vadd.f32 0.0, %v2920
        %v2922 = vpop.f32.mrb[0].mxu0
        %v2923 = vpop.f32.mrb[0].mxu0
        %v2924 = vpop.f32.mrb[0].mxu0
        %2925 = vdwg.mxu0
        %v2927 = vsel %vm1006, %v2881, 0
        %2929 = vmatprep.subr.bf16.mxu0 0
        %2930 = vmatpush1.bf16.msra.mxu0 %v2695
        %2931 = vmatprep.subr.bf16.mxu0 0
        %2932 = vmatpush1.bf16.msra.mxu0 %v2696
        %2933 = vmatprep.subr.bf16.mxu0 0
        %2934 = vmatpush1.bf16.msra.mxu0 0
        %2935 = vmatprep.subr.bf16.mxu0 0
        %2936 = vmatpush1.bf16.msra.mxu0 0
        %2937 = vmatprep.subr.bf16.mxu0 0
        %2938 = vmatpush1.bf16.msra.mxu0 0
        %2939 = vmatprep.subr.bf16.mxu0 0
        %2940 = vmatpush1.bf16.msra.mxu0 0
        %2941 = vmatprep.subr.bf16.mxu0 0
        %2942 = vmatpush1.bf16.msra.mxu0 0
        %2943 = vmatprep.subr.bf16.mxu0 0
        %2944 = vmatpush1.bf16.msra.mxu0 0
        %2945 = vmatprep.subr.bf16.mxu0 0
        %2946 = vmatpush1.bf16.msra.mxu0 0
        %2947 = vmatprep.subr.bf16.mxu0 0
        %2948 = vmatpush1.bf16.msra.mxu0 0
        %2949 = vmatprep.subr.bf16.mxu0 0
        %2950 = vmatpush1.bf16.msra.mxu0 0
        %2951 = vmatprep.subr.bf16.mxu0 0
        %2952 = vmatpush1.bf16.msra.mxu0 0
        %2953 = vmatprep.subr.bf16.mxu0 0
        %2954 = vmatpush1.bf16.msra.mxu0 0
        %2955 = vmatprep.subr.bf16.mxu0 0
        %2956 = vmatpush1.bf16.msra.mxu0 0
        %2957 = vmatprep.subr.bf16.mxu0 0
        %2958 = vmatpush1.bf16.msra.mxu0 0
        %2959 = vmatprep.subr.bf16.mxu0 0
        %2960 = vmatpush1.bf16.msra.mxu0 0
        %2961 = vmatprep.mubr.bf16.mxu0 0
        %2962 = vmatmul.mubr.bf16.gmra.mrb[0].mxu0 %v2927
        %v2963 = vpop.f32.mrb[0].mxu0
        %v2964 = vadd.f32 %v2921, %v2963
        %v2965 = vpop.f32.mrb[0].mxu0
        %v2966 = vpop.f32.mrb[0].mxu0
        %v2967 = vpop.f32.mrb[0].mxu0
        %2968 = vdwg.mxu0
        %v2969 = vadd.f32 %v2964, %v2746
        %v2970 = vmul.f32 %v2969, 0.5
        %v2971 = vmul.f32 %v2969, 0.70710677
        %vm2972 = vcmp.ge.f32.partialorder %v2971, 0.0
        %v2973 = vsel %vm2972, 1.0, -1.0
        %v2974 = vand.u32 2147483647, %v2971
        %v2975 = vmul.f32 %v2974, 0.3275911
        %v2976 = vadd.f32 %v2975, 1.0
        %v2977 = vrcp.pop %v2976
        %v2978 = vmul.f32 1.0, %v2977
        %v2979 = vmul.f32 %v2978, 1.0614054
        %v2980 = vadd.f32 %v2979, -1.4531521
        %v2981 = vmul.f32 %v2980, %v2978
        %v2982 = vadd.f32 %v2981, 1.4214138
        %v2983 = vmul.f32 %v2982, %v2978
        %v2984 = vadd.f32 %v2983, -0.28449672
        %v2985 = vmul.f32 %v2984, %v2978
        %v2986 = vadd.f32 %v2985, 0.2548296
        %v2987 = vmul.f32 %v2986, %v2978
        %v2988 = vsub.f32 0.0, %v2974
        %v2989 = vmul.f32 %v2988, %v2974
        %v2990 = vmul.f32 %v2989, 1.442695
        %v2991 = vpow.pop %v2990
        %v2992 = vmul.f32 %v2987, %v2991
        %v2993 = vsub.f32 1.0, %v2992
        %v2994 = vmul.f32 %v2973, %v2993
        %v2995 = vadd.f32 %v2994, 1.0
        %v2996 = vmul.f32 %v2970, %v2995
        %v2997 = vpack.c.bf16 %v2996, %v2996
        %v2999 = vsel %vm1006, %v2997, 0
        %3001 = vmatprep.subr.bf16.mxu0 0
        %3002 = vmatpush1.bf16.msra.mxu0 %v2791
        %3003 = vmatprep.subr.bf16.mxu0 0
        %3004 = vmatpush1.bf16.msra.mxu0 %v2792
        %3005 = vmatprep.subr.bf16.mxu0 0
        %3006 = vmatpush1.bf16.msra.mxu0 0
        %3007 = vmatprep.subr.bf16.mxu0 0
        %3008 = vmatpush1.bf16.msra.mxu0 0
        %3009 = vmatprep.subr.bf16.mxu0 0
        %3010 = vmatpush1.bf16.msra.mxu0 0
        %3011 = vmatprep.subr.bf16.mxu0 0
        %3012 = vmatpush1.bf16.msra.mxu0 0
        %3013 = vmatprep.subr.bf16.mxu0 0
        %3014 = vmatpush1.bf16.msra.mxu0 0
        %3015 = vmatprep.subr.bf16.mxu0 0
        %3016 = vmatpush1.bf16.msra.mxu0 0
        %3017 = vmatprep.subr.bf16.mxu0 0
        %3018 = vmatpush1.bf16.msra.mxu0 0
        %3019 = vmatprep.subr.bf16.mxu0 0
        %3020 = vmatpush1.bf16.msra.mxu0 0
        %3021 = vmatprep.subr.bf16.mxu0 0
        %3022 = vmatpush1.bf16.msra.mxu0 0
        %3023 = vmatprep.subr.bf16.mxu0 0
        %3024 = vmatpush1.bf16.msra.mxu0 0
        %3025 = vmatprep.subr.bf16.mxu0 0
        %3026 = vmatpush1.bf16.msra.mxu0 0
        %3027 = vmatprep.subr.bf16.mxu0 0
        %3028 = vmatpush1.bf16.msra.mxu0 0
        %3029 = vmatprep.subr.bf16.mxu0 0
        %3030 = vmatpush1.bf16.msra.mxu0 0
        %3031 = vmatprep.subr.bf16.mxu0 0
        %3032 = vmatpush1.bf16.msra.mxu0 0
        %3033 = vmatprep.mubr.bf16.mxu0 0
        %3034 = vmatmul.mubr.bf16.gmra.mrb[0].mxu0 %v2999
        %v3035 = vpop.f32.mrb[0].mxu0
        %v3036 = vadd.f32 %v2781, %v3035
        %v3037 = vpop.f32.mrb[0].mxu0
        %v3038 = vpop.f32.mrb[0].mxu0
        %v3039 = vpop.f32.mrb[0].mxu0
        %3040 = vdwg.mxu0
        %s3041 = scalar_lea.vmem %s931, 16
        %3042 = vst.msk [vmem:[%s3041] sm:$0x1f] %vm2584, %v3036
      $region96: #{clip_text_prompt_encoder_forward.1} parent=87 // pred_fallthru
        _
      %s3043 = smul.u32 2, %s32
      %p3044 = scmp.lt.s32.totalorder %s3043, 1
      %s3045 = scalar_select %p3044, %s3043, 1
      %s3046 = smul.addr %s3045, 2
      %s3047 = smul.addr %s3046, 8
      %s3048 = scalar_lea.vmem %s17, %s3047
      // Predicated region
      $region97: #{clip_text_prompt_encoder_forward.1} parent=87 // pred_check
        %p3049 = pneg %p524
      $region98: #{clip_text_prompt_encoder_forward.1} parent=87 // pred_check_branch
        %3051 = sbr.rel (%p3049) target = $region100
      $region99: #{clip_text_prompt_encoder_forward.1} parent=87 // pred_region
        %s3052 = smul.u32 2, %s32
      $region100: #{clip_text_prompt_encoder_forward.1} parent=87 // pred_fallthru
        _
      // Predicated region
      $region101: #{clip_text_prompt_encoder_forward.1} parent=87 // pred_check
        %p3053 = pneg %p524
      $region102: #{clip_text_prompt_encoder_forward.1} parent=87 // pred_check_branch
        %3055 = sbr.rel (%p3053) target = $region104
      $region103: #{clip_text_prompt_encoder_forward.1} parent=87 // pred_region
        %s3056 = smul.u32 2, %s32
        %p3057 = scmp.lt.s32.totalorder %s3056, 1
        %s3058 = scalar_select %p3057, %s3056, 1
        %s3059 = smul.addr %s3058, 2
        %s3060 = smul.addr %s3059, 8
        %s3061 = scalar_lea.vmem %s17, %s3060
      $region104: #{clip_text_prompt_encoder_forward.1} parent=87 // pred_fallthru
        _
    $region88: #{clip_text_prompt_encoder_forward.1} parent=5 // pred_fallthru
      _
    %p3062 = scmp.le.s32.totalorder 2, %s23
    // Predicated region
    $region105: #{clip_text_prompt_encoder_forward.1} parent=5 // pred_check
      %p3063 = pneg %p3062
    $region106: #{clip_text_prompt_encoder_forward.1} parent=5 // pred_check_branch
      %3065 = sbr.rel (%p3063) target = $region108
    $region107: #{clip_text_prompt_encoder_forward.1} parent=5 // pred_region
      %s3066 = ssub.s32 %s23, 2
    $region108: #{clip_text_prompt_encoder_forward.1} parent=5 // pred_fallthru
      _
  $region6: #{clip_text_prompt_encoder_forward.1} parent=0 // loop_footer
    %s27 = sadd.s32 1, %s23
  $region7: #{clip_text_prompt_encoder_forward.1} parent=0 // loop_footer_branch
    %22 = sbr.rel target = $region3
  $region8: #{clip_text_prompt_encoder_forward.1} parent=0 // loop_exit
    _

</llo_original>
